<compile_context>
chip_gen: v5e
topology: v5e:2x2
jax: 0.10.0
libtpu: 0.0.40
codegen_flags: <defaults>
</compile_context>

<pallas_src>
import jax
import jax.numpy as jnp
from jax.experimental import pallas as pl
from jax.experimental.pallas import tpu as pltpu

_BN_EPS = 1e-5


# ---------------------------------------------------------------------------
# In-kernel building blocks (2-D (channels, time) f32 values).
# ---------------------------------------------------------------------------
def _shift_prev(x):
    """x_{t-1} with zero padding at t = 0 (time is the last axis)."""
    col = jax.lax.broadcasted_iota(jnp.int32, x.shape, 1)
    return jnp.where(col == 0, 0.0, pltpu.roll(x, shift=1, axis=1))


def _shift_next(x):
    """x_{t+1} with zero padding at t = T-1."""
    t = x.shape[-1]
    col = jax.lax.broadcasted_iota(jnp.int32, x.shape, 1)
    return jnp.where(col == t - 1, 0.0, pltpu.roll(x, shift=t - 1, axis=1))


def _conv3(x, w_cat, b=None):
    """Conv1d(kernel=3, padding=1) as one im2col-fused matmul.

    x: (Cin, T);  w_cat: (Cout, 3*Cin) = [W_{t-1} | W_t | W_{t+1}].
    """
    xs = jnp.concatenate([_shift_prev(x), x, _shift_next(x)], axis=0)
    y = jnp.dot(w_cat, xs, preferred_element_type=jnp.float32)
    return y if b is None else y + b


def _bottleneck(x, bn_scale, bn_shift, w1x1, b1x1, w3_cat):
    """DenseNet bottleneck: bn-relu-conv1x1(+folded bn2)-relu-conv3, concat."""
    a = jnp.maximum(x * bn_scale + bn_shift, 0.0)
    h = jnp.dot(w1x1, a, preferred_element_type=jnp.float32) + b1x1
    h = jnp.maximum(h, 0.0)
    g = _conv3(h, w3_cat)
    return jnp.concatenate([x, g], axis=0)


def _transition(x, bn_scale, bn_shift, w1x1, pool):
    """Transition: bn-relu-conv1x1, then avg_pool1d(2) via a (T, T/2) matrix."""
    a = jnp.maximum(x * bn_scale + bn_shift, 0.0)
    h = jnp.dot(w1x1, a, preferred_element_type=jnp.float32)
    return jnp.dot(h, pool, preferred_element_type=jnp.float32)


def _make_kernel(n_dense_blocks):
    def kernel(x_ref, xa1_ref, xa2_ref, *refs):
        o_ref = refs[-1]
        it = iter(refs[:-1])

        def nxt():  # load next (constant-index) parameter block from VMEM
            return next(it)[...]

        x = x_ref[0]          # (C, L)
        xa1 = xa1_ref[0]      # (C, L/2)  Haar level-1 approximation of x
        xa2 = xa2_ref[0]      # (C, L/4)  Haar level-2 approximation of x

        # conv1 (k=3, pad=1)
        w, b = nxt(), nxt()
        out = _conv3(x, w, b)                                  # (W1, L)

        # Dwtconv branch: conv3 (+ folded BN) + ReLU at each DWT level.
        w, b = nxt(), nxt()
        dwt0 = jnp.maximum(_conv3(xa1, w, b), 0.0)             # (W1, L/2)
        w, b = nxt(), nxt()
        dwt1 = jnp.maximum(_conv3(xa2, w, b), 0.0)             # (W2, L/4)

        # dense1 + trans1
        for _ in range(n_dense_blocks):
            s, t, w1, b1, w3 = nxt(), nxt(), nxt(), nxt(), nxt()
            out = _bottleneck(out, s, t, w1, b1, w3)
        s, t, w, pool = nxt(), nxt(), nxt(), nxt()
        out = _transition(out, s, t, w, pool)                  # (W1, L/2)
        out = out + dwt0

        # dense2 + trans2
        for _ in range(n_dense_blocks):
            s, t, w1, b1, w3 = nxt(), nxt(), nxt(), nxt(), nxt()
            out = _bottleneck(out, s, t, w1, b1, w3)
        s, t, w, pool = nxt(), nxt(), nxt(), nxt()
        out = _transition(out, s, t, w, pool)                  # (W2, L/4)
        out = out + dwt1

        # bn1 + relu1
        s, t = nxt(), nxt()
        out = jnp.maximum(out * s + t, 0.0)

        # conv2 (1x1, bn_out folded in) + relu_out
        w, b = nxt(), nxt()
        out = jnp.maximum(
            jnp.dot(w, out, preferred_element_type=jnp.float32) + b, 0.0)  # (C, L/4)

        # out_conv: ConvTranspose1d(k=6, stride=4, pad=1) as ONE fused matmul
        # producing the 4 output phases stacked along channels.
        w, b = nxt(), nxt()
        ycat = jnp.concatenate([out, _shift_prev(out), _shift_next(out)], axis=0)
        phases = jnp.dot(w, ycat, preferred_element_type=jnp.float32) + b  # (4C, L/4)
        o_ref[0] = phases.astype(o_ref.dtype)

    return kernel


# ---------------------------------------------------------------------------
# Wrapper-side parameter folding / packing helpers (plain JAX).
# ---------------------------------------------------------------------------
def _fold_bn(bn):
    scale = bn["gamma"] / jnp.sqrt(bn["var"] + _BN_EPS)
    shift = bn["beta"] - scale * bn["mean"]
    return scale, shift


def _pack3(w):
    # (Cout, Cin, 3) -> (Cout, 3*Cin): column blocks [tap0 | tap1 | tap2].
    return jnp.concatenate([w[:, :, 0], w[:, :, 1], w[:, :, 2]], axis=1)


def _avg_pool_matrix(t):
    idx = jnp.arange(t // 2)
    p = jnp.zeros((t, t // 2), jnp.float32)
    p = p.at[2 * idx, idx].set(0.5)
    p = p.at[2 * idx + 1, idx].set(0.5)
    return p


def _haar_low(x):
    # Haar DWT approximation coefficients along the last axis.
    return (x[..., 0::2] + x[..., 1::2]) * (2.0 ** -0.5)


def densewave_forward(x, params):
    """DenseWave forward.  x: (B, L, input_channel) -> (B, L, input_channel)."""
    B, L, C = x.shape
    NB = len(params["dense1"])

    # --- plain-JAX glue: permute, Haar DWT of the raw input, param folding ---
    xt = jnp.transpose(x, (0, 2, 1)).astype(jnp.float32)     # (B, C, L)
    xa1 = _haar_low(xt)                                      # (B, C, L/2)
    xa2 = _haar_low(xa1)                                     # (B, C, L/4)

    flat = []
    # conv1
    flat += [_pack3(params["conv1"]["w"]), params["conv1"]["b"][:, None]]
    # Dwtconv branch convs with their BN folded in
    for wk, bk, bnk in (("w1", "b1", "bn1"), ("w2", "b2", "bn2")):
        s, t = _fold_bn(params["dwt"][bnk])
        w = params["dwt"][wk] * s[:, None, None]
        b = s * params["dwt"][bk] + t
        flat += [_pack3(w), b[:, None]]
    # dense stages + transitions
    for dk, tk, tlen in (("dense1", "trans1", L), ("dense2", "trans2", L // 2)):
        for blk in params[dk]:
            s1, t1 = _fold_bn(blk["bn1"])
            s2, t2 = _fold_bn(blk["bn2"])        # folded into the 1x1 conv
            flat += [s1[:, None], t1[:, None],
                     blk["w1"] * s2[:, None], t2[:, None], _pack3(blk["w2"])]
        st, tt = _fold_bn(params[tk]["bn"])
        flat += [st[:, None], tt[:, None], params[tk]["w"], _avg_pool_matrix(tlen)]
    # bn1 (standalone) and conv2 with bn_out folded
    s, t = _fold_bn(params["bn1"])
    flat += [s[:, None], t[:, None]]
    so, to = _fold_bn(params["bn_out"])
    flat += [params["conv2"]["w"] * so[:, None],
             (so * params["conv2"]["b"] + to)[:, None]]
    # out_conv: phase-fused ConvTranspose1d weight (4C, 3C) and bias (4C, 1).
    # phase p of the output (positions 4j+p) is:
    #   p=0: W1 y_j + W5 y_{j-1};  p=1: W2 y_j;  p=2: W3 y_j;  p=3: W4 y_j + W0 y_{j+1}
    wt = params["out_conv"]["w"]                 # (6, Cout, Cin)
    z = jnp.zeros_like(wt[0])
    wcat = jnp.concatenate([
        jnp.concatenate([wt[1], wt[5], z], axis=1),
        jnp.concatenate([wt[2], z, z], axis=1),
        jnp.concatenate([wt[3], z, z], axis=1),
        jnp.concatenate([wt[4], z, wt[0]], axis=1),
    ], axis=0)
    bias4 = jnp.tile(params["out_conv"]["b"][:, None], (4, 1))
    flat += [wcat, bias4]

    Lq = L // 4

    def full_spec(a):
        nd = a.ndim
        return pl.BlockSpec(a.shape, lambda b, _n=nd: (0,) * _n)

    in_specs = ([pl.BlockSpec((1, C, L), lambda b: (b, 0, 0)),
                 pl.BlockSpec((1, C, L // 2), lambda b: (b, 0, 0)),
                 pl.BlockSpec((1, C, L // 4), lambda b: (b, 0, 0))]
                + [full_spec(a) for a in flat])

    phases = pl.pallas_call(
        _make_kernel(NB),
        out_shape=jax.ShapeDtypeStruct((B, 4 * C, Lq), jnp.float32),
        grid=(B,),
        in_specs=in_specs,
        out_specs=pl.BlockSpec((1, 4 * C, Lq), lambda b: (b, 0, 0)),
        compiler_params=pltpu.CompilerParams(dimension_semantics=("parallel",)),
    )(xt, xa1, xa2, *flat)

    # Un-phase the ConvTranspose output (pure layout plumbing, wrapper-side):
    #   phases[b, p*C + c, j] == out[b, c, 4*j + p]
    y = phases.reshape(B, 4, C, Lq).transpose(0, 2, 3, 1).reshape(B, C, 4 * Lq)
    return jnp.transpose(y, (0, 2, 1))           # matches out.permute(0, 2, 1)


# ---------------------------------------------------------------------------
# Parameter init and pure-JAX reference (PyTorch eval-mode semantics).
# ---------------------------------------------------------------------------
def init_params(key, *, input_channel=16, wave_channel1=32, wave_channel2=24,
                growth_rate=8, n_dense_blocks=4):
    keys = iter(jax.random.split(key, 512))

    def w_init(shape, fan_in):
        return jax.random.normal(next(keys), shape, jnp.float32) / jnp.sqrt(float(fan_in))

    def b_init(n):
        return 0.1 * jax.random.normal(next(keys), (n,), jnp.float32)

    def bn_init(n):
        return dict(
            gamma=jax.random.uniform(next(keys), (n,), jnp.float32, 0.5, 1.5),
            beta=0.1 * jax.random.normal(next(keys), (n,), jnp.float32),
            mean=0.1 * jax.random.normal(next(keys), (n,), jnp.float32),
            var=jax.random.uniform(next(keys), (n,), jnp.float32, 0.5, 1.5),
        )

    def dense_params(n_in):
        blocks, n = [], n_in
        for _ in range(n_dense_blocks):
            inter = 4 * growth_rate
            blocks.append(dict(
                bn1=bn_init(n),
                w1=w_init((inter, n), n),                       # 1x1, bias=False
                bn2=bn_init(inter),
                w2=w_init((growth_rate, inter, 3), 3 * inter),  # k=3, bias=False
            ))
            n += growth_rate
        return blocks, n

    d1, n1 = dense_params(wave_channel1)
    d2, n2 = dense_params(wave_channel1)
    return dict(
        conv1=dict(w=w_init((wave_channel1, input_channel, 3), 3 * input_channel),
                   b=b_init(wave_channel1)),
        dwt=dict(
            w1=w_init((wave_channel1, input_channel, 3), 3 * input_channel),
            b1=b_init(wave_channel1), bn1=bn_init(wave_channel1),
            w2=w_init((wave_channel2, input_channel, 3), 3 * input_channel),
            b2=b_init(wave_channel2), bn2=bn_init(wave_channel2),
        ),
        dense1=d1,
        trans1=dict(bn=bn_init(n1), w=w_init((wave_channel1, n1), n1)),
        dense2=d2,
        trans2=dict(bn=bn_init(n2), w=w_init((wave_channel2, n2), n2)),
        bn1=bn_init(wave_channel2),
        conv2=dict(w=w_init((input_channel, wave_channel2), wave_channel2),
                   b=b_init(input_channel)),
        bn_out=bn_init(input_channel),
        out_conv=dict(w=w_init((6, input_channel, input_channel), 6 * input_channel),
                      b=b_init(input_channel)),
    )


def _reference_forward(x, params):
    def bn(h, p):
        scale = p["gamma"] / jnp.sqrt(p["var"] + _BN_EPS)
        shift = p["beta"] - scale * p["mean"]
        return h * scale[None, :, None] + shift[None, :, None]

    def relu(h):
        return jnp.maximum(h, 0.0)

    def conv3(h, w, b=None):
        t = h.shape[-1]
        hp = jnp.pad(h, ((0, 0), (0, 0), (1, 1)))
        y = sum(jnp.einsum("oc,bct->bot", w[:, :, k], hp[:, :, k:k + t])
                for k in range(3))
        return y if b is None else y + b[None, :, None]

    def conv1x1(h, w, b=None):
        y = jnp.einsum("oc,bct->bot", w, h)
        return y if b is None else y + b[None, :, None]

    def avg_pool2(h):
        bb, cc, tt = h.shape
        return h.reshape(bb, cc, tt // 2, 2).mean(-1)

    def bottleneck(h, p):
        a = conv1x1(relu(bn(h, p["bn1"])), p["w1"])
        a = conv3(relu(bn(a, p["bn2"])), p["w2"])
        return jnp.concatenate([h, a], axis=1)

    def transition(h, p):
        return avg_pool2(conv1x1(relu(bn(h, p["bn"])), p["w"]))

    xt = jnp.transpose(x, (0, 2, 1))
    out = conv3(xt, params["conv1"]["w"], params["conv1"]["b"])
    xa1 = _haar_low(xt)
    xa2 = _haar_low(xa1)
    dp = params["dwt"]
    dwt0 = relu(bn(conv3(xa1, dp["w1"], dp["b1"]), dp["bn1"]))
    dwt1 = relu(bn(conv3(xa2, dp["w2"], dp["b2"]), dp["bn2"]))

    for p in params["dense1"]:
        out = bottleneck(out, p)
    out = transition(out, params["trans1"]) + dwt0
    for p in params["dense2"]:
        out = bottleneck(out, p)
    out = transition(out, params["trans2"]) + dwt1

    out = relu(bn(out, params["bn1"]))
    out = conv1x1(out, params["conv2"]["w"], params["conv2"]["b"])
    out = relu(bn(out, params["bn_out"]))

    wt, b = params["out_conv"]["w"], params["out_conv"]["b"]
    bb, _, lin = out.shape
    cout = wt.shape[1]
    full = jnp.zeros((bb, cout, 4 * lin + 2), jnp.float32)
    for k in range(6):
        contrib = jnp.einsum("oc,bcj->boj", wt[k], out)
        full = full.at[:, :, k:k + 4 * lin:4].add(contrib)
    y = full[:, :, 1:1 + 4 * lin] + b[None, :, None]
    return jnp.transpose(y, (0, 2, 1))


if __name__ == "__main__":
    B, L = 2, 128
    C, W1, W2, G, NB = 16, 32, 24, 8, 4

    key = jax.random.PRNGKey(0)
    kx, kp = jax.random.split(key)
    x = jax.random.normal(kx, (B, L, C), jnp.float32)
    params = init_params(kp, input_channel=C, wave_channel1=W1,
                         wave_channel2=W2, growth_rate=G, n_dense_blocks=NB)

    out = jax.jit(densewave_forward)(x, params)
    out = jax.block_until_ready(out)
    assert out.shape == (B, L, C), out.shape

    ref = _reference_forward(x, params)
    max_err = float(jnp.max(jnp.abs(out - ref)))
    assert jnp.allclose(out, ref, atol=1e-3, rtol=1e-3), max_err

    print("KERNEL_OK")
</pallas_src>

<mosaic_0001>
module attributes {stable_mosaic.version = 11 : i64} {
  func.func @kernel(%arg0: i32, %arg1: memref<1x16x128xf32, #tpu.memory_space<vmem>>, %arg2: memref<1x16x64xf32, #tpu.memory_space<vmem>>, %arg3: memref<1x16x32xf32, #tpu.memory_space<vmem>>, %arg4: memref<32x48xf32, #tpu.memory_space<vmem>>, %arg5: memref<32x1xf32, #tpu.memory_space<vmem>>, %arg6: memref<32x48xf32, #tpu.memory_space<vmem>>, %arg7: memref<32x1xf32, #tpu.memory_space<vmem>>, %arg8: memref<24x48xf32, #tpu.memory_space<vmem>>, %arg9: memref<24x1xf32, #tpu.memory_space<vmem>>, %arg10: memref<32x1xf32, #tpu.memory_space<vmem>>, %arg11: memref<32x1xf32, #tpu.memory_space<vmem>>, %arg12: memref<32x32xf32, #tpu.memory_space<vmem>>, %arg13: memref<32x1xf32, #tpu.memory_space<vmem>>, %arg14: memref<8x96xf32, #tpu.memory_space<vmem>>, %arg15: memref<40x1xf32, #tpu.memory_space<vmem>>, %arg16: memref<40x1xf32, #tpu.memory_space<vmem>>, %arg17: memref<32x40xf32, #tpu.memory_space<vmem>>, %arg18: memref<32x1xf32, #tpu.memory_space<vmem>>, %arg19: memref<8x96xf32, #tpu.memory_space<vmem>>, %arg20: memref<48x1xf32, #tpu.memory_space<vmem>>, %arg21: memref<48x1xf32, #tpu.memory_space<vmem>>, %arg22: memref<32x48xf32, #tpu.memory_space<vmem>>, %arg23: memref<32x1xf32, #tpu.memory_space<vmem>>, %arg24: memref<8x96xf32, #tpu.memory_space<vmem>>, %arg25: memref<56x1xf32, #tpu.memory_space<vmem>>, %arg26: memref<56x1xf32, #tpu.memory_space<vmem>>, %arg27: memref<32x56xf32, #tpu.memory_space<vmem>>, %arg28: memref<32x1xf32, #tpu.memory_space<vmem>>, %arg29: memref<8x96xf32, #tpu.memory_space<vmem>>, %arg30: memref<64x1xf32, #tpu.memory_space<vmem>>, %arg31: memref<64x1xf32, #tpu.memory_space<vmem>>, %arg32: memref<32x64xf32, #tpu.memory_space<vmem>>, %arg33: memref<128x64xf32, #tpu.memory_space<vmem>>, %arg34: memref<32x1xf32, #tpu.memory_space<vmem>>, %arg35: memref<32x1xf32, #tpu.memory_space<vmem>>, %arg36: memref<32x32xf32, #tpu.memory_space<vmem>>, %arg37: memref<32x1xf32, #tpu.memory_space<vmem>>, %arg38: memref<8x96xf32, #tpu.memory_space<vmem>>, %arg39: memref<40x1xf32, #tpu.memory_space<vmem>>, %arg40: memref<40x1xf32, #tpu.memory_space<vmem>>, %arg41: memref<32x40xf32, #tpu.memory_space<vmem>>, %arg42: memref<32x1xf32, #tpu.memory_space<vmem>>, %arg43: memref<8x96xf32, #tpu.memory_space<vmem>>, %arg44: memref<48x1xf32, #tpu.memory_space<vmem>>, %arg45: memref<48x1xf32, #tpu.memory_space<vmem>>, %arg46: memref<32x48xf32, #tpu.memory_space<vmem>>, %arg47: memref<32x1xf32, #tpu.memory_space<vmem>>, %arg48: memref<8x96xf32, #tpu.memory_space<vmem>>, %arg49: memref<56x1xf32, #tpu.memory_space<vmem>>, %arg50: memref<56x1xf32, #tpu.memory_space<vmem>>, %arg51: memref<32x56xf32, #tpu.memory_space<vmem>>, %arg52: memref<32x1xf32, #tpu.memory_space<vmem>>, %arg53: memref<8x96xf32, #tpu.memory_space<vmem>>, %arg54: memref<64x1xf32, #tpu.memory_space<vmem>>, %arg55: memref<64x1xf32, #tpu.memory_space<vmem>>, %arg56: memref<24x64xf32, #tpu.memory_space<vmem>>, %arg57: memref<64x32xf32, #tpu.memory_space<vmem>>, %arg58: memref<24x1xf32, #tpu.memory_space<vmem>>, %arg59: memref<24x1xf32, #tpu.memory_space<vmem>>, %arg60: memref<16x24xf32, #tpu.memory_space<vmem>>, %arg61: memref<16x1xf32, #tpu.memory_space<vmem>>, %arg62: memref<64x48xf32, #tpu.memory_space<vmem>>, %arg63: memref<64x1xf32, #tpu.memory_space<vmem>>, %arg64: memref<1x64x32xf32, #tpu.memory_space<vmem>>) attributes {dimension_semantics = [#tpu.dimension_semantics<parallel>], iteration_bounds = array<i64: 2>, scalar_prefetch = 0 : i64, scratch_operands = 0 : i64, tpu.core_type = #tpu.core_type<tc>, window_params = [{transform_indices = @transform_0, window_bounds = array<i64: 1, 16, 128>}, {transform_indices = @transform_1, window_bounds = array<i64: 1, 16, 64>}, {transform_indices = @transform_2, window_bounds = array<i64: 1, 16, 32>}, {pipeline_mode = #tpu.pipeline_mode<synchronous>, transform_indices = @transform_3, window_bounds = array<i64: 32, 48>}, {pipeline_mode = #tpu.pipeline_mode<synchronous>, transform_indices = @transform_4, window_bounds = array<i64: 32, 1>}, {pipeline_mode = #tpu.pipeline_mode<synchronous>, transform_indices = @transform_5, window_bounds = array<i64: 32, 48>}, {pipeline_mode = #tpu.pipeline_mode<synchronous>, transform_indices = @transform_6, window_bounds = array<i64: 32, 1>}, {pipeline_mode = #tpu.pipeline_mode<synchronous>, transform_indices = @transform_7, window_bounds = array<i64: 24, 48>}, {pipeline_mode = #tpu.pipeline_mode<synchronous>, transform_indices = @transform_8, window_bounds = array<i64: 24, 1>}, {pipeline_mode = #tpu.pipeline_mode<synchronous>, transform_indices = @transform_9, window_bounds = array<i64: 32, 1>}, {pipeline_mode = #tpu.pipeline_mode<synchronous>, transform_indices = @transform_10, window_bounds = array<i64: 32, 1>}, {pipeline_mode = #tpu.pipeline_mode<synchronous>, transform_indices = @transform_11, window_bounds = array<i64: 32, 32>}, {pipeline_mode = #tpu.pipeline_mode<synchronous>, transform_indices = @transform_12, window_bounds = array<i64: 32, 1>}, {pipeline_mode = #tpu.pipeline_mode<synchronous>, transform_indices = @transform_13, window_bounds = array<i64: 8, 96>}, {pipeline_mode = #tpu.pipeline_mode<synchronous>, transform_indices = @transform_14, window_bounds = array<i64: 40, 1>}, {pipeline_mode = #tpu.pipeline_mode<synchronous>, transform_indices = @transform_15, window_bounds = array<i64: 40, 1>}, {pipeline_mode = #tpu.pipeline_mode<synchronous>, transform_indices = @transform_16, window_bounds = array<i64: 32, 40>}, {pipeline_mode = #tpu.pipeline_mode<synchronous>, transform_indices = @transform_17, window_bounds = array<i64: 32, 1>}, {pipeline_mode = #tpu.pipeline_mode<synchronous>, transform_indices = @transform_18, window_bounds = array<i64: 8, 96>}, {pipeline_mode = #tpu.pipeline_mode<synchronous>, transform_indices = @transform_19, window_bounds = array<i64: 48, 1>}, {pipeline_mode = #tpu.pipeline_mode<synchronous>, transform_indices = @transform_20, window_bounds = array<i64: 48, 1>}, {pipeline_mode = #tpu.pipeline_mode<synchronous>, transform_indices = @transform_21, window_bounds = array<i64: 32, 48>}, {pipeline_mode = #tpu.pipeline_mode<synchronous>, transform_indices = @transform_22, window_bounds = array<i64: 32, 1>}, {pipeline_mode = #tpu.pipeline_mode<synchronous>, transform_indices = @transform_23, window_bounds = array<i64: 8, 96>}, {pipeline_mode = #tpu.pipeline_mode<synchronous>, transform_indices = @transform_24, window_bounds = array<i64: 56, 1>}, {pipeline_mode = #tpu.pipeline_mode<synchronous>, transform_indices = @transform_25, window_bounds = array<i64: 56, 1>}, {pipeline_mode = #tpu.pipeline_mode<synchronous>, transform_indices = @transform_26, window_bounds = array<i64: 32, 56>}, {pipeline_mode = #tpu.pipeline_mode<synchronous>, transform_indices = @transform_27, window_bounds = array<i64: 32, 1>}, {pipeline_mode = #tpu.pipeline_mode<synchronous>, transform_indices = @transform_28, window_bounds = array<i64: 8, 96>}, {pipeline_mode = #tpu.pipeline_mode<synchronous>, transform_indices = @transform_29, window_bounds = array<i64: 64, 1>}, {pipeline_mode = #tpu.pipeline_mode<synchronous>, transform_indices = @transform_30, window_bounds = array<i64: 64, 1>}, {pipeline_mode = #tpu.pipeline_mode<synchronous>, transform_indices = @transform_31, window_bounds = array<i64: 32, 64>}, {pipeline_mode = #tpu.pipeline_mode<synchronous>, transform_indices = @transform_32, window_bounds = array<i64: 128, 64>}, {pipeline_mode = #tpu.pipeline_mode<synchronous>, transform_indices = @transform_33, window_bounds = array<i64: 32, 1>}, {pipeline_mode = #tpu.pipeline_mode<synchronous>, transform_indices = @transform_34, window_bounds = array<i64: 32, 1>}, {pipeline_mode = #tpu.pipeline_mode<synchronous>, transform_indices = @transform_35, window_bounds = array<i64: 32, 32>}, {pipeline_mode = #tpu.pipeline_mode<synchronous>, transform_indices = @transform_36, window_bounds = array<i64: 32, 1>}, {pipeline_mode = #tpu.pipeline_mode<synchronous>, transform_indices = @transform_37, window_bounds = array<i64: 8, 96>}, {pipeline_mode = #tpu.pipeline_mode<synchronous>, transform_indices = @transform_38, window_bounds = array<i64: 40, 1>}, {pipeline_mode = #tpu.pipeline_mode<synchronous>, transform_indices = @transform_39, window_bounds = array<i64: 40, 1>}, {pipeline_mode = #tpu.pipeline_mode<synchronous>, transform_indices = @transform_40, window_bounds = array<i64: 32, 40>}, {pipeline_mode = #tpu.pipeline_mode<synchronous>, transform_indices = @transform_41, window_bounds = array<i64: 32, 1>}, {pipeline_mode = #tpu.pipeline_mode<synchronous>, transform_indices = @transform_42, window_bounds = array<i64: 8, 96>}, {pipeline_mode = #tpu.pipeline_mode<synchronous>, transform_indices = @transform_43, window_bounds = array<i64: 48, 1>}, {pipeline_mode = #tpu.pipeline_mode<synchronous>, transform_indices = @transform_44, window_bounds = array<i64: 48, 1>}, {pipeline_mode = #tpu.pipeline_mode<synchronous>, transform_indices = @transform_45, window_bounds = array<i64: 32, 48>}, {pipeline_mode = #tpu.pipeline_mode<synchronous>, transform_indices = @transform_46, window_bounds = array<i64: 32, 1>}, {pipeline_mode = #tpu.pipeline_mode<synchronous>, transform_indices = @transform_47, window_bounds = array<i64: 8, 96>}, {pipeline_mode = #tpu.pipeline_mode<synchronous>, transform_indices = @transform_48, window_bounds = array<i64: 56, 1>}, {pipeline_mode = #tpu.pipeline_mode<synchronous>, transform_indices = @transform_49, window_bounds = array<i64: 56, 1>}, {pipeline_mode = #tpu.pipeline_mode<synchronous>, transform_indices = @transform_50, window_bounds = array<i64: 32, 56>}, {pipeline_mode = #tpu.pipeline_mode<synchronous>, transform_indices = @transform_51, window_bounds = array<i64: 32, 1>}, {pipeline_mode = #tpu.pipeline_mode<synchronous>, transform_indices = @transform_52, window_bounds = array<i64: 8, 96>}, {pipeline_mode = #tpu.pipeline_mode<synchronous>, transform_indices = @transform_53, window_bounds = array<i64: 64, 1>}, {pipeline_mode = #tpu.pipeline_mode<synchronous>, transform_indices = @transform_54, window_bounds = array<i64: 64, 1>}, {pipeline_mode = #tpu.pipeline_mode<synchronous>, transform_indices = @transform_55, window_bounds = array<i64: 24, 64>}, {pipeline_mode = #tpu.pipeline_mode<synchronous>, transform_indices = @transform_56, window_bounds = array<i64: 64, 32>}, {pipeline_mode = #tpu.pipeline_mode<synchronous>, transform_indices = @transform_57, window_bounds = array<i64: 24, 1>}, {pipeline_mode = #tpu.pipeline_mode<synchronous>, transform_indices = @transform_58, window_bounds = array<i64: 24, 1>}, {pipeline_mode = #tpu.pipeline_mode<synchronous>, transform_indices = @transform_59, window_bounds = array<i64: 16, 24>}, {pipeline_mode = #tpu.pipeline_mode<synchronous>, transform_indices = @transform_60, window_bounds = array<i64: 16, 1>}, {pipeline_mode = #tpu.pipeline_mode<synchronous>, transform_indices = @transform_61, window_bounds = array<i64: 64, 48>}, {pipeline_mode = #tpu.pipeline_mode<synchronous>, transform_indices = @transform_62, window_bounds = array<i64: 64, 1>}, {transform_indices = @transform_63, window_bounds = array<i64: 1, 64, 32>}]} {
    %c0 = arith.constant 0 : index
    %c0_0 = arith.constant 0 : index
    %c0_1 = arith.constant 0 : index
    %0 = vector.load %arg1[%c0, %c0_0, %c0_1] : memref<1x16x128xf32, #tpu.memory_space<vmem>>, vector<1x16x128xf32>
    %1 = vector.shape_cast %0 : vector<1x16x128xf32> to vector<16x128xf32>
    %c0_2 = arith.constant 0 : index
    %c0_3 = arith.constant 0 : index
    %c0_4 = arith.constant 0 : index
    %2 = vector.load %arg2[%c0_2, %c0_3, %c0_4] : memref<1x16x64xf32, #tpu.memory_space<vmem>>, vector<1x16x64xf32>
    %3 = vector.shape_cast %2 : vector<1x16x64xf32> to vector<16x64xf32>
    %c0_5 = arith.constant 0 : index
    %c0_6 = arith.constant 0 : index
    %c0_7 = arith.constant 0 : index
    %4 = vector.load %arg3[%c0_5, %c0_6, %c0_7] : memref<1x16x32xf32, #tpu.memory_space<vmem>>, vector<1x16x32xf32>
    %5 = vector.shape_cast %4 : vector<1x16x32xf32> to vector<16x32xf32>
    %c0_8 = arith.constant 0 : index
    %c0_9 = arith.constant 0 : index
    %6 = vector.load %arg4[%c0_8, %c0_9] : memref<32x48xf32, #tpu.memory_space<vmem>>, vector<32x48xf32>
    %c0_10 = arith.constant 0 : index
    %c0_11 = arith.constant 0 : index
    %7 = vector.load %arg5[%c0_10, %c0_11] : memref<32x1xf32, #tpu.memory_space<vmem>>, vector<32x1xf32>
    %8 = tpu.iota {dimensions = array<i32: 1>} : vector<16x128xi32>
    %c0_i32 = arith.constant 0 : i32
    %9 = vector.broadcast %c0_i32 : i32 to vector<16x128xi32>
    %10 = arith.cmpi eq, %8, %9 : vector<16x128xi32>
    %c1_i32 = arith.constant 1 : i32
    %11 = tpu.dynamic_rotate %1 by %c1_i32 dim 1 : vector<16x128xf32>, i32 -> vector<16x128xf32>
    %cst = arith.constant 0.000000e+00 : f32
    %12 = vector.broadcast %cst : f32 to vector<16x128xf32>
    %13 = arith.select %10, %12, %11 : vector<16x128xi1>, vector<16x128xf32>
    %14 = tpu.iota {dimensions = array<i32: 1>} : vector<16x128xi32>
    %c127_i32 = arith.constant 127 : i32
    %15 = vector.broadcast %c127_i32 : i32 to vector<16x128xi32>
    %16 = arith.cmpi eq, %14, %15 : vector<16x128xi32>
    %c127_i32_12 = arith.constant 127 : i32
    %17 = tpu.dynamic_rotate %1 by %c127_i32_12 dim 1 : vector<16x128xf32>, i32 -> vector<16x128xf32>
    %cst_13 = arith.constant 0.000000e+00 : f32
    %18 = vector.broadcast %cst_13 : f32 to vector<16x128xf32>
    %19 = arith.select %16, %18, %17 : vector<16x128xi1>, vector<16x128xf32>
    %20 = tpu.concatenate %13, %1, %19 in 0 : vector<16x128xf32>, vector<16x128xf32>, vector<16x128xf32> -> vector<48x128xf32>
    %cst_14 = arith.constant dense<0.000000e+00> : vector<32x128xf32>
    %21 = tpu.matmul %6, %20, %cst_14 {dimension_numbers = #tpu.dot_dimension_numbers<[1], [0], [0], [1], [0, 0, 1, 1], [], []>} : vector<32x48xf32>, vector<48x128xf32>, vector<32x128xf32> -> vector<32x128xf32>
    %22 = vector.broadcast %7 : vector<32x1xf32> to vector<32x128xf32>
    %23 = arith.addf %21, %22 : vector<32x128xf32>
    %c0_15 = arith.constant 0 : index
    %c0_16 = arith.constant 0 : index
    %24 = vector.load %arg6[%c0_15, %c0_16] : memref<32x48xf32, #tpu.memory_space<vmem>>, vector<32x48xf32>
    %c0_17 = arith.constant 0 : index
    %c0_18 = arith.constant 0 : index
    %25 = vector.load %arg7[%c0_17, %c0_18] : memref<32x1xf32, #tpu.memory_space<vmem>>, vector<32x1xf32>
    %26 = tpu.iota {dimensions = array<i32: 1>} : vector<16x64xi32>
    %c0_i32_19 = arith.constant 0 : i32
    %27 = vector.broadcast %c0_i32_19 : i32 to vector<16x64xi32>
    %28 = arith.cmpi eq, %26, %27 : vector<16x64xi32>
    %c1_i32_20 = arith.constant 1 : i32
    %29 = tpu.dynamic_rotate %3 by %c1_i32_20 dim 1 : vector<16x64xf32>, i32 -> vector<16x64xf32>
    %cst_21 = arith.constant 0.000000e+00 : f32
    %30 = vector.broadcast %cst_21 : f32 to vector<16x64xf32>
    %31 = arith.select %28, %30, %29 : vector<16x64xi1>, vector<16x64xf32>
    %32 = tpu.iota {dimensions = array<i32: 1>} : vector<16x64xi32>
    %c63_i32 = arith.constant 63 : i32
    %33 = vector.broadcast %c63_i32 : i32 to vector<16x64xi32>
    %34 = arith.cmpi eq, %32, %33 : vector<16x64xi32>
    %c63_i32_22 = arith.constant 63 : i32
    %35 = tpu.dynamic_rotate %3 by %c63_i32_22 dim 1 : vector<16x64xf32>, i32 -> vector<16x64xf32>
    %cst_23 = arith.constant 0.000000e+00 : f32
    %36 = vector.broadcast %cst_23 : f32 to vector<16x64xf32>
    %37 = arith.select %34, %36, %35 : vector<16x64xi1>, vector<16x64xf32>
    %38 = tpu.concatenate %31, %3, %37 in 0 : vector<16x64xf32>, vector<16x64xf32>, vector<16x64xf32> -> vector<48x64xf32>
    %cst_24 = arith.constant dense<0.000000e+00> : vector<32x64xf32>
    %39 = tpu.matmul %24, %38, %cst_24 {dimension_numbers = #tpu.dot_dimension_numbers<[1], [0], [0], [1], [0, 0, 1, 1], [], []>} : vector<32x48xf32>, vector<48x64xf32>, vector<32x64xf32> -> vector<32x64xf32>
    %40 = vector.broadcast %25 : vector<32x1xf32> to vector<32x64xf32>
    %41 = arith.addf %39, %40 : vector<32x64xf32>
    %cst_25 = arith.constant 0.000000e+00 : f32
    %42 = vector.broadcast %cst_25 : f32 to vector<32x64xf32>
    %43 = arith.maximumf %41, %42 : vector<32x64xf32>
    %c0_26 = arith.constant 0 : index
    %c0_27 = arith.constant 0 : index
    %44 = vector.load %arg8[%c0_26, %c0_27] : memref<24x48xf32, #tpu.memory_space<vmem>>, vector<24x48xf32>
    %c0_28 = arith.constant 0 : index
    %c0_29 = arith.constant 0 : index
    %45 = vector.load %arg9[%c0_28, %c0_29] : memref<24x1xf32, #tpu.memory_space<vmem>>, vector<24x1xf32>
    %46 = tpu.iota {dimensions = array<i32: 1>} : vector<16x32xi32>
    %c0_i32_30 = arith.constant 0 : i32
    %47 = vector.broadcast %c0_i32_30 : i32 to vector<16x32xi32>
    %48 = arith.cmpi eq, %46, %47 : vector<16x32xi32>
    %c1_i32_31 = arith.constant 1 : i32
    %49 = tpu.dynamic_rotate %5 by %c1_i32_31 dim 1 : vector<16x32xf32>, i32 -> vector<16x32xf32>
    %cst_32 = arith.constant 0.000000e+00 : f32
    %50 = vector.broadcast %cst_32 : f32 to vector<16x32xf32>
    %51 = arith.select %48, %50, %49 : vector<16x32xi1>, vector<16x32xf32>
    %52 = tpu.iota {dimensions = array<i32: 1>} : vector<16x32xi32>
    %c31_i32 = arith.constant 31 : i32
    %53 = vector.broadcast %c31_i32 : i32 to vector<16x32xi32>
    %54 = arith.cmpi eq, %52, %53 : vector<16x32xi32>
    %c31_i32_33 = arith.constant 31 : i32
    %55 = tpu.dynamic_rotate %5 by %c31_i32_33 dim 1 : vector<16x32xf32>, i32 -> vector<16x32xf32>
    %cst_34 = arith.constant 0.000000e+00 : f32
    %56 = vector.broadcast %cst_34 : f32 to vector<16x32xf32>
    %57 = arith.select %54, %56, %55 : vector<16x32xi1>, vector<16x32xf32>
    %58 = tpu.concatenate %51, %5, %57 in 0 : vector<16x32xf32>, vector<16x32xf32>, vector<16x32xf32> -> vector<48x32xf32>
    %cst_35 = arith.constant dense<0.000000e+00> : vector<24x32xf32>
    %59 = tpu.matmul %44, %58, %cst_35 {dimension_numbers = #tpu.dot_dimension_numbers<[1], [0], [0], [1], [0, 0, 1, 1], [], []>} : vector<24x48xf32>, vector<48x32xf32>, vector<24x32xf32> -> vector<24x32xf32>
    %60 = vector.broadcast %45 : vector<24x1xf32> to vector<24x32xf32>
    %61 = arith.addf %59, %60 : vector<24x32xf32>
    %cst_36 = arith.constant 0.000000e+00 : f32
    %62 = vector.broadcast %cst_36 : f32 to vector<24x32xf32>
    %63 = arith.maximumf %61, %62 : vector<24x32xf32>
    %c0_37 = arith.constant 0 : index
    %c0_38 = arith.constant 0 : index
    %64 = vector.load %arg10[%c0_37, %c0_38] : memref<32x1xf32, #tpu.memory_space<vmem>>, vector<32x1xf32>
    %c0_39 = arith.constant 0 : index
    %c0_40 = arith.constant 0 : index
    %65 = vector.load %arg11[%c0_39, %c0_40] : memref<32x1xf32, #tpu.memory_space<vmem>>, vector<32x1xf32>
    %c0_41 = arith.constant 0 : index
    %c0_42 = arith.constant 0 : index
    %66 = vector.load %arg12[%c0_41, %c0_42] : memref<32x32xf32, #tpu.memory_space<vmem>>, vector<32x32xf32>
    %c0_43 = arith.constant 0 : index
    %c0_44 = arith.constant 0 : index
    %67 = vector.load %arg13[%c0_43, %c0_44] : memref<32x1xf32, #tpu.memory_space<vmem>>, vector<32x1xf32>
    %c0_45 = arith.constant 0 : index
    %c0_46 = arith.constant 0 : index
    %68 = vector.load %arg14[%c0_45, %c0_46] : memref<8x96xf32, #tpu.memory_space<vmem>>, vector<8x96xf32>
    %69 = vector.broadcast %64 : vector<32x1xf32> to vector<32x128xf32>
    %70 = arith.mulf %23, %69 : vector<32x128xf32>
    %71 = vector.broadcast %65 : vector<32x1xf32> to vector<32x128xf32>
    %72 = arith.addf %70, %71 : vector<32x128xf32>
    %cst_47 = arith.constant 0.000000e+00 : f32
    %73 = vector.broadcast %cst_47 : f32 to vector<32x128xf32>
    %74 = arith.maximumf %72, %73 : vector<32x128xf32>
    %cst_48 = arith.constant dense<0.000000e+00> : vector<32x128xf32>
    %75 = tpu.matmul %66, %74, %cst_48 {dimension_numbers = #tpu.dot_dimension_numbers<[1], [0], [0], [1], [0, 0, 1, 1], [], []>} : vector<32x32xf32>, vector<32x128xf32>, vector<32x128xf32> -> vector<32x128xf32>
    %76 = vector.broadcast %67 : vector<32x1xf32> to vector<32x128xf32>
    %77 = arith.addf %75, %76 : vector<32x128xf32>
    %cst_49 = arith.constant 0.000000e+00 : f32
    %78 = vector.broadcast %cst_49 : f32 to vector<32x128xf32>
    %79 = arith.maximumf %77, %78 : vector<32x128xf32>
    %80 = tpu.iota {dimensions = array<i32: 1>} : vector<32x128xi32>
    %c0_i32_50 = arith.constant 0 : i32
    %81 = vector.broadcast %c0_i32_50 : i32 to vector<32x128xi32>
    %82 = arith.cmpi eq, %80, %81 : vector<32x128xi32>
    %c1_i32_51 = arith.constant 1 : i32
    %83 = tpu.dynamic_rotate %79 by %c1_i32_51 dim 1 : vector<32x128xf32>, i32 -> vector<32x128xf32>
    %cst_52 = arith.constant 0.000000e+00 : f32
    %84 = vector.broadcast %cst_52 : f32 to vector<32x128xf32>
    %85 = arith.select %82, %84, %83 : vector<32x128xi1>, vector<32x128xf32>
    %86 = tpu.iota {dimensions = array<i32: 1>} : vector<32x128xi32>
    %c127_i32_53 = arith.constant 127 : i32
    %87 = vector.broadcast %c127_i32_53 : i32 to vector<32x128xi32>
    %88 = arith.cmpi eq, %86, %87 : vector<32x128xi32>
    %c127_i32_54 = arith.constant 127 : i32
    %89 = tpu.dynamic_rotate %79 by %c127_i32_54 dim 1 : vector<32x128xf32>, i32 -> vector<32x128xf32>
    %cst_55 = arith.constant 0.000000e+00 : f32
    %90 = vector.broadcast %cst_55 : f32 to vector<32x128xf32>
    %91 = arith.select %88, %90, %89 : vector<32x128xi1>, vector<32x128xf32>
    %92 = tpu.concatenate %85, %79, %91 in 0 : vector<32x128xf32>, vector<32x128xf32>, vector<32x128xf32> -> vector<96x128xf32>
    %cst_56 = arith.constant dense<0.000000e+00> : vector<8x128xf32>
    %93 = tpu.matmul %68, %92, %cst_56 {dimension_numbers = #tpu.dot_dimension_numbers<[1], [0], [0], [1], [0, 0, 1, 1], [], []>} : vector<8x96xf32>, vector<96x128xf32>, vector<8x128xf32> -> vector<8x128xf32>
    %94 = tpu.concatenate %23, %93 in 0 : vector<32x128xf32>, vector<8x128xf32> -> vector<40x128xf32>
    %c0_57 = arith.constant 0 : index
    %c0_58 = arith.constant 0 : index
    %95 = vector.load %arg15[%c0_57, %c0_58] : memref<40x1xf32, #tpu.memory_space<vmem>>, vector<40x1xf32>
    %c0_59 = arith.constant 0 : index
    %c0_60 = arith.constant 0 : index
    %96 = vector.load %arg16[%c0_59, %c0_60] : memref<40x1xf32, #tpu.memory_space<vmem>>, vector<40x1xf32>
    %c0_61 = arith.constant 0 : index
    %c0_62 = arith.constant 0 : index
    %97 = vector.load %arg17[%c0_61, %c0_62] : memref<32x40xf32, #tpu.memory_space<vmem>>, vector<32x40xf32>
    %c0_63 = arith.constant 0 : index
    %c0_64 = arith.constant 0 : index
    %98 = vector.load %arg18[%c0_63, %c0_64] : memref<32x1xf32, #tpu.memory_space<vmem>>, vector<32x1xf32>
    %c0_65 = arith.constant 0 : index
    %c0_66 = arith.constant 0 : index
    %99 = vector.load %arg19[%c0_65, %c0_66] : memref<8x96xf32, #tpu.memory_space<vmem>>, vector<8x96xf32>
    %100 = vector.broadcast %95 : vector<40x1xf32> to vector<40x128xf32>
    %101 = arith.mulf %94, %100 : vector<40x128xf32>
    %102 = vector.broadcast %96 : vector<40x1xf32> to vector<40x128xf32>
    %103 = arith.addf %101, %102 : vector<40x128xf32>
    %cst_67 = arith.constant 0.000000e+00 : f32
    %104 = vector.broadcast %cst_67 : f32 to vector<40x128xf32>
    %105 = arith.maximumf %103, %104 : vector<40x128xf32>
    %cst_68 = arith.constant dense<0.000000e+00> : vector<32x128xf32>
    %106 = tpu.matmul %97, %105, %cst_68 {dimension_numbers = #tpu.dot_dimension_numbers<[1], [0], [0], [1], [0, 0, 1, 1], [], []>} : vector<32x40xf32>, vector<40x128xf32>, vector<32x128xf32> -> vector<32x128xf32>
    %107 = vector.broadcast %98 : vector<32x1xf32> to vector<32x128xf32>
    %108 = arith.addf %106, %107 : vector<32x128xf32>
    %cst_69 = arith.constant 0.000000e+00 : f32
    %109 = vector.broadcast %cst_69 : f32 to vector<32x128xf32>
    %110 = arith.maximumf %108, %109 : vector<32x128xf32>
    %111 = tpu.iota {dimensions = array<i32: 1>} : vector<32x128xi32>
    %c0_i32_70 = arith.constant 0 : i32
    %112 = vector.broadcast %c0_i32_70 : i32 to vector<32x128xi32>
    %113 = arith.cmpi eq, %111, %112 : vector<32x128xi32>
    %c1_i32_71 = arith.constant 1 : i32
    %114 = tpu.dynamic_rotate %110 by %c1_i32_71 dim 1 : vector<32x128xf32>, i32 -> vector<32x128xf32>
    %cst_72 = arith.constant 0.000000e+00 : f32
    %115 = vector.broadcast %cst_72 : f32 to vector<32x128xf32>
    %116 = arith.select %113, %115, %114 : vector<32x128xi1>, vector<32x128xf32>
    %117 = tpu.iota {dimensions = array<i32: 1>} : vector<32x128xi32>
    %c127_i32_73 = arith.constant 127 : i32
    %118 = vector.broadcast %c127_i32_73 : i32 to vector<32x128xi32>
    %119 = arith.cmpi eq, %117, %118 : vector<32x128xi32>
    %c127_i32_74 = arith.constant 127 : i32
    %120 = tpu.dynamic_rotate %110 by %c127_i32_74 dim 1 : vector<32x128xf32>, i32 -> vector<32x128xf32>
    %cst_75 = arith.constant 0.000000e+00 : f32
    %121 = vector.broadcast %cst_75 : f32 to vector<32x128xf32>
    %122 = arith.select %119, %121, %120 : vector<32x128xi1>, vector<32x128xf32>
    %123 = tpu.concatenate %116, %110, %122 in 0 : vector<32x128xf32>, vector<32x128xf32>, vector<32x128xf32> -> vector<96x128xf32>
    %cst_76 = arith.constant dense<0.000000e+00> : vector<8x128xf32>
    %124 = tpu.matmul %99, %123, %cst_76 {dimension_numbers = #tpu.dot_dimension_numbers<[1], [0], [0], [1], [0, 0, 1, 1], [], []>} : vector<8x96xf32>, vector<96x128xf32>, vector<8x128xf32> -> vector<8x128xf32>
    %125 = tpu.concatenate %94, %124 in 0 : vector<40x128xf32>, vector<8x128xf32> -> vector<48x128xf32>
    %c0_77 = arith.constant 0 : index
    %c0_78 = arith.constant 0 : index
    %126 = vector.load %arg20[%c0_77, %c0_78] : memref<48x1xf32, #tpu.memory_space<vmem>>, vector<48x1xf32>
    %c0_79 = arith.constant 0 : index
    %c0_80 = arith.constant 0 : index
    %127 = vector.load %arg21[%c0_79, %c0_80] : memref<48x1xf32, #tpu.memory_space<vmem>>, vector<48x1xf32>
    %c0_81 = arith.constant 0 : index
    %c0_82 = arith.constant 0 : index
    %128 = vector.load %arg22[%c0_81, %c0_82] : memref<32x48xf32, #tpu.memory_space<vmem>>, vector<32x48xf32>
    %c0_83 = arith.constant 0 : index
    %c0_84 = arith.constant 0 : index
    %129 = vector.load %arg23[%c0_83, %c0_84] : memref<32x1xf32, #tpu.memory_space<vmem>>, vector<32x1xf32>
    %c0_85 = arith.constant 0 : index
    %c0_86 = arith.constant 0 : index
    %130 = vector.load %arg24[%c0_85, %c0_86] : memref<8x96xf32, #tpu.memory_space<vmem>>, vector<8x96xf32>
    %131 = vector.broadcast %126 : vector<48x1xf32> to vector<48x128xf32>
    %132 = arith.mulf %125, %131 : vector<48x128xf32>
    %133 = vector.broadcast %127 : vector<48x1xf32> to vector<48x128xf32>
    %134 = arith.addf %132, %133 : vector<48x128xf32>
    %cst_87 = arith.constant 0.000000e+00 : f32
    %135 = vector.broadcast %cst_87 : f32 to vector<48x128xf32>
    %136 = arith.maximumf %134, %135 : vector<48x128xf32>
    %cst_88 = arith.constant dense<0.000000e+00> : vector<32x128xf32>
    %137 = tpu.matmul %128, %136, %cst_88 {dimension_numbers = #tpu.dot_dimension_numbers<[1], [0], [0], [1], [0, 0, 1, 1], [], []>} : vector<32x48xf32>, vector<48x128xf32>, vector<32x128xf32> -> vector<32x128xf32>
    %138 = vector.broadcast %129 : vector<32x1xf32> to vector<32x128xf32>
    %139 = arith.addf %137, %138 : vector<32x128xf32>
    %cst_89 = arith.constant 0.000000e+00 : f32
    %140 = vector.broadcast %cst_89 : f32 to vector<32x128xf32>
    %141 = arith.maximumf %139, %140 : vector<32x128xf32>
    %142 = tpu.iota {dimensions = array<i32: 1>} : vector<32x128xi32>
    %c0_i32_90 = arith.constant 0 : i32
    %143 = vector.broadcast %c0_i32_90 : i32 to vector<32x128xi32>
    %144 = arith.cmpi eq, %142, %143 : vector<32x128xi32>
    %c1_i32_91 = arith.constant 1 : i32
    %145 = tpu.dynamic_rotate %141 by %c1_i32_91 dim 1 : vector<32x128xf32>, i32 -> vector<32x128xf32>
    %cst_92 = arith.constant 0.000000e+00 : f32
    %146 = vector.broadcast %cst_92 : f32 to vector<32x128xf32>
    %147 = arith.select %144, %146, %145 : vector<32x128xi1>, vector<32x128xf32>
    %148 = tpu.iota {dimensions = array<i32: 1>} : vector<32x128xi32>
    %c127_i32_93 = arith.constant 127 : i32
    %149 = vector.broadcast %c127_i32_93 : i32 to vector<32x128xi32>
    %150 = arith.cmpi eq, %148, %149 : vector<32x128xi32>
    %c127_i32_94 = arith.constant 127 : i32
    %151 = tpu.dynamic_rotate %141 by %c127_i32_94 dim 1 : vector<32x128xf32>, i32 -> vector<32x128xf32>
    %cst_95 = arith.constant 0.000000e+00 : f32
    %152 = vector.broadcast %cst_95 : f32 to vector<32x128xf32>
    %153 = arith.select %150, %152, %151 : vector<32x128xi1>, vector<32x128xf32>
    %154 = tpu.concatenate %147, %141, %153 in 0 : vector<32x128xf32>, vector<32x128xf32>, vector<32x128xf32> -> vector<96x128xf32>
    %cst_96 = arith.constant dense<0.000000e+00> : vector<8x128xf32>
    %155 = tpu.matmul %130, %154, %cst_96 {dimension_numbers = #tpu.dot_dimension_numbers<[1], [0], [0], [1], [0, 0, 1, 1], [], []>} : vector<8x96xf32>, vector<96x128xf32>, vector<8x128xf32> -> vector<8x128xf32>
    %156 = tpu.concatenate %125, %155 in 0 : vector<48x128xf32>, vector<8x128xf32> -> vector<56x128xf32>
    %c0_97 = arith.constant 0 : index
    %c0_98 = arith.constant 0 : index
    %157 = vector.load %arg25[%c0_97, %c0_98] : memref<56x1xf32, #tpu.memory_space<vmem>>, vector<56x1xf32>
    %c0_99 = arith.constant 0 : index
    %c0_100 = arith.constant 0 : index
    %158 = vector.load %arg26[%c0_99, %c0_100] : memref<56x1xf32, #tpu.memory_space<vmem>>, vector<56x1xf32>
    %c0_101 = arith.constant 0 : index
    %c0_102 = arith.constant 0 : index
    %159 = vector.load %arg27[%c0_101, %c0_102] : memref<32x56xf32, #tpu.memory_space<vmem>>, vector<32x56xf32>
    %c0_103 = arith.constant 0 : index
    %c0_104 = arith.constant 0 : index
    %160 = vector.load %arg28[%c0_103, %c0_104] : memref<32x1xf32, #tpu.memory_space<vmem>>, vector<32x1xf32>
    %c0_105 = arith.constant 0 : index
    %c0_106 = arith.constant 0 : index
    %161 = vector.load %arg29[%c0_105, %c0_106] : memref<8x96xf32, #tpu.memory_space<vmem>>, vector<8x96xf32>
    %162 = vector.broadcast %157 : vector<56x1xf32> to vector<56x128xf32>
    %163 = arith.mulf %156, %162 : vector<56x128xf32>
    %164 = vector.broadcast %158 : vector<56x1xf32> to vector<56x128xf32>
    %165 = arith.addf %163, %164 : vector<56x128xf32>
    %cst_107 = arith.constant 0.000000e+00 : f32
    %166 = vector.broadcast %cst_107 : f32 to vector<56x128xf32>
    %167 = arith.maximumf %165, %166 : vector<56x128xf32>
    %cst_108 = arith.constant dense<0.000000e+00> : vector<32x128xf32>
    %168 = tpu.matmul %159, %167, %cst_108 {dimension_numbers = #tpu.dot_dimension_numbers<[1], [0], [0], [1], [0, 0, 1, 1], [], []>} : vector<32x56xf32>, vector<56x128xf32>, vector<32x128xf32> -> vector<32x128xf32>
    %169 = vector.broadcast %160 : vector<32x1xf32> to vector<32x128xf32>
    %170 = arith.addf %168, %169 : vector<32x128xf32>
    %cst_109 = arith.constant 0.000000e+00 : f32
    %171 = vector.broadcast %cst_109 : f32 to vector<32x128xf32>
    %172 = arith.maximumf %170, %171 : vector<32x128xf32>
    %173 = tpu.iota {dimensions = array<i32: 1>} : vector<32x128xi32>
    %c0_i32_110 = arith.constant 0 : i32
    %174 = vector.broadcast %c0_i32_110 : i32 to vector<32x128xi32>
    %175 = arith.cmpi eq, %173, %174 : vector<32x128xi32>
    %c1_i32_111 = arith.constant 1 : i32
    %176 = tpu.dynamic_rotate %172 by %c1_i32_111 dim 1 : vector<32x128xf32>, i32 -> vector<32x128xf32>
    %cst_112 = arith.constant 0.000000e+00 : f32
    %177 = vector.broadcast %cst_112 : f32 to vector<32x128xf32>
    %178 = arith.select %175, %177, %176 : vector<32x128xi1>, vector<32x128xf32>
    %179 = tpu.iota {dimensions = array<i32: 1>} : vector<32x128xi32>
    %c127_i32_113 = arith.constant 127 : i32
    %180 = vector.broadcast %c127_i32_113 : i32 to vector<32x128xi32>
    %181 = arith.cmpi eq, %179, %180 : vector<32x128xi32>
    %c127_i32_114 = arith.constant 127 : i32
    %182 = tpu.dynamic_rotate %172 by %c127_i32_114 dim 1 : vector<32x128xf32>, i32 -> vector<32x128xf32>
    %cst_115 = arith.constant 0.000000e+00 : f32
    %183 = vector.broadcast %cst_115 : f32 to vector<32x128xf32>
    %184 = arith.select %181, %183, %182 : vector<32x128xi1>, vector<32x128xf32>
    %185 = tpu.concatenate %178, %172, %184 in 0 : vector<32x128xf32>, vector<32x128xf32>, vector<32x128xf32> -> vector<96x128xf32>
    %cst_116 = arith.constant dense<0.000000e+00> : vector<8x128xf32>
    %186 = tpu.matmul %161, %185, %cst_116 {dimension_numbers = #tpu.dot_dimension_numbers<[1], [0], [0], [1], [0, 0, 1, 1], [], []>} : vector<8x96xf32>, vector<96x128xf32>, vector<8x128xf32> -> vector<8x128xf32>
    %187 = tpu.concatenate %156, %186 in 0 : vector<56x128xf32>, vector<8x128xf32> -> vector<64x128xf32>
    %c0_117 = arith.constant 0 : index
    %c0_118 = arith.constant 0 : index
    %188 = vector.load %arg30[%c0_117, %c0_118] : memref<64x1xf32, #tpu.memory_space<vmem>>, vector<64x1xf32>
    %c0_119 = arith.constant 0 : index
    %c0_120 = arith.constant 0 : index
    %189 = vector.load %arg31[%c0_119, %c0_120] : memref<64x1xf32, #tpu.memory_space<vmem>>, vector<64x1xf32>
    %c0_121 = arith.constant 0 : index
    %c0_122 = arith.constant 0 : index
    %190 = vector.load %arg32[%c0_121, %c0_122] : memref<32x64xf32, #tpu.memory_space<vmem>>, vector<32x64xf32>
    %c0_123 = arith.constant 0 : index
    %c0_124 = arith.constant 0 : index
    %191 = vector.load %arg33[%c0_123, %c0_124] : memref<128x64xf32, #tpu.memory_space<vmem>>, vector<128x64xf32>
    %192 = vector.broadcast %188 : vector<64x1xf32> to vector<64x128xf32>
    %193 = arith.mulf %187, %192 : vector<64x128xf32>
    %194 = vector.broadcast %189 : vector<64x1xf32> to vector<64x128xf32>
    %195 = arith.addf %193, %194 : vector<64x128xf32>
    %cst_125 = arith.constant 0.000000e+00 : f32
    %196 = vector.broadcast %cst_125 : f32 to vector<64x128xf32>
    %197 = arith.maximumf %195, %196 : vector<64x128xf32>
    %cst_126 = arith.constant dense<0.000000e+00> : vector<32x128xf32>
    %198 = tpu.matmul %190, %197, %cst_126 {dimension_numbers = #tpu.dot_dimension_numbers<[1], [0], [0], [1], [0, 0, 1, 1], [], []>} : vector<32x64xf32>, vector<64x128xf32>, vector<32x128xf32> -> vector<32x128xf32>
    %cst_127 = arith.constant dense<0.000000e+00> : vector<32x64xf32>
    %199 = tpu.matmul %198, %191, %cst_127 {dimension_numbers = #tpu.dot_dimension_numbers<[1], [0], [0], [1], [0, 0, 1, 1], [], []>} : vector<32x128xf32>, vector<128x64xf32>, vector<32x64xf32> -> vector<32x64xf32>
    %200 = arith.addf %199, %43 : vector<32x64xf32>
    %c0_128 = arith.constant 0 : index
    %c0_129 = arith.constant 0 : index
    %201 = vector.load %arg34[%c0_128, %c0_129] : memref<32x1xf32, #tpu.memory_space<vmem>>, vector<32x1xf32>
    %c0_130 = arith.constant 0 : index
    %c0_131 = arith.constant 0 : index
    %202 = vector.load %arg35[%c0_130, %c0_131] : memref<32x1xf32, #tpu.memory_space<vmem>>, vector<32x1xf32>
    %c0_132 = arith.constant 0 : index
    %c0_133 = arith.constant 0 : index
    %203 = vector.load %arg36[%c0_132, %c0_133] : memref<32x32xf32, #tpu.memory_space<vmem>>, vector<32x32xf32>
    %c0_134 = arith.constant 0 : index
    %c0_135 = arith.constant 0 : index
    %204 = vector.load %arg37[%c0_134, %c0_135] : memref<32x1xf32, #tpu.memory_space<vmem>>, vector<32x1xf32>
    %c0_136 = arith.constant 0 : index
    %c0_137 = arith.constant 0 : index
    %205 = vector.load %arg38[%c0_136, %c0_137] : memref<8x96xf32, #tpu.memory_space<vmem>>, vector<8x96xf32>
    %206 = vector.broadcast %201 : vector<32x1xf32> to vector<32x64xf32>
    %207 = arith.mulf %200, %206 : vector<32x64xf32>
    %208 = vector.broadcast %202 : vector<32x1xf32> to vector<32x64xf32>
    %209 = arith.addf %207, %208 : vector<32x64xf32>
    %cst_138 = arith.constant 0.000000e+00 : f32
    %210 = vector.broadcast %cst_138 : f32 to vector<32x64xf32>
    %211 = arith.maximumf %209, %210 : vector<32x64xf32>
    %cst_139 = arith.constant dense<0.000000e+00> : vector<32x64xf32>
    %212 = tpu.matmul %203, %211, %cst_139 {dimension_numbers = #tpu.dot_dimension_numbers<[1], [0], [0], [1], [0, 0, 1, 1], [], []>} : vector<32x32xf32>, vector<32x64xf32>, vector<32x64xf32> -> vector<32x64xf32>
    %213 = vector.broadcast %204 : vector<32x1xf32> to vector<32x64xf32>
    %214 = arith.addf %212, %213 : vector<32x64xf32>
    %cst_140 = arith.constant 0.000000e+00 : f32
    %215 = vector.broadcast %cst_140 : f32 to vector<32x64xf32>
    %216 = arith.maximumf %214, %215 : vector<32x64xf32>
    %217 = tpu.iota {dimensions = array<i32: 1>} : vector<32x64xi32>
    %c0_i32_141 = arith.constant 0 : i32
    %218 = vector.broadcast %c0_i32_141 : i32 to vector<32x64xi32>
    %219 = arith.cmpi eq, %217, %218 : vector<32x64xi32>
    %c1_i32_142 = arith.constant 1 : i32
    %220 = tpu.dynamic_rotate %216 by %c1_i32_142 dim 1 : vector<32x64xf32>, i32 -> vector<32x64xf32>
    %cst_143 = arith.constant 0.000000e+00 : f32
    %221 = vector.broadcast %cst_143 : f32 to vector<32x64xf32>
    %222 = arith.select %219, %221, %220 : vector<32x64xi1>, vector<32x64xf32>
    %223 = tpu.iota {dimensions = array<i32: 1>} : vector<32x64xi32>
    %c63_i32_144 = arith.constant 63 : i32
    %224 = vector.broadcast %c63_i32_144 : i32 to vector<32x64xi32>
    %225 = arith.cmpi eq, %223, %224 : vector<32x64xi32>
    %c63_i32_145 = arith.constant 63 : i32
    %226 = tpu.dynamic_rotate %216 by %c63_i32_145 dim 1 : vector<32x64xf32>, i32 -> vector<32x64xf32>
    %cst_146 = arith.constant 0.000000e+00 : f32
    %227 = vector.broadcast %cst_146 : f32 to vector<32x64xf32>
    %228 = arith.select %225, %227, %226 : vector<32x64xi1>, vector<32x64xf32>
    %229 = tpu.concatenate %222, %216, %228 in 0 : vector<32x64xf32>, vector<32x64xf32>, vector<32x64xf32> -> vector<96x64xf32>
    %cst_147 = arith.constant dense<0.000000e+00> : vector<8x64xf32>
    %230 = tpu.matmul %205, %229, %cst_147 {dimension_numbers = #tpu.dot_dimension_numbers<[1], [0], [0], [1], [0, 0, 1, 1], [], []>} : vector<8x96xf32>, vector<96x64xf32>, vector<8x64xf32> -> vector<8x64xf32>
    %231 = tpu.concatenate %200, %230 in 0 : vector<32x64xf32>, vector<8x64xf32> -> vector<40x64xf32>
    %c0_148 = arith.constant 0 : index
    %c0_149 = arith.constant 0 : index
    %232 = vector.load %arg39[%c0_148, %c0_149] : memref<40x1xf32, #tpu.memory_space<vmem>>, vector<40x1xf32>
    %c0_150 = arith.constant 0 : index
    %c0_151 = arith.constant 0 : index
    %233 = vector.load %arg40[%c0_150, %c0_151] : memref<40x1xf32, #tpu.memory_space<vmem>>, vector<40x1xf32>
    %c0_152 = arith.constant 0 : index
    %c0_153 = arith.constant 0 : index
    %234 = vector.load %arg41[%c0_152, %c0_153] : memref<32x40xf32, #tpu.memory_space<vmem>>, vector<32x40xf32>
    %c0_154 = arith.constant 0 : index
    %c0_155 = arith.constant 0 : index
    %235 = vector.load %arg42[%c0_154, %c0_155] : memref<32x1xf32, #tpu.memory_space<vmem>>, vector<32x1xf32>
    %c0_156 = arith.constant 0 : index
    %c0_157 = arith.constant 0 : index
    %236 = vector.load %arg43[%c0_156, %c0_157] : memref<8x96xf32, #tpu.memory_space<vmem>>, vector<8x96xf32>
    %237 = vector.broadcast %232 : vector<40x1xf32> to vector<40x64xf32>
    %238 = arith.mulf %231, %237 : vector<40x64xf32>
    %239 = vector.broadcast %233 : vector<40x1xf32> to vector<40x64xf32>
    %240 = arith.addf %238, %239 : vector<40x64xf32>
    %cst_158 = arith.constant 0.000000e+00 : f32
    %241 = vector.broadcast %cst_158 : f32 to vector<40x64xf32>
    %242 = arith.maximumf %240, %241 : vector<40x64xf32>
    %cst_159 = arith.constant dense<0.000000e+00> : vector<32x64xf32>
    %243 = tpu.matmul %234, %242, %cst_159 {dimension_numbers = #tpu.dot_dimension_numbers<[1], [0], [0], [1], [0, 0, 1, 1], [], []>} : vector<32x40xf32>, vector<40x64xf32>, vector<32x64xf32> -> vector<32x64xf32>
    %244 = vector.broadcast %235 : vector<32x1xf32> to vector<32x64xf32>
    %245 = arith.addf %243, %244 : vector<32x64xf32>
    %cst_160 = arith.constant 0.000000e+00 : f32
    %246 = vector.broadcast %cst_160 : f32 to vector<32x64xf32>
    %247 = arith.maximumf %245, %246 : vector<32x64xf32>
    %248 = tpu.iota {dimensions = array<i32: 1>} : vector<32x64xi32>
    %c0_i32_161 = arith.constant 0 : i32
    %249 = vector.broadcast %c0_i32_161 : i32 to vector<32x64xi32>
    %250 = arith.cmpi eq, %248, %249 : vector<32x64xi32>
    %c1_i32_162 = arith.constant 1 : i32
    %251 = tpu.dynamic_rotate %247 by %c1_i32_162 dim 1 : vector<32x64xf32>, i32 -> vector<32x64xf32>
    %cst_163 = arith.constant 0.000000e+00 : f32
    %252 = vector.broadcast %cst_163 : f32 to vector<32x64xf32>
    %253 = arith.select %250, %252, %251 : vector<32x64xi1>, vector<32x64xf32>
    %254 = tpu.iota {dimensions = array<i32: 1>} : vector<32x64xi32>
    %c63_i32_164 = arith.constant 63 : i32
    %255 = vector.broadcast %c63_i32_164 : i32 to vector<32x64xi32>
    %256 = arith.cmpi eq, %254, %255 : vector<32x64xi32>
    %c63_i32_165 = arith.constant 63 : i32
    %257 = tpu.dynamic_rotate %247 by %c63_i32_165 dim 1 : vector<32x64xf32>, i32 -> vector<32x64xf32>
    %cst_166 = arith.constant 0.000000e+00 : f32
    %258 = vector.broadcast %cst_166 : f32 to vector<32x64xf32>
    %259 = arith.select %256, %258, %257 : vector<32x64xi1>, vector<32x64xf32>
    %260 = tpu.concatenate %253, %247, %259 in 0 : vector<32x64xf32>, vector<32x64xf32>, vector<32x64xf32> -> vector<96x64xf32>
    %cst_167 = arith.constant dense<0.000000e+00> : vector<8x64xf32>
    %261 = tpu.matmul %236, %260, %cst_167 {dimension_numbers = #tpu.dot_dimension_numbers<[1], [0], [0], [1], [0, 0, 1, 1], [], []>} : vector<8x96xf32>, vector<96x64xf32>, vector<8x64xf32> -> vector<8x64xf32>
    %262 = tpu.concatenate %231, %261 in 0 : vector<40x64xf32>, vector<8x64xf32> -> vector<48x64xf32>
    %c0_168 = arith.constant 0 : index
    %c0_169 = arith.constant 0 : index
    %263 = vector.load %arg44[%c0_168, %c0_169] : memref<48x1xf32, #tpu.memory_space<vmem>>, vector<48x1xf32>
    %c0_170 = arith.constant 0 : index
    %c0_171 = arith.constant 0 : index
    %264 = vector.load %arg45[%c0_170, %c0_171] : memref<48x1xf32, #tpu.memory_space<vmem>>, vector<48x1xf32>
    %c0_172 = arith.constant 0 : index
    %c0_173 = arith.constant 0 : index
    %265 = vector.load %arg46[%c0_172, %c0_173] : memref<32x48xf32, #tpu.memory_space<vmem>>, vector<32x48xf32>
    %c0_174 = arith.constant 0 : index
    %c0_175 = arith.constant 0 : index
    %266 = vector.load %arg47[%c0_174, %c0_175] : memref<32x1xf32, #tpu.memory_space<vmem>>, vector<32x1xf32>
    %c0_176 = arith.constant 0 : index
    %c0_177 = arith.constant 0 : index
    %267 = vector.load %arg48[%c0_176, %c0_177] : memref<8x96xf32, #tpu.memory_space<vmem>>, vector<8x96xf32>
    %268 = vector.broadcast %263 : vector<48x1xf32> to vector<48x64xf32>
    %269 = arith.mulf %262, %268 : vector<48x64xf32>
    %270 = vector.broadcast %264 : vector<48x1xf32> to vector<48x64xf32>
    %271 = arith.addf %269, %270 : vector<48x64xf32>
    %cst_178 = arith.constant 0.000000e+00 : f32
    %272 = vector.broadcast %cst_178 : f32 to vector<48x64xf32>
    %273 = arith.maximumf %271, %272 : vector<48x64xf32>
    %cst_179 = arith.constant dense<0.000000e+00> : vector<32x64xf32>
    %274 = tpu.matmul %265, %273, %cst_179 {dimension_numbers = #tpu.dot_dimension_numbers<[1], [0], [0], [1], [0, 0, 1, 1], [], []>} : vector<32x48xf32>, vector<48x64xf32>, vector<32x64xf32> -> vector<32x64xf32>
    %275 = vector.broadcast %266 : vector<32x1xf32> to vector<32x64xf32>
    %276 = arith.addf %274, %275 : vector<32x64xf32>
    %cst_180 = arith.constant 0.000000e+00 : f32
    %277 = vector.broadcast %cst_180 : f32 to vector<32x64xf32>
    %278 = arith.maximumf %276, %277 : vector<32x64xf32>
    %279 = tpu.iota {dimensions = array<i32: 1>} : vector<32x64xi32>
    %c0_i32_181 = arith.constant 0 : i32
    %280 = vector.broadcast %c0_i32_181 : i32 to vector<32x64xi32>
    %281 = arith.cmpi eq, %279, %280 : vector<32x64xi32>
    %c1_i32_182 = arith.constant 1 : i32
    %282 = tpu.dynamic_rotate %278 by %c1_i32_182 dim 1 : vector<32x64xf32>, i32 -> vector<32x64xf32>
    %cst_183 = arith.constant 0.000000e+00 : f32
    %283 = vector.broadcast %cst_183 : f32 to vector<32x64xf32>
    %284 = arith.select %281, %283, %282 : vector<32x64xi1>, vector<32x64xf32>
    %285 = tpu.iota {dimensions = array<i32: 1>} : vector<32x64xi32>
    %c63_i32_184 = arith.constant 63 : i32
    %286 = vector.broadcast %c63_i32_184 : i32 to vector<32x64xi32>
    %287 = arith.cmpi eq, %285, %286 : vector<32x64xi32>
    %c63_i32_185 = arith.constant 63 : i32
    %288 = tpu.dynamic_rotate %278 by %c63_i32_185 dim 1 : vector<32x64xf32>, i32 -> vector<32x64xf32>
    %cst_186 = arith.constant 0.000000e+00 : f32
    %289 = vector.broadcast %cst_186 : f32 to vector<32x64xf32>
    %290 = arith.select %287, %289, %288 : vector<32x64xi1>, vector<32x64xf32>
    %291 = tpu.concatenate %284, %278, %290 in 0 : vector<32x64xf32>, vector<32x64xf32>, vector<32x64xf32> -> vector<96x64xf32>
    %cst_187 = arith.constant dense<0.000000e+00> : vector<8x64xf32>
    %292 = tpu.matmul %267, %291, %cst_187 {dimension_numbers = #tpu.dot_dimension_numbers<[1], [0], [0], [1], [0, 0, 1, 1], [], []>} : vector<8x96xf32>, vector<96x64xf32>, vector<8x64xf32> -> vector<8x64xf32>
    %293 = tpu.concatenate %262, %292 in 0 : vector<48x64xf32>, vector<8x64xf32> -> vector<56x64xf32>
    %c0_188 = arith.constant 0 : index
    %c0_189 = arith.constant 0 : index
    %294 = vector.load %arg49[%c0_188, %c0_189] : memref<56x1xf32, #tpu.memory_space<vmem>>, vector<56x1xf32>
    %c0_190 = arith.constant 0 : index
    %c0_191 = arith.constant 0 : index
    %295 = vector.load %arg50[%c0_190, %c0_191] : memref<56x1xf32, #tpu.memory_space<vmem>>, vector<56x1xf32>
    %c0_192 = arith.constant 0 : index
    %c0_193 = arith.constant 0 : index
    %296 = vector.load %arg51[%c0_192, %c0_193] : memref<32x56xf32, #tpu.memory_space<vmem>>, vector<32x56xf32>
    %c0_194 = arith.constant 0 : index
    %c0_195 = arith.constant 0 : index
    %297 = vector.load %arg52[%c0_194, %c0_195] : memref<32x1xf32, #tpu.memory_space<vmem>>, vector<32x1xf32>
    %c0_196 = arith.constant 0 : index
    %c0_197 = arith.constant 0 : index
    %298 = vector.load %arg53[%c0_196, %c0_197] : memref<8x96xf32, #tpu.memory_space<vmem>>, vector<8x96xf32>
    %299 = vector.broadcast %294 : vector<56x1xf32> to vector<56x64xf32>
    %300 = arith.mulf %293, %299 : vector<56x64xf32>
    %301 = vector.broadcast %295 : vector<56x1xf32> to vector<56x64xf32>
    %302 = arith.addf %300, %301 : vector<56x64xf32>
    %cst_198 = arith.constant 0.000000e+00 : f32
    %303 = vector.broadcast %cst_198 : f32 to vector<56x64xf32>
    %304 = arith.maximumf %302, %303 : vector<56x64xf32>
    %cst_199 = arith.constant dense<0.000000e+00> : vector<32x64xf32>
    %305 = tpu.matmul %296, %304, %cst_199 {dimension_numbers = #tpu.dot_dimension_numbers<[1], [0], [0], [1], [0, 0, 1, 1], [], []>} : vector<32x56xf32>, vector<56x64xf32>, vector<32x64xf32> -> vector<32x64xf32>
    %306 = vector.broadcast %297 : vector<32x1xf32> to vector<32x64xf32>
    %307 = arith.addf %305, %306 : vector<32x64xf32>
    %cst_200 = arith.constant 0.000000e+00 : f32
    %308 = vector.broadcast %cst_200 : f32 to vector<32x64xf32>
    %309 = arith.maximumf %307, %308 : vector<32x64xf32>
    %310 = tpu.iota {dimensions = array<i32: 1>} : vector<32x64xi32>
    %c0_i32_201 = arith.constant 0 : i32
    %311 = vector.broadcast %c0_i32_201 : i32 to vector<32x64xi32>
    %312 = arith.cmpi eq, %310, %311 : vector<32x64xi32>
    %c1_i32_202 = arith.constant 1 : i32
    %313 = tpu.dynamic_rotate %309 by %c1_i32_202 dim 1 : vector<32x64xf32>, i32 -> vector<32x64xf32>
    %cst_203 = arith.constant 0.000000e+00 : f32
    %314 = vector.broadcast %cst_203 : f32 to vector<32x64xf32>
    %315 = arith.select %312, %314, %313 : vector<32x64xi1>, vector<32x64xf32>
    %316 = tpu.iota {dimensions = array<i32: 1>} : vector<32x64xi32>
    %c63_i32_204 = arith.constant 63 : i32
    %317 = vector.broadcast %c63_i32_204 : i32 to vector<32x64xi32>
    %318 = arith.cmpi eq, %316, %317 : vector<32x64xi32>
    %c63_i32_205 = arith.constant 63 : i32
    %319 = tpu.dynamic_rotate %309 by %c63_i32_205 dim 1 : vector<32x64xf32>, i32 -> vector<32x64xf32>
    %cst_206 = arith.constant 0.000000e+00 : f32
    %320 = vector.broadcast %cst_206 : f32 to vector<32x64xf32>
    %321 = arith.select %318, %320, %319 : vector<32x64xi1>, vector<32x64xf32>
    %322 = tpu.concatenate %315, %309, %321 in 0 : vector<32x64xf32>, vector<32x64xf32>, vector<32x64xf32> -> vector<96x64xf32>
    %cst_207 = arith.constant dense<0.000000e+00> : vector<8x64xf32>
    %323 = tpu.matmul %298, %322, %cst_207 {dimension_numbers = #tpu.dot_dimension_numbers<[1], [0], [0], [1], [0, 0, 1, 1], [], []>} : vector<8x96xf32>, vector<96x64xf32>, vector<8x64xf32> -> vector<8x64xf32>
    %324 = tpu.concatenate %293, %323 in 0 : vector<56x64xf32>, vector<8x64xf32> -> vector<64x64xf32>
    %c0_208 = arith.constant 0 : index
    %c0_209 = arith.constant 0 : index
    %325 = vector.load %arg54[%c0_208, %c0_209] : memref<64x1xf32, #tpu.memory_space<vmem>>, vector<64x1xf32>
    %c0_210 = arith.constant 0 : index
    %c0_211 = arith.constant 0 : index
    %326 = vector.load %arg55[%c0_210, %c0_211] : memref<64x1xf32, #tpu.memory_space<vmem>>, vector<64x1xf32>
    %c0_212 = arith.constant 0 : index
    %c0_213 = arith.constant 0 : index
    %327 = vector.load %arg56[%c0_212, %c0_213] : memref<24x64xf32, #tpu.memory_space<vmem>>, vector<24x64xf32>
    %c0_214 = arith.constant 0 : index
    %c0_215 = arith.constant 0 : index
    %328 = vector.load %arg57[%c0_214, %c0_215] : memref<64x32xf32, #tpu.memory_space<vmem>>, vector<64x32xf32>
    %329 = vector.broadcast %325 : vector<64x1xf32> to vector<64x64xf32>
    %330 = arith.mulf %324, %329 : vector<64x64xf32>
    %331 = vector.broadcast %326 : vector<64x1xf32> to vector<64x64xf32>
    %332 = arith.addf %330, %331 : vector<64x64xf32>
    %cst_216 = arith.constant 0.000000e+00 : f32
    %333 = vector.broadcast %cst_216 : f32 to vector<64x64xf32>
    %334 = arith.maximumf %332, %333 : vector<64x64xf32>
    %cst_217 = arith.constant dense<0.000000e+00> : vector<24x64xf32>
    %335 = tpu.matmul %327, %334, %cst_217 {dimension_numbers = #tpu.dot_dimension_numbers<[1], [0], [0], [1], [0, 0, 1, 1], [], []>} : vector<24x64xf32>, vector<64x64xf32>, vector<24x64xf32> -> vector<24x64xf32>
    %cst_218 = arith.constant dense<0.000000e+00> : vector<24x32xf32>
    %336 = tpu.matmul %335, %328, %cst_218 {dimension_numbers = #tpu.dot_dimension_numbers<[1], [0], [0], [1], [0, 0, 1, 1], [], []>} : vector<24x64xf32>, vector<64x32xf32>, vector<24x32xf32> -> vector<24x32xf32>
    %337 = arith.addf %336, %63 : vector<24x32xf32>
    %c0_219 = arith.constant 0 : index
    %c0_220 = arith.constant 0 : index
    %338 = vector.load %arg58[%c0_219, %c0_220] : memref<24x1xf32, #tpu.memory_space<vmem>>, vector<24x1xf32>
    %c0_221 = arith.constant 0 : index
    %c0_222 = arith.constant 0 : index
    %339 = vector.load %arg59[%c0_221, %c0_222] : memref<24x1xf32, #tpu.memory_space<vmem>>, vector<24x1xf32>
    %340 = vector.broadcast %338 : vector<24x1xf32> to vector<24x32xf32>
    %341 = arith.mulf %337, %340 : vector<24x32xf32>
    %342 = vector.broadcast %339 : vector<24x1xf32> to vector<24x32xf32>
    %343 = arith.addf %341, %342 : vector<24x32xf32>
    %cst_223 = arith.constant 0.000000e+00 : f32
    %344 = vector.broadcast %cst_223 : f32 to vector<24x32xf32>
    %345 = arith.maximumf %343, %344 : vector<24x32xf32>
    %c0_224 = arith.constant 0 : index
    %c0_225 = arith.constant 0 : index
    %346 = vector.load %arg60[%c0_224, %c0_225] : memref<16x24xf32, #tpu.memory_space<vmem>>, vector<16x24xf32>
    %c0_226 = arith.constant 0 : index
    %c0_227 = arith.constant 0 : index
    %347 = vector.load %arg61[%c0_226, %c0_227] : memref<16x1xf32, #tpu.memory_space<vmem>>, vector<16x1xf32>
    %cst_228 = arith.constant dense<0.000000e+00> : vector<16x32xf32>
    %348 = tpu.matmul %346, %345, %cst_228 {dimension_numbers = #tpu.dot_dimension_numbers<[1], [0], [0], [1], [0, 0, 1, 1], [], []>} : vector<16x24xf32>, vector<24x32xf32>, vector<16x32xf32> -> vector<16x32xf32>
    %349 = vector.broadcast %347 : vector<16x1xf32> to vector<16x32xf32>
    %350 = arith.addf %348, %349 : vector<16x32xf32>
    %cst_229 = arith.constant 0.000000e+00 : f32
    %351 = vector.broadcast %cst_229 : f32 to vector<16x32xf32>
    %352 = arith.maximumf %350, %351 : vector<16x32xf32>
    %c0_230 = arith.constant 0 : index
    %c0_231 = arith.constant 0 : index
    %353 = vector.load %arg62[%c0_230, %c0_231] : memref<64x48xf32, #tpu.memory_space<vmem>>, vector<64x48xf32>
    %c0_232 = arith.constant 0 : index
    %c0_233 = arith.constant 0 : index
    %354 = vector.load %arg63[%c0_232, %c0_233] : memref<64x1xf32, #tpu.memory_space<vmem>>, vector<64x1xf32>
    %355 = tpu.iota {dimensions = array<i32: 1>} : vector<16x32xi32>
    %c0_i32_234 = arith.constant 0 : i32
    %356 = vector.broadcast %c0_i32_234 : i32 to vector<16x32xi32>
    %357 = arith.cmpi eq, %355, %356 : vector<16x32xi32>
    %c1_i32_235 = arith.constant 1 : i32
    %358 = tpu.dynamic_rotate %352 by %c1_i32_235 dim 1 : vector<16x32xf32>, i32 -> vector<16x32xf32>
    %cst_236 = arith.constant 0.000000e+00 : f32
    %359 = vector.broadcast %cst_236 : f32 to vector<16x32xf32>
    %360 = arith.select %357, %359, %358 : vector<16x32xi1>, vector<16x32xf32>
    %361 = tpu.iota {dimensions = array<i32: 1>} : vector<16x32xi32>
    %c31_i32_237 = arith.constant 31 : i32
    %362 = vector.broadcast %c31_i32_237 : i32 to vector<16x32xi32>
    %363 = arith.cmpi eq, %361, %362 : vector<16x32xi32>
    %c31_i32_238 = arith.constant 31 : i32
    %364 = tpu.dynamic_rotate %352 by %c31_i32_238 dim 1 : vector<16x32xf32>, i32 -> vector<16x32xf32>
    %cst_239 = arith.constant 0.000000e+00 : f32
    %365 = vector.broadcast %cst_239 : f32 to vector<16x32xf32>
    %366 = arith.select %363, %365, %364 : vector<16x32xi1>, vector<16x32xf32>
    %367 = tpu.concatenate %352, %360, %366 in 0 : vector<16x32xf32>, vector<16x32xf32>, vector<16x32xf32> -> vector<48x32xf32>
    %cst_240 = arith.constant dense<0.000000e+00> : vector<64x32xf32>
    %368 = tpu.matmul %353, %367, %cst_240 {dimension_numbers = #tpu.dot_dimension_numbers<[1], [0], [0], [1], [0, 0, 1, 1], [], []>} : vector<64x48xf32>, vector<48x32xf32>, vector<64x32xf32> -> vector<64x32xf32>
    %369 = vector.broadcast %354 : vector<64x1xf32> to vector<64x32xf32>
    %370 = arith.addf %368, %369 : vector<64x32xf32>
    %c0_241 = arith.constant 0 : index
    %c0_242 = arith.constant 0 : index
    %c0_243 = arith.constant 0 : index
    %371 = vector.load %arg64[%c0_241, %c0_242, %c0_243] : memref<1x64x32xf32, #tpu.memory_space<vmem>>, vector<1x64x32xf32>
    %372 = vector.shape_cast %371 : vector<1x64x32xf32> to vector<64x32xf32>
    %373 = vector.shape_cast %370 : vector<64x32xf32> to vector<1x64x32xf32>
    tpu.vector_store %arg64[%c0_241, %c0_242, %c0_243], %373 {strides = array<i32>} : memref<1x64x32xf32, #tpu.memory_space<vmem>>, vector<1x64x32xf32>,
    return
  }
  func.func @transform_0(%arg0: i32) -> (i32, i32, i32) {
    %c0_i32 = arith.constant 0 : i32
    %c0_i32_0 = arith.constant 0 : i32
    %c0_i32_1 = arith.constant 0 : i32
    return %arg0, %c0_i32, %c0_i32_0 : i32, i32, i32
  }
  func.func @transform_1(%arg0: i32) -> (i32, i32, i32) {
    %c0_i32 = arith.constant 0 : i32
    %c0_i32_0 = arith.constant 0 : i32
    %c0_i32_1 = arith.constant 0 : i32
    return %arg0, %c0_i32, %c0_i32_0 : i32, i32, i32
  }
  func.func @transform_2(%arg0: i32) -> (i32, i32, i32) {
    %c0_i32 = arith.constant 0 : i32
    %c0_i32_0 = arith.constant 0 : i32
    %c0_i32_1 = arith.constant 0 : i32
    return %arg0, %c0_i32, %c0_i32_0 : i32, i32, i32
  }
  func.func @transform_3(%arg0: i32) -> (i32, i32) {
    %c0_i32 = arith.constant 0 : i32
    %c0_i32_0 = arith.constant 0 : i32
    %c0_i32_1 = arith.constant 0 : i32
    return %c0_i32, %c0_i32_0 : i32, i32
  }
  func.func @transform_4(%arg0: i32) -> (i32, i32) {
    %c0_i32 = arith.constant 0 : i32
    %c0_i32_0 = arith.constant 0 : i32
    %c0_i32_1 = arith.constant 0 : i32
    return %c0_i32, %c0_i32_0 : i32, i32
  }
  func.func @transform_5(%arg0: i32) -> (i32, i32) {
    %c0_i32 = arith.constant 0 : i32
    %c0_i32_0 = arith.constant 0 : i32
    %c0_i32_1 = arith.constant 0 : i32
    return %c0_i32, %c0_i32_0 : i32, i32
  }
  func.func @transform_6(%arg0: i32) -> (i32, i32) {
    %c0_i32 = arith.constant 0 : i32
    %c0_i32_0 = arith.constant 0 : i32
    %c0_i32_1 = arith.constant 0 : i32
    return %c0_i32, %c0_i32_0 : i32, i32
  }
  func.func @transform_7(%arg0: i32) -> (i32, i32) {
    %c0_i32 = arith.constant 0 : i32
    %c0_i32_0 = arith.constant 0 : i32
    %c0_i32_1 = arith.constant 0 : i32
    return %c0_i32, %c0_i32_0 : i32, i32
  }
  func.func @transform_8(%arg0: i32) -> (i32, i32) {
    %c0_i32 = arith.constant 0 : i32
    %c0_i32_0 = arith.constant 0 : i32
    %c0_i32_1 = arith.constant 0 : i32
    return %c0_i32, %c0_i32_0 : i32, i32
  }
  func.func @transform_9(%arg0: i32) -> (i32, i32) {
    %c0_i32 = arith.constant 0 : i32
    %c0_i32_0 = arith.constant 0 : i32
    %c0_i32_1 = arith.constant 0 : i32
    return %c0_i32, %c0_i32_0 : i32, i32
  }
  func.func @transform_10(%arg0: i32) -> (i32, i32) {
    %c0_i32 = arith.constant 0 : i32
    %c0_i32_0 = arith.constant 0 : i32
    %c0_i32_1 = arith.constant 0 : i32
    return %c0_i32, %c0_i32_0 : i32, i32
  }
  func.func @transform_11(%arg0: i32) -> (i32, i32) {
    %c0_i32 = arith.constant 0 : i32
    %c0_i32_0 = arith.constant 0 : i32
    %c0_i32_1 = arith.constant 0 : i32
    return %c0_i32, %c0_i32_0 : i32, i32
  }
  func.func @transform_12(%arg0: i32) -> (i32, i32) {
    %c0_i32 = arith.constant 0 : i32
    %c0_i32_0 = arith.constant 0 : i32
    %c0_i32_1 = arith.constant 0 : i32
    return %c0_i32, %c0_i32_0 : i32, i32
  }
  func.func @transform_13(%arg0: i32) -> (i32, i32) {
    %c0_i32 = arith.constant 0 : i32
    %c0_i32_0 = arith.constant 0 : i32
    %c0_i32_1 = arith.constant 0 : i32
    return %c0_i32, %c0_i32_0 : i32, i32
  }
  func.func @transform_14(%arg0: i32) -> (i32, i32) {
    %c0_i32 = arith.constant 0 : i32
    %c0_i32_0 = arith.constant 0 : i32
    %c0_i32_1 = arith.constant 0 : i32
    return %c0_i32, %c0_i32_0 : i32, i32
  }
  func.func @transform_15(%arg0: i32) -> (i32, i32) {
    %c0_i32 = arith.constant 0 : i32
    %c0_i32_0 = arith.constant 0 : i32
    %c0_i32_1 = arith.constant 0 : i32
    return %c0_i32, %c0_i32_0 : i32, i32
  }
  func.func @transform_16(%arg0: i32) -> (i32, i32) {
    %c0_i32 = arith.constant 0 : i32
    %c0_i32_0 = arith.constant 0 : i32
    %c0_i32_1 = arith.constant 0 : i32
    return %c0_i32, %c0_i32_0 : i32, i32
  }
  func.func @transform_17(%arg0: i32) -> (i32, i32) {
    %c0_i32 = arith.constant 0 : i32
    %c0_i32_0 = arith.constant 0 : i32
    %c0_i32_1 = arith.constant 0 : i32
    return %c0_i32, %c0_i32_0 : i32, i32
  }
  func.func @transform_18(%arg0: i32) -> (i32, i32) {
    %c0_i32 = arith.constant 0 : i32
    %c0_i32_0 = arith.constant 0 : i32
    %c0_i32_1 = arith.constant 0 : i32
    return %c0_i32, %c0_i32_0 : i32, i32
  }
  func.func @transform_19(%arg0: i32) -> (i32, i32) {
    %c0_i32 = arith.constant 0 : i32
    %c0_i32_0 = arith.constant 0 : i32
    %c0_i32_1 = arith.constant 0 : i32
    return %c0_i32, %c0_i32_0 : i32, i32
  }
  func.func @transform_20(%arg0: i32) -> (i32, i32) {
    %c0_i32 = arith.constant 0 : i32
    %c0_i32_0 = arith.constant 0 : i32
    %c0_i32_1 = arith.constant 0 : i32
    return %c0_i32, %c0_i32_0 : i32, i32
  }
  func.func @transform_21(%arg0: i32) -> (i32, i32) {
    %c0_i32 = arith.constant 0 : i32
    %c0_i32_0 = arith.constant 0 : i32
    %c0_i32_1 = arith.constant 0 : i32
    return %c0_i32, %c0_i32_0 : i32, i32
  }
  func.func @transform_22(%arg0: i32) -> (i32, i32) {
    %c0_i32 = arith.constant 0 : i32
    %c0_i32_0 = arith.constant 0 : i32
    %c0_i32_1 = arith.constant 0 : i32
    return %c0_i32, %c0_i32_0 : i32, i32
  }
  func.func @transform_23(%arg0: i32) -> (i32, i32) {
    %c0_i32 = arith.constant 0 : i32
    %c0_i32_0 = arith.constant 0 : i32
    %c0_i32_1 = arith.constant 0 : i32
    return %c0_i32, %c0_i32_0 : i32, i32
  }
  func.func @transform_24(%arg0: i32) -> (i32, i32) {
    %c0_i32 = arith.constant 0 : i32
    %c0_i32_0 = arith.constant 0 : i32
    %c0_i32_1 = arith.constant 0 : i32
    return %c0_i32, %c0_i32_0 : i32, i32
  }
  func.func @transform_25(%arg0: i32) -> (i32, i32) {
    %c0_i32 = arith.constant 0 : i32
    %c0_i32_0 = arith.constant 0 : i32
    %c0_i32_1 = arith.constant 0 : i32
    return %c0_i32, %c0_i32_0 : i32, i32
  }
  func.func @transform_26(%arg0: i32) -> (i32, i32) {
    %c0_i32 = arith.constant 0 : i32
    %c0_i32_0 = arith.constant 0 : i32
    %c0_i32_1 = arith.constant 0 : i32
    return %c0_i32, %c0_i32_0 : i32, i32
  }
  func.func @transform_27(%arg0: i32) -> (i32, i32) {
    %c0_i32 = arith.constant 0 : i32
    %c0_i32_0 = arith.constant 0 : i32
    %c0_i32_1 = arith.constant 0 : i32
    return %c0_i32, %c0_i32_0 : i32, i32
  }
  func.func @transform_28(%arg0: i32) -> (i32, i32) {
    %c0_i32 = arith.constant 0 : i32
    %c0_i32_0 = arith.constant 0 : i32
    %c0_i32_1 = arith.constant 0 : i32
    return %c0_i32, %c0_i32_0 : i32, i32
  }
  func.func @transform_29(%arg0: i32) -> (i32, i32) {
    %c0_i32 = arith.constant 0 : i32
    %c0_i32_0 = arith.constant 0 : i32
    %c0_i32_1 = arith.constant 0 : i32
    return %c0_i32, %c0_i32_0 : i32, i32
  }
  func.func @transform_30(%arg0: i32) -> (i32, i32) {
    %c0_i32 = arith.constant 0 : i32
    %c0_i32_0 = arith.constant 0 : i32
    %c0_i32_1 = arith.constant 0 : i32
    return %c0_i32, %c0_i32_0 : i32, i32
  }
  func.func @transform_31(%arg0: i32) -> (i32, i32) {
    %c0_i32 = arith.constant 0 : i32
    %c0_i32_0 = arith.constant 0 : i32
    %c0_i32_1 = arith.constant 0 : i32
    return %c0_i32, %c0_i32_0 : i32, i32
  }
  func.func @transform_32(%arg0: i32) -> (i32, i32) {
    %c0_i32 = arith.constant 0 : i32
    %c0_i32_0 = arith.constant 0 : i32
    %c0_i32_1 = arith.constant 0 : i32
    return %c0_i32, %c0_i32_0 : i32, i32
  }
  func.func @transform_33(%arg0: i32) -> (i32, i32) {
    %c0_i32 = arith.constant 0 : i32
    %c0_i32_0 = arith.constant 0 : i32
    %c0_i32_1 = arith.constant 0 : i32
    return %c0_i32, %c0_i32_0 : i32, i32
  }
  func.func @transform_34(%arg0: i32) -> (i32, i32) {
    %c0_i32 = arith.constant 0 : i32
    %c0_i32_0 = arith.constant 0 : i32
    %c0_i32_1 = arith.constant 0 : i32
    return %c0_i32, %c0_i32_0 : i32, i32
  }
  func.func @transform_35(%arg0: i32) -> (i32, i32) {
    %c0_i32 = arith.constant 0 : i32
    %c0_i32_0 = arith.constant 0 : i32
    %c0_i32_1 = arith.constant 0 : i32
    return %c0_i32, %c0_i32_0 : i32, i32
  }
  func.func @transform_36(%arg0: i32) -> (i32, i32) {
    %c0_i32 = arith.constant 0 : i32
    %c0_i32_0 = arith.constant 0 : i32
    %c0_i32_1 = arith.constant 0 : i32
    return %c0_i32, %c0_i32_0 : i32, i32
  }
  func.func @transform_37(%arg0: i32) -> (i32, i32) {
    %c0_i32 = arith.constant 0 : i32
    %c0_i32_0 = arith.constant 0 : i32
    %c0_i32_1 = arith.constant 0 : i32
    return %c0_i32, %c0_i32_0 : i32, i32
  }
  func.func @transform_38(%arg0: i32) -> (i32, i32) {
    %c0_i32 = arith.constant 0 : i32
    %c0_i32_0 = arith.constant 0 : i32
    %c0_i32_1 = arith.constant 0 : i32
    return %c0_i32, %c0_i32_0 : i32, i32
  }
  func.func @transform_39(%arg0: i32) -> (i32, i32) {
    %c0_i32 = arith.constant 0 : i32
    %c0_i32_0 = arith.constant 0 : i32
    %c0_i32_1 = arith.constant 0 : i32
    return %c0_i32, %c0_i32_0 : i32, i32
  }
  func.func @transform_40(%arg0: i32) -> (i32, i32) {
    %c0_i32 = arith.constant 0 : i32
    %c0_i32_0 = arith.constant 0 : i32
    %c0_i32_1 = arith.constant 0 : i32
    return %c0_i32, %c0_i32_0 : i32, i32
  }
  func.func @transform_41(%arg0: i32) -> (i32, i32) {
    %c0_i32 = arith.constant 0 : i32
    %c0_i32_0 = arith.constant 0 : i32
    %c0_i32_1 = arith.constant 0 : i32
    return %c0_i32, %c0_i32_0 : i32, i32
  }
  func.func @transform_42(%arg0: i32) -> (i32, i32) {
    %c0_i32 = arith.constant 0 : i32
    %c0_i32_0 = arith.constant 0 : i32
    %c0_i32_1 = arith.constant 0 : i32
    return %c0_i32, %c0_i32_0 : i32, i32
  }
  func.func @transform_43(%arg0: i32) -> (i32, i32) {
    %c0_i32 = arith.constant 0 : i32
    %c0_i32_0 = arith.constant 0 : i32
    %c0_i32_1 = arith.constant 0 : i32
    return %c0_i32, %c0_i32_0 : i32, i32
  }
  func.func @transform_44(%arg0: i32) -> (i32, i32) {
    %c0_i32 = arith.constant 0 : i32
    %c0_i32_0 = arith.constant 0 : i32
    %c0_i32_1 = arith.constant 0 : i32
    return %c0_i32, %c0_i32_0 : i32, i32
  }
  func.func @transform_45(%arg0: i32) -> (i32, i32) {
    %c0_i32 = arith.constant 0 : i32
    %c0_i32_0 = arith.constant 0 : i32
    %c0_i32_1 = arith.constant 0 : i32
    return %c0_i32, %c0_i32_0 : i32, i32
  }
  func.func @transform_46(%arg0: i32) -> (i32, i32) {
    %c0_i32 = arith.constant 0 : i32
    %c0_i32_0 = arith.constant 0 : i32
    %c0_i32_1 = arith.constant 0 : i32
    return %c0_i32, %c0_i32_0 : i32, i32
  }
  func.func @transform_47(%arg0: i32) -> (i32, i32) {
    %c0_i32 = arith.constant 0 : i32
    %c0_i32_0 = arith.constant 0 : i32
    %c0_i32_1 = arith.constant 0 : i32
    return %c0_i32, %c0_i32_0 : i32, i32
  }
  func.func @transform_48(%arg0: i32) -> (i32, i32) {
    %c0_i32 = arith.constant 0 : i32
    %c0_i32_0 = arith.constant 0 : i32
    %c0_i32_1 = arith.constant 0 : i32
    return %c0_i32, %c0_i32_0 : i32, i32
  }
  func.func @transform_49(%arg0: i32) -> (i32, i32) {
    %c0_i32 = arith.constant 0 : i32
    %c0_i32_0 = arith.constant 0 : i32
    %c0_i32_1 = arith.constant 0 : i32
    return %c0_i32, %c0_i32_0 : i32, i32
  }
  func.func @transform_50(%arg0: i32) -> (i32, i32) {
    %c0_i32 = arith.constant 0 : i32
    %c0_i32_0 = arith.constant 0 : i32
    %c0_i32_1 = arith.constant 0 : i32
    return %c0_i32, %c0_i32_0 : i32, i32
  }
  func.func @transform_51(%arg0: i32) -> (i32, i32) {
    %c0_i32 = arith.constant 0 : i32
    %c0_i32_0 = arith.constant 0 : i32
    %c0_i32_1 = arith.constant 0 : i32
    return %c0_i32, %c0_i32_0 : i32, i32
  }
  func.func @transform_52(%arg0: i32) -> (i32, i32) {
    %c0_i32 = arith.constant 0 : i32
    %c0_i32_0 = arith.constant 0 : i32
    %c0_i32_1 = arith.constant 0 : i32
    return %c0_i32, %c0_i32_0 : i32, i32
  }
  func.func @transform_53(%arg0: i32) -> (i32, i32) {
    %c0_i32 = arith.constant 0 : i32
    %c0_i32_0 = arith.constant 0 : i32
    %c0_i32_1 = arith.constant 0 : i32
    return %c0_i32, %c0_i32_0 : i32, i32
  }
  func.func @transform_54(%arg0: i32) -> (i32, i32) {
    %c0_i32 = arith.constant 0 : i32
    %c0_i32_0 = arith.constant 0 : i32
    %c0_i32_1 = arith.constant 0 : i32
    return %c0_i32, %c0_i32_0 : i32, i32
  }
  func.func @transform_55(%arg0: i32) -> (i32, i32) {
    %c0_i32 = arith.constant 0 : i32
    %c0_i32_0 = arith.constant 0 : i32
    %c0_i32_1 = arith.constant 0 : i32
    return %c0_i32, %c0_i32_0 : i32, i32
  }
  func.func @transform_56(%arg0: i32) -> (i32, i32) {
    %c0_i32 = arith.constant 0 : i32
    %c0_i32_0 = arith.constant 0 : i32
    %c0_i32_1 = arith.constant 0 : i32
    return %c0_i32, %c0_i32_0 : i32, i32
  }
  func.func @transform_57(%arg0: i32) -> (i32, i32) {
    %c0_i32 = arith.constant 0 : i32
    %c0_i32_0 = arith.constant 0 : i32
    %c0_i32_1 = arith.constant 0 : i32
    return %c0_i32, %c0_i32_0 : i32, i32
  }
  func.func @transform_58(%arg0: i32) -> (i32, i32) {
    %c0_i32 = arith.constant 0 : i32
    %c0_i32_0 = arith.constant 0 : i32
    %c0_i32_1 = arith.constant 0 : i32
    return %c0_i32, %c0_i32_0 : i32, i32
  }
  func.func @transform_59(%arg0: i32) -> (i32, i32) {
    %c0_i32 = arith.constant 0 : i32
    %c0_i32_0 = arith.constant 0 : i32
    %c0_i32_1 = arith.constant 0 : i32
    return %c0_i32, %c0_i32_0 : i32, i32
  }
  func.func @transform_60(%arg0: i32) -> (i32, i32) {
    %c0_i32 = arith.constant 0 : i32
    %c0_i32_0 = arith.constant 0 : i32
    %c0_i32_1 = arith.constant 0 : i32
    return %c0_i32, %c0_i32_0 : i32, i32
  }
  func.func @transform_61(%arg0: i32) -> (i32, i32) {
    %c0_i32 = arith.constant 0 : i32
    %c0_i32_0 = arith.constant 0 : i32
    %c0_i32_1 = arith.constant 0 : i32
    return %c0_i32, %c0_i32_0 : i32, i32
  }
  func.func @transform_62(%arg0: i32) -> (i32, i32) {
    %c0_i32 = arith.constant 0 : i32
    %c0_i32_0 = arith.constant 0 : i32
    %c0_i32_1 = arith.constant 0 : i32
    return %c0_i32, %c0_i32_0 : i32, i32
  }
  func.func @transform_63(%arg0: i32) -> (i32, i32, i32) {
    %c0_i32 = arith.constant 0 : i32
    %c0_i32_0 = arith.constant 0 : i32
    %c0_i32_1 = arith.constant 0 : i32
    return %arg0, %c0_i32, %c0_i32_0 : i32, i32, i32
  }
}

</mosaic_0001>

<llo_original>
// kernel: densewave_forward.1
$region0: #{densewave_forward.1}
  #allocation0 [shape = 'u32[]', space=smem, size = 0x4, offset = 0x4, fixed_abs, tag = 'smem constant byte address 0x4 - core index']
  #allocation1 [shape = 'u32[72,128]{1,0:T(1,128)}', space=vmem, size = 0x9000, scoped, tag = 'internal scratch']
  %s0 = inlined_call_operand.smem [shape: u32[64], index: -1, kind: input, shape index: {}]
  %s1 = sld [smem:[%s0]]
  %s2 = scalar_lea.smem %s0, 1
  %s3 = sld [smem:[%s2]]
  %s4 = scalar_lea.smem %s0, 2
  %s5 = sld [smem:[%s4]]
  %s6 = scalar_lea.smem %s0, 3
  %s7 = sld [smem:[%s6]]
  %s8 = scalar_lea.smem %s0, 4
  %s9 = sld [smem:[%s8]]
  %s10 = scalar_lea.smem %s0, 5
  %s11 = sld [smem:[%s10]]
  %s12 = scalar_lea.smem %s0, 6
  %s13 = sld [smem:[%s12]]
  %s14 = scalar_lea.smem %s0, 7
  %s15 = sld [smem:[%s14]]
  %s16 = scalar_lea.smem %s0, 8
  %s17 = sld [smem:[%s16]]
  %s18 = scalar_lea.smem %s0, 9
  %s19 = sld [smem:[%s18]]
  %s20 = scalar_lea.smem %s0, 10
  %s21 = sld [smem:[%s20]]
  %s22 = scalar_lea.smem %s0, 11
  %s23 = sld [smem:[%s22]]
  %s24 = scalar_lea.smem %s0, 12
  %s25 = sld [smem:[%s24]]
  %s26 = scalar_lea.smem %s0, 13
  %s27 = sld [smem:[%s26]]
  %s28 = scalar_lea.smem %s0, 14
  %s29 = sld [smem:[%s28]]
  %s30 = scalar_lea.smem %s0, 15
  %s31 = sld [smem:[%s30]]
  %s32 = scalar_lea.smem %s0, 16
  %s33 = sld [smem:[%s32]]
  %s34 = scalar_lea.smem %s0, 17
  %s35 = sld [smem:[%s34]]
  %s36 = scalar_lea.smem %s0, 18
  %s37 = sld [smem:[%s36]]
  %s38 = scalar_lea.smem %s0, 19
  %s39 = sld [smem:[%s38]]
  %s40 = scalar_lea.smem %s0, 20
  %s41 = sld [smem:[%s40]]
  %s42 = scalar_lea.smem %s0, 21
  %s43 = sld [smem:[%s42]]
  %s44 = scalar_lea.smem %s0, 22
  %s45 = sld [smem:[%s44]]
  %s46 = scalar_lea.smem %s0, 23
  %s47 = sld [smem:[%s46]]
  %s48 = scalar_lea.smem %s0, 24
  %s49 = sld [smem:[%s48]]
  %s50 = scalar_lea.smem %s0, 25
  %s51 = sld [smem:[%s50]]
  %s52 = scalar_lea.smem %s0, 26
  %s53 = sld [smem:[%s52]]
  %s54 = scalar_lea.smem %s0, 27
  %s55 = sld [smem:[%s54]]
  %s56 = scalar_lea.smem %s0, 28
  %s57 = sld [smem:[%s56]]
  %s58 = scalar_lea.smem %s0, 29
  %s59 = sld [smem:[%s58]]
  %s60 = scalar_lea.smem %s0, 30
  %s61 = sld [smem:[%s60]]
  %s62 = scalar_lea.smem %s0, 31
  %s63 = sld [smem:[%s62]]
  %s64 = scalar_lea.smem %s0, 32
  %s65 = sld [smem:[%s64]]
  %s66 = scalar_lea.smem %s0, 33
  %s67 = sld [smem:[%s66]]
  %s68 = scalar_lea.smem %s0, 34
  %s69 = sld [smem:[%s68]]
  %s70 = scalar_lea.smem %s0, 35
  %s71 = sld [smem:[%s70]]
  %s72 = scalar_lea.smem %s0, 36
  %s73 = sld [smem:[%s72]]
  %s74 = scalar_lea.smem %s0, 37
  %s75 = sld [smem:[%s74]]
  %s76 = scalar_lea.smem %s0, 38
  %s77 = sld [smem:[%s76]]
  %s78 = scalar_lea.smem %s0, 39
  %s79 = sld [smem:[%s78]]
  %s80 = scalar_lea.smem %s0, 40
  %s81 = sld [smem:[%s80]]
  %s82 = scalar_lea.smem %s0, 41
  %s83 = sld [smem:[%s82]]
  %s84 = scalar_lea.smem %s0, 42
  %s85 = sld [smem:[%s84]]
  %s86 = scalar_lea.smem %s0, 43
  %s87 = sld [smem:[%s86]]
  %s88 = scalar_lea.smem %s0, 44
  %s89 = sld [smem:[%s88]]
  %s90 = scalar_lea.smem %s0, 45
  %s91 = sld [smem:[%s90]]
  %s92 = scalar_lea.smem %s0, 46
  %s93 = sld [smem:[%s92]]
  %s94 = scalar_lea.smem %s0, 47
  %s95 = sld [smem:[%s94]]
  %s96 = scalar_lea.smem %s0, 48
  %s97 = sld [smem:[%s96]]
  %s98 = scalar_lea.smem %s0, 49
  %s99 = sld [smem:[%s98]]
  %s100 = scalar_lea.smem %s0, 50
  %s101 = sld [smem:[%s100]]
  %s102 = scalar_lea.smem %s0, 51
  %s103 = sld [smem:[%s102]]
  %s104 = scalar_lea.smem %s0, 52
  %s105 = sld [smem:[%s104]]
  %s106 = scalar_lea.smem %s0, 53
  %s107 = sld [smem:[%s106]]
  %s108 = scalar_lea.smem %s0, 54
  %s109 = sld [smem:[%s108]]
  %s110 = scalar_lea.smem %s0, 55
  %s111 = sld [smem:[%s110]]
  %s112 = scalar_lea.smem %s0, 56
  %s113 = sld [smem:[%s112]]
  %s114 = scalar_lea.smem %s0, 57
  %s115 = sld [smem:[%s114]]
  %s116 = scalar_lea.smem %s0, 58
  %s117 = sld [smem:[%s116]]
  %s118 = scalar_lea.smem %s0, 59
  %s119 = sld [smem:[%s118]]
  %s120 = scalar_lea.smem %s0, 60
  %s121 = sld [smem:[%s120]]
  %s122 = scalar_lea.smem %s0, 61
  %s123 = sld [smem:[%s122]]
  %s124 = scalar_lea.smem %s0, 62
  %s125 = sld [smem:[%s124]]
  %s126 = scalar_lea.smem %s0, 63
  %s127 = sld [smem:[%s126]]
  %s128 = sld [smem:[#allocation0]]
  $region285: #{densewave_forward.1} parent=0
    _
  %s130 = ssub.s32 1, %s128
  %s131 = scalar_select 0, %s130, %s128
  loop: start=0, step=1, limit=4
  $region2: #{densewave_forward.1} parent=0 // loop_pre_header
    _
  $region3: #{densewave_forward.1} parent=0 // loop_header
    %s133 = sphi 0, %s137
    %p134 = scmp.ge.s32.totalorder %s133, 4
    %s143 = sphi 0, %s145
    %s146 = sphi 0, %s143
    %s147 = sphi 0, %s146
    %s163 = sphi 0, %s147
    %s169 = sphi 0, %s171
    %s172 = sphi 0, %s169
    %s173 = sphi 0, %s172
    %s189 = sphi 0, %s173
    %s195 = sphi 0, %s197
    %s198 = sphi 0, %s195
    %s199 = sphi 0, %s198
    %s215 = sphi 0, %s199
    %s219 = sphi 0, %s219
    %s221 = sphi 0, %s219
    %s222 = sphi 0, %s221
    %s236 = sphi 0, %s222
    %s240 = sphi 0, %s240
    %s242 = sphi 0, %s240
    %s243 = sphi 0, %s242
    %s257 = sphi 0, %s243
    %s261 = sphi 0, %s261
    %s263 = sphi 0, %s261
    %s264 = sphi 0, %s263
    %s278 = sphi 0, %s264
    %s282 = sphi 0, %s282
    %s284 = sphi 0, %s282
    %s285 = sphi 0, %s284
    %s299 = sphi 0, %s285
    %s303 = sphi 0, %s303
    %s305 = sphi 0, %s303
    %s306 = sphi 0, %s305
    %s320 = sphi 0, %s306
    %s324 = sphi 0, %s324
    %s326 = sphi 0, %s324
    %s327 = sphi 0, %s326
    %s341 = sphi 0, %s327
    %s345 = sphi 0, %s345
    %s347 = sphi 0, %s345
    %s348 = sphi 0, %s347
    %s362 = sphi 0, %s348
    %s366 = sphi 0, %s366
    %s368 = sphi 0, %s366
    %s369 = sphi 0, %s368
    %s383 = sphi 0, %s369
    %s387 = sphi 0, %s387
    %s389 = sphi 0, %s387
    %s390 = sphi 0, %s389
    %s404 = sphi 0, %s390
    %s408 = sphi 0, %s408
    %s410 = sphi 0, %s408
    %s411 = sphi 0, %s410
    %s425 = sphi 0, %s411
    %s429 = sphi 0, %s429
    %s431 = sphi 0, %s429
    %s432 = sphi 0, %s431
    %s446 = sphi 0, %s432
    %s450 = sphi 0, %s450
    %s452 = sphi 0, %s450
    %s453 = sphi 0, %s452
    %s467 = sphi 0, %s453
    %s471 = sphi 0, %s471
    %s473 = sphi 0, %s471
    %s474 = sphi 0, %s473
    %s488 = sphi 0, %s474
    %s492 = sphi 0, %s492
    %s494 = sphi 0, %s492
    %s495 = sphi 0, %s494
    %s509 = sphi 0, %s495
    %s513 = sphi 0, %s513
    %s515 = sphi 0, %s513
    %s516 = sphi 0, %s515
    %s530 = sphi 0, %s516
    %s534 = sphi 0, %s534
    %s536 = sphi 0, %s534
    %s537 = sphi 0, %s536
    %s551 = sphi 0, %s537
    %s555 = sphi 0, %s555
    %s557 = sphi 0, %s555
    %s558 = sphi 0, %s557
    %s572 = sphi 0, %s558
    %s576 = sphi 0, %s576
    %s578 = sphi 0, %s576
    %s579 = sphi 0, %s578
    %s593 = sphi 0, %s579
    %s597 = sphi 0, %s597
    %s599 = sphi 0, %s597
    %s600 = sphi 0, %s599
    %s614 = sphi 0, %s600
    %s618 = sphi 0, %s618
    %s620 = sphi 0, %s618
    %s621 = sphi 0, %s620
    %s635 = sphi 0, %s621
    %s639 = sphi 0, %s639
    %s641 = sphi 0, %s639
    %s642 = sphi 0, %s641
    %s656 = sphi 0, %s642
    %s660 = sphi 0, %s660
    %s662 = sphi 0, %s660
    %s663 = sphi 0, %s662
    %s677 = sphi 0, %s663
    %s681 = sphi 0, %s681
    %s683 = sphi 0, %s681
    %s684 = sphi 0, %s683
    %s698 = sphi 0, %s684
    %s702 = sphi 0, %s702
    %s704 = sphi 0, %s702
    %s705 = sphi 0, %s704
    %s719 = sphi 0, %s705
    %s723 = sphi 0, %s723
    %s725 = sphi 0, %s723
    %s726 = sphi 0, %s725
    %s740 = sphi 0, %s726
    %s744 = sphi 0, %s744
    %s746 = sphi 0, %s744
    %s747 = sphi 0, %s746
    %s761 = sphi 0, %s747
    %s765 = sphi 0, %s765
    %s767 = sphi 0, %s765
    %s768 = sphi 0, %s767
    %s782 = sphi 0, %s768
    %s786 = sphi 0, %s786
    %s788 = sphi 0, %s786
    %s789 = sphi 0, %s788
    %s803 = sphi 0, %s789
    %s807 = sphi 0, %s807
    %s809 = sphi 0, %s807
    %s810 = sphi 0, %s809
    %s824 = sphi 0, %s810
    %s828 = sphi 0, %s828
    %s830 = sphi 0, %s828
    %s831 = sphi 0, %s830
    %s845 = sphi 0, %s831
    %s849 = sphi 0, %s849
    %s851 = sphi 0, %s849
    %s852 = sphi 0, %s851
    %s866 = sphi 0, %s852
    %s870 = sphi 0, %s870
    %s872 = sphi 0, %s870
    %s873 = sphi 0, %s872
    %s887 = sphi 0, %s873
    %s891 = sphi 0, %s891
    %s893 = sphi 0, %s891
    %s894 = sphi 0, %s893
    %s908 = sphi 0, %s894
    %s912 = sphi 0, %s912
    %s914 = sphi 0, %s912
    %s915 = sphi 0, %s914
    %s929 = sphi 0, %s915
    %s933 = sphi 0, %s933
    %s935 = sphi 0, %s933
    %s936 = sphi 0, %s935
    %s950 = sphi 0, %s936
    %s954 = sphi 0, %s954
    %s956 = sphi 0, %s954
    %s957 = sphi 0, %s956
    %s971 = sphi 0, %s957
    %s975 = sphi 0, %s975
    %s977 = sphi 0, %s975
    %s978 = sphi 0, %s977
    %s992 = sphi 0, %s978
    %s996 = sphi 0, %s996
    %s998 = sphi 0, %s996
    %s999 = sphi 0, %s998
    %s1013 = sphi 0, %s999
    %s1017 = sphi 0, %s1017
    %s1019 = sphi 0, %s1017
    %s1020 = sphi 0, %s1019
    %s1034 = sphi 0, %s1020
    %s1038 = sphi 0, %s1038
    %s1040 = sphi 0, %s1038
    %s1041 = sphi 0, %s1040
    %s1055 = sphi 0, %s1041
    %s1059 = sphi 0, %s1059
    %s1061 = sphi 0, %s1059
    %s1062 = sphi 0, %s1061
    %s1076 = sphi 0, %s1062
    %s1080 = sphi 0, %s1080
    %s1082 = sphi 0, %s1080
    %s1083 = sphi 0, %s1082
    %s1097 = sphi 0, %s1083
    %s1101 = sphi 0, %s1101
    %s1103 = sphi 0, %s1101
    %s1104 = sphi 0, %s1103
    %s1118 = sphi 0, %s1104
    %s1122 = sphi 0, %s1122
    %s1124 = sphi 0, %s1122
    %s1125 = sphi 0, %s1124
    %s1139 = sphi 0, %s1125
    %s1143 = sphi 0, %s1143
    %s1145 = sphi 0, %s1143
    %s1146 = sphi 0, %s1145
    %s1160 = sphi 0, %s1146
    %s1164 = sphi 0, %s1164
    %s1166 = sphi 0, %s1164
    %s1167 = sphi 0, %s1166
    %s1181 = sphi 0, %s1167
    %s1185 = sphi 0, %s1185
    %s1187 = sphi 0, %s1185
    %s1188 = sphi 0, %s1187
    %s1202 = sphi 0, %s1188
    %s1206 = sphi 0, %s1206
    %s1208 = sphi 0, %s1206
    %s1209 = sphi 0, %s1208
    %s1223 = sphi 0, %s1209
    %s1227 = sphi 0, %s1227
    %s1229 = sphi 0, %s1227
    %s1230 = sphi 0, %s1229
    %s1244 = sphi 0, %s1230
    %s1248 = sphi 0, %s1248
    %s1250 = sphi 0, %s1248
    %s1251 = sphi 0, %s1250
    %s1265 = sphi 0, %s1251
    %s1269 = sphi 0, %s1269
    %s1271 = sphi 0, %s1269
    %s1272 = sphi 0, %s1271
    %s1286 = sphi 0, %s1272
    %s1290 = sphi 0, %s1290
    %s1292 = sphi 0, %s1290
    %s1293 = sphi 0, %s1292
    %s1307 = sphi 0, %s1293
    %s1311 = sphi 0, %s1311
    %s1313 = sphi 0, %s1311
    %s1314 = sphi 0, %s1313
    %s1328 = sphi 0, %s1314
    %s1332 = sphi 0, %s1332
    %s1334 = sphi 0, %s1332
    %s1335 = sphi 0, %s1334
    %s1349 = sphi 0, %s1335
    %s1353 = sphi 0, %s1353
    %s1355 = sphi 0, %s1353
    %s1356 = sphi 0, %s1355
    %s1370 = sphi 0, %s1356
    %s1374 = sphi 0, %s1374
    %s1376 = sphi 0, %s1374
    %s1377 = sphi 0, %s1376
    %s1391 = sphi 0, %s1377
    %s1395 = sphi 0, %s1395
    %s1397 = sphi 0, %s1395
    %s1398 = sphi 0, %s1397
    %s1412 = sphi 0, %s1398
    %s1416 = sphi 0, %s1416
    %s1418 = sphi 0, %s1416
    %s1419 = sphi 0, %s1418
    %s1433 = sphi 0, %s1419
    %s1437 = sphi 0, %s1437
    %s1439 = sphi 0, %s1437
    %s1440 = sphi 0, %s1439
    %s1454 = sphi 0, %s1440
    %s1458 = sphi 0, %s1458
    %s1460 = sphi 0, %s1458
    %s1461 = sphi 0, %s1460
    %s1475 = sphi 0, %s1461
    %s1481 = sphi 0, %s1483
    %s1484 = sphi 0, %s1481
    %s1485 = sphi 0, %s1484
    %s1501 = sphi 0, %s1485
  $region4: #{densewave_forward.1} parent=0 // loop_header_branch
    %136 = sbr.rel (%p134) target = $region8
  $region5: #{densewave_forward.1} parent=0 // loop_body
    %s138 = ssub.s32 %s133, 1
    %s139 = ssub.s32 %s133, 2
    %s140 = sadd.s32 %s133, 1
    %s141 = ssub.s32 %s133, %s140
    %p142 = scmp.eq.s32.totalorder %s141, 0
    %s144 = sadd.s32 %s143, 1
    %s145 = scalar_select %p142, %s143, %s144
    %p148 = pneg %p142
    %p149 = scmp.eq.s32.totalorder %s133, 1
    %p150 = por %p148, %p149
    %p151 = scmp.ne.s32.totalorder %s143, %s146
    %p152 = scmp.eq.s32.totalorder %s133, 0
    %p153 = por %p151, %p152
    %p154 = scmp.ne.s32.totalorder %s143, %s146
    %p155 = scmp.eq.s32.totalorder %s138, 1
    %p156 = por %p154, %p155
    %p157 = scmp.ne.s32.totalorder %s146, %s147
    %p158 = scmp.eq.s32.totalorder %s138, 0
    %p159 = por %p157, %p158
    %p160 = scmp.ne.s32.totalorder %s146, %s147
    %p161 = scmp.eq.s32.totalorder %s139, 1
    %p162 = por %p160, %p161
    %p164 = scmp.ne.s32.totalorder %s147, %s163
    %p165 = scmp.eq.s32.totalorder %s139, 0
    %p166 = por %p164, %p165
    %s167 = ssub.s32 %s133, %s140
    %p168 = scmp.eq.s32.totalorder %s167, 0
    %s170 = sadd.s32 %s169, 1
    %s171 = scalar_select %p168, %s169, %s170
    %p174 = pneg %p168
    %p175 = scmp.eq.s32.totalorder %s133, 1
    %p176 = por %p174, %p175
    %p177 = scmp.ne.s32.totalorder %s169, %s172
    %p178 = scmp.eq.s32.totalorder %s133, 0
    %p179 = por %p177, %p178
    %p180 = scmp.ne.s32.totalorder %s169, %s172
    %p181 = scmp.eq.s32.totalorder %s138, 1
    %p182 = por %p180, %p181
    %p183 = scmp.ne.s32.totalorder %s172, %s173
    %p184 = scmp.eq.s32.totalorder %s138, 0
    %p185 = por %p183, %p184
    %p186 = scmp.ne.s32.totalorder %s172, %s173
    %p187 = scmp.eq.s32.totalorder %s139, 1
    %p188 = por %p186, %p187
    %p190 = scmp.ne.s32.totalorder %s173, %s189
    %p191 = scmp.eq.s32.totalorder %s139, 0
    %p192 = por %p190, %p191
    %s193 = ssub.s32 %s133, %s140
    %p194 = scmp.eq.s32.totalorder %s193, 0
    %s196 = sadd.s32 %s195, 1
    %s197 = scalar_select %p194, %s195, %s196
    %p200 = pneg %p194
    %p201 = scmp.eq.s32.totalorder %s133, 1
    %p202 = por %p200, %p201
    %p203 = scmp.ne.s32.totalorder %s195, %s198
    %p204 = scmp.eq.s32.totalorder %s133, 0
    %p205 = por %p203, %p204
    %p206 = scmp.ne.s32.totalorder %s195, %s198
    %p207 = scmp.eq.s32.totalorder %s138, 1
    %p208 = por %p206, %p207
    %p209 = scmp.ne.s32.totalorder %s198, %s199
    %p210 = scmp.eq.s32.totalorder %s138, 0
    %p211 = por %p209, %p210
    %p212 = scmp.ne.s32.totalorder %s198, %s199
    %p213 = scmp.eq.s32.totalorder %s139, 1
    %p214 = por %p212, %p213
    %p216 = scmp.ne.s32.totalorder %s199, %s215
    %p217 = scmp.eq.s32.totalorder %s139, 0
    %p218 = por %p216, %p217
    %s220 = sadd.s32 %s219, 1
    %p223 = scmp.eq.s32.totalorder %s133, 1
    %p224 = scmp.ne.s32.totalorder %s219, %s221
    %p225 = scmp.eq.s32.totalorder %s133, 0
    %p226 = por %p224, %p225
    %p227 = scmp.ne.s32.totalorder %s219, %s221
    %p228 = scmp.eq.s32.totalorder %s138, 1
    %p229 = por %p227, %p228
    %p230 = scmp.ne.s32.totalorder %s221, %s222
    %p231 = scmp.eq.s32.totalorder %s138, 0
    %p232 = por %p230, %p231
    %p233 = scmp.ne.s32.totalorder %s221, %s222
    %p234 = scmp.eq.s32.totalorder %s139, 1
    %p235 = por %p233, %p234
    %p237 = scmp.ne.s32.totalorder %s222, %s236
    %p238 = scmp.eq.s32.totalorder %s139, 0
    %p239 = por %p237, %p238
    %s241 = sadd.s32 %s240, 1
    %p244 = scmp.eq.s32.totalorder %s133, 1
    %p245 = scmp.ne.s32.totalorder %s240, %s242
    %p246 = scmp.eq.s32.totalorder %s133, 0
    %p247 = por %p245, %p246
    %p248 = scmp.ne.s32.totalorder %s240, %s242
    %p249 = scmp.eq.s32.totalorder %s138, 1
    %p250 = por %p248, %p249
    %p251 = scmp.ne.s32.totalorder %s242, %s243
    %p252 = scmp.eq.s32.totalorder %s138, 0
    %p253 = por %p251, %p252
    %p254 = scmp.ne.s32.totalorder %s242, %s243
    %p255 = scmp.eq.s32.totalorder %s139, 1
    %p256 = por %p254, %p255
    %p258 = scmp.ne.s32.totalorder %s243, %s257
    %p259 = scmp.eq.s32.totalorder %s139, 0
    %p260 = por %p258, %p259
    %s262 = sadd.s32 %s261, 1
    %p265 = scmp.eq.s32.totalorder %s133, 1
    %p266 = scmp.ne.s32.totalorder %s261, %s263
    %p267 = scmp.eq.s32.totalorder %s133, 0
    %p268 = por %p266, %p267
    %p269 = scmp.ne.s32.totalorder %s261, %s263
    %p270 = scmp.eq.s32.totalorder %s138, 1
    %p271 = por %p269, %p270
    %p272 = scmp.ne.s32.totalorder %s263, %s264
    %p273 = scmp.eq.s32.totalorder %s138, 0
    %p274 = por %p272, %p273
    %p275 = scmp.ne.s32.totalorder %s263, %s264
    %p276 = scmp.eq.s32.totalorder %s139, 1
    %p277 = por %p275, %p276
    %p279 = scmp.ne.s32.totalorder %s264, %s278
    %p280 = scmp.eq.s32.totalorder %s139, 0
    %p281 = por %p279, %p280
    %s283 = sadd.s32 %s282, 1
    %p286 = scmp.eq.s32.totalorder %s133, 1
    %p287 = scmp.ne.s32.totalorder %s282, %s284
    %p288 = scmp.eq.s32.totalorder %s133, 0
    %p289 = por %p287, %p288
    %p290 = scmp.ne.s32.totalorder %s282, %s284
    %p291 = scmp.eq.s32.totalorder %s138, 1
    %p292 = por %p290, %p291
    %p293 = scmp.ne.s32.totalorder %s284, %s285
    %p294 = scmp.eq.s32.totalorder %s138, 0
    %p295 = por %p293, %p294
    %p296 = scmp.ne.s32.totalorder %s284, %s285
    %p297 = scmp.eq.s32.totalorder %s139, 1
    %p298 = por %p296, %p297
    %p300 = scmp.ne.s32.totalorder %s285, %s299
    %p301 = scmp.eq.s32.totalorder %s139, 0
    %p302 = por %p300, %p301
    %s304 = sadd.s32 %s303, 1
    %p307 = scmp.eq.s32.totalorder %s133, 1
    %p308 = scmp.ne.s32.totalorder %s303, %s305
    %p309 = scmp.eq.s32.totalorder %s133, 0
    %p310 = por %p308, %p309
    %p311 = scmp.ne.s32.totalorder %s303, %s305
    %p312 = scmp.eq.s32.totalorder %s138, 1
    %p313 = por %p311, %p312
    %p314 = scmp.ne.s32.totalorder %s305, %s306
    %p315 = scmp.eq.s32.totalorder %s138, 0
    %p316 = por %p314, %p315
    %p317 = scmp.ne.s32.totalorder %s305, %s306
    %p318 = scmp.eq.s32.totalorder %s139, 1
    %p319 = por %p317, %p318
    %p321 = scmp.ne.s32.totalorder %s306, %s320
    %p322 = scmp.eq.s32.totalorder %s139, 0
    %p323 = por %p321, %p322
    %s325 = sadd.s32 %s324, 1
    %p328 = scmp.eq.s32.totalorder %s133, 1
    %p329 = scmp.ne.s32.totalorder %s324, %s326
    %p330 = scmp.eq.s32.totalorder %s133, 0
    %p331 = por %p329, %p330
    %p332 = scmp.ne.s32.totalorder %s324, %s326
    %p333 = scmp.eq.s32.totalorder %s138, 1
    %p334 = por %p332, %p333
    %p335 = scmp.ne.s32.totalorder %s326, %s327
    %p336 = scmp.eq.s32.totalorder %s138, 0
    %p337 = por %p335, %p336
    %p338 = scmp.ne.s32.totalorder %s326, %s327
    %p339 = scmp.eq.s32.totalorder %s139, 1
    %p340 = por %p338, %p339
    %p342 = scmp.ne.s32.totalorder %s327, %s341
    %p343 = scmp.eq.s32.totalorder %s139, 0
    %p344 = por %p342, %p343
    %s346 = sadd.s32 %s345, 1
    %p349 = scmp.eq.s32.totalorder %s133, 1
    %p350 = scmp.ne.s32.totalorder %s345, %s347
    %p351 = scmp.eq.s32.totalorder %s133, 0
    %p352 = por %p350, %p351
    %p353 = scmp.ne.s32.totalorder %s345, %s347
    %p354 = scmp.eq.s32.totalorder %s138, 1
    %p355 = por %p353, %p354
    %p356 = scmp.ne.s32.totalorder %s347, %s348
    %p357 = scmp.eq.s32.totalorder %s138, 0
    %p358 = por %p356, %p357
    %p359 = scmp.ne.s32.totalorder %s347, %s348
    %p360 = scmp.eq.s32.totalorder %s139, 1
    %p361 = por %p359, %p360
    %p363 = scmp.ne.s32.totalorder %s348, %s362
    %p364 = scmp.eq.s32.totalorder %s139, 0
    %p365 = por %p363, %p364
    %s367 = sadd.s32 %s366, 1
    %p370 = scmp.eq.s32.totalorder %s133, 1
    %p371 = scmp.ne.s32.totalorder %s366, %s368
    %p372 = scmp.eq.s32.totalorder %s133, 0
    %p373 = por %p371, %p372
    %p374 = scmp.ne.s32.totalorder %s366, %s368
    %p375 = scmp.eq.s32.totalorder %s138, 1
    %p376 = por %p374, %p375
    %p377 = scmp.ne.s32.totalorder %s368, %s369
    %p378 = scmp.eq.s32.totalorder %s138, 0
    %p379 = por %p377, %p378
    %p380 = scmp.ne.s32.totalorder %s368, %s369
    %p381 = scmp.eq.s32.totalorder %s139, 1
    %p382 = por %p380, %p381
    %p384 = scmp.ne.s32.totalorder %s369, %s383
    %p385 = scmp.eq.s32.totalorder %s139, 0
    %p386 = por %p384, %p385
    %s388 = sadd.s32 %s387, 1
    %p391 = scmp.eq.s32.totalorder %s133, 1
    %p392 = scmp.ne.s32.totalorder %s387, %s389
    %p393 = scmp.eq.s32.totalorder %s133, 0
    %p394 = por %p392, %p393
    %p395 = scmp.ne.s32.totalorder %s387, %s389
    %p396 = scmp.eq.s32.totalorder %s138, 1
    %p397 = por %p395, %p396
    %p398 = scmp.ne.s32.totalorder %s389, %s390
    %p399 = scmp.eq.s32.totalorder %s138, 0
    %p400 = por %p398, %p399
    %p401 = scmp.ne.s32.totalorder %s389, %s390
    %p402 = scmp.eq.s32.totalorder %s139, 1
    %p403 = por %p401, %p402
    %p405 = scmp.ne.s32.totalorder %s390, %s404
    %p406 = scmp.eq.s32.totalorder %s139, 0
    %p407 = por %p405, %p406
    %s409 = sadd.s32 %s408, 1
    %p412 = scmp.eq.s32.totalorder %s133, 1
    %p413 = scmp.ne.s32.totalorder %s408, %s410
    %p414 = scmp.eq.s32.totalorder %s133, 0
    %p415 = por %p413, %p414
    %p416 = scmp.ne.s32.totalorder %s408, %s410
    %p417 = scmp.eq.s32.totalorder %s138, 1
    %p418 = por %p416, %p417
    %p419 = scmp.ne.s32.totalorder %s410, %s411
    %p420 = scmp.eq.s32.totalorder %s138, 0
    %p421 = por %p419, %p420
    %p422 = scmp.ne.s32.totalorder %s410, %s411
    %p423 = scmp.eq.s32.totalorder %s139, 1
    %p424 = por %p422, %p423
    %p426 = scmp.ne.s32.totalorder %s411, %s425
    %p427 = scmp.eq.s32.totalorder %s139, 0
    %p428 = por %p426, %p427
    %s430 = sadd.s32 %s429, 1
    %p433 = scmp.eq.s32.totalorder %s133, 1
    %p434 = scmp.ne.s32.totalorder %s429, %s431
    %p435 = scmp.eq.s32.totalorder %s133, 0
    %p436 = por %p434, %p435
    %p437 = scmp.ne.s32.totalorder %s429, %s431
    %p438 = scmp.eq.s32.totalorder %s138, 1
    %p439 = por %p437, %p438
    %p440 = scmp.ne.s32.totalorder %s431, %s432
    %p441 = scmp.eq.s32.totalorder %s138, 0
    %p442 = por %p440, %p441
    %p443 = scmp.ne.s32.totalorder %s431, %s432
    %p444 = scmp.eq.s32.totalorder %s139, 1
    %p445 = por %p443, %p444
    %p447 = scmp.ne.s32.totalorder %s432, %s446
    %p448 = scmp.eq.s32.totalorder %s139, 0
    %p449 = por %p447, %p448
    %s451 = sadd.s32 %s450, 1
    %p454 = scmp.eq.s32.totalorder %s133, 1
    %p455 = scmp.ne.s32.totalorder %s450, %s452
    %p456 = scmp.eq.s32.totalorder %s133, 0
    %p457 = por %p455, %p456
    %p458 = scmp.ne.s32.totalorder %s450, %s452
    %p459 = scmp.eq.s32.totalorder %s138, 1
    %p460 = por %p458, %p459
    %p461 = scmp.ne.s32.totalorder %s452, %s453
    %p462 = scmp.eq.s32.totalorder %s138, 0
    %p463 = por %p461, %p462
    %p464 = scmp.ne.s32.totalorder %s452, %s453
    %p465 = scmp.eq.s32.totalorder %s139, 1
    %p466 = por %p464, %p465
    %p468 = scmp.ne.s32.totalorder %s453, %s467
    %p469 = scmp.eq.s32.totalorder %s139, 0
    %p470 = por %p468, %p469
    %s472 = sadd.s32 %s471, 1
    %p475 = scmp.eq.s32.totalorder %s133, 1
    %p476 = scmp.ne.s32.totalorder %s471, %s473
    %p477 = scmp.eq.s32.totalorder %s133, 0
    %p478 = por %p476, %p477
    %p479 = scmp.ne.s32.totalorder %s471, %s473
    %p480 = scmp.eq.s32.totalorder %s138, 1
    %p481 = por %p479, %p480
    %p482 = scmp.ne.s32.totalorder %s473, %s474
    %p483 = scmp.eq.s32.totalorder %s138, 0
    %p484 = por %p482, %p483
    %p485 = scmp.ne.s32.totalorder %s473, %s474
    %p486 = scmp.eq.s32.totalorder %s139, 1
    %p487 = por %p485, %p486
    %p489 = scmp.ne.s32.totalorder %s474, %s488
    %p490 = scmp.eq.s32.totalorder %s139, 0
    %p491 = por %p489, %p490
    %s493 = sadd.s32 %s492, 1
    %p496 = scmp.eq.s32.totalorder %s133, 1
    %p497 = scmp.ne.s32.totalorder %s492, %s494
    %p498 = scmp.eq.s32.totalorder %s133, 0
    %p499 = por %p497, %p498
    %p500 = scmp.ne.s32.totalorder %s492, %s494
    %p501 = scmp.eq.s32.totalorder %s138, 1
    %p502 = por %p500, %p501
    %p503 = scmp.ne.s32.totalorder %s494, %s495
    %p504 = scmp.eq.s32.totalorder %s138, 0
    %p505 = por %p503, %p504
    %p506 = scmp.ne.s32.totalorder %s494, %s495
    %p507 = scmp.eq.s32.totalorder %s139, 1
    %p508 = por %p506, %p507
    %p510 = scmp.ne.s32.totalorder %s495, %s509
    %p511 = scmp.eq.s32.totalorder %s139, 0
    %p512 = por %p510, %p511
    %s514 = sadd.s32 %s513, 1
    %p517 = scmp.eq.s32.totalorder %s133, 1
    %p518 = scmp.ne.s32.totalorder %s513, %s515
    %p519 = scmp.eq.s32.totalorder %s133, 0
    %p520 = por %p518, %p519
    %p521 = scmp.ne.s32.totalorder %s513, %s515
    %p522 = scmp.eq.s32.totalorder %s138, 1
    %p523 = por %p521, %p522
    %p524 = scmp.ne.s32.totalorder %s515, %s516
    %p525 = scmp.eq.s32.totalorder %s138, 0
    %p526 = por %p524, %p525
    %p527 = scmp.ne.s32.totalorder %s515, %s516
    %p528 = scmp.eq.s32.totalorder %s139, 1
    %p529 = por %p527, %p528
    %p531 = scmp.ne.s32.totalorder %s516, %s530
    %p532 = scmp.eq.s32.totalorder %s139, 0
    %p533 = por %p531, %p532
    %s535 = sadd.s32 %s534, 1
    %p538 = scmp.eq.s32.totalorder %s133, 1
    %p539 = scmp.ne.s32.totalorder %s534, %s536
    %p540 = scmp.eq.s32.totalorder %s133, 0
    %p541 = por %p539, %p540
    %p542 = scmp.ne.s32.totalorder %s534, %s536
    %p543 = scmp.eq.s32.totalorder %s138, 1
    %p544 = por %p542, %p543
    %p545 = scmp.ne.s32.totalorder %s536, %s537
    %p546 = scmp.eq.s32.totalorder %s138, 0
    %p547 = por %p545, %p546
    %p548 = scmp.ne.s32.totalorder %s536, %s537
    %p549 = scmp.eq.s32.totalorder %s139, 1
    %p550 = por %p548, %p549
    %p552 = scmp.ne.s32.totalorder %s537, %s551
    %p553 = scmp.eq.s32.totalorder %s139, 0
    %p554 = por %p552, %p553
    %s556 = sadd.s32 %s555, 1
    %p559 = scmp.eq.s32.totalorder %s133, 1
    %p560 = scmp.ne.s32.totalorder %s555, %s557
    %p561 = scmp.eq.s32.totalorder %s133, 0
    %p562 = por %p560, %p561
    %p563 = scmp.ne.s32.totalorder %s555, %s557
    %p564 = scmp.eq.s32.totalorder %s138, 1
    %p565 = por %p563, %p564
    %p566 = scmp.ne.s32.totalorder %s557, %s558
    %p567 = scmp.eq.s32.totalorder %s138, 0
    %p568 = por %p566, %p567
    %p569 = scmp.ne.s32.totalorder %s557, %s558
    %p570 = scmp.eq.s32.totalorder %s139, 1
    %p571 = por %p569, %p570
    %p573 = scmp.ne.s32.totalorder %s558, %s572
    %p574 = scmp.eq.s32.totalorder %s139, 0
    %p575 = por %p573, %p574
    %s577 = sadd.s32 %s576, 1
    %p580 = scmp.eq.s32.totalorder %s133, 1
    %p581 = scmp.ne.s32.totalorder %s576, %s578
    %p582 = scmp.eq.s32.totalorder %s133, 0
    %p583 = por %p581, %p582
    %p584 = scmp.ne.s32.totalorder %s576, %s578
    %p585 = scmp.eq.s32.totalorder %s138, 1
    %p586 = por %p584, %p585
    %p587 = scmp.ne.s32.totalorder %s578, %s579
    %p588 = scmp.eq.s32.totalorder %s138, 0
    %p589 = por %p587, %p588
    %p590 = scmp.ne.s32.totalorder %s578, %s579
    %p591 = scmp.eq.s32.totalorder %s139, 1
    %p592 = por %p590, %p591
    %p594 = scmp.ne.s32.totalorder %s579, %s593
    %p595 = scmp.eq.s32.totalorder %s139, 0
    %p596 = por %p594, %p595
    %s598 = sadd.s32 %s597, 1
    %p601 = scmp.eq.s32.totalorder %s133, 1
    %p602 = scmp.ne.s32.totalorder %s597, %s599
    %p603 = scmp.eq.s32.totalorder %s133, 0
    %p604 = por %p602, %p603
    %p605 = scmp.ne.s32.totalorder %s597, %s599
    %p606 = scmp.eq.s32.totalorder %s138, 1
    %p607 = por %p605, %p606
    %p608 = scmp.ne.s32.totalorder %s599, %s600
    %p609 = scmp.eq.s32.totalorder %s138, 0
    %p610 = por %p608, %p609
    %p611 = scmp.ne.s32.totalorder %s599, %s600
    %p612 = scmp.eq.s32.totalorder %s139, 1
    %p613 = por %p611, %p612
    %p615 = scmp.ne.s32.totalorder %s600, %s614
    %p616 = scmp.eq.s32.totalorder %s139, 0
    %p617 = por %p615, %p616
    %s619 = sadd.s32 %s618, 1
    %p622 = scmp.eq.s32.totalorder %s133, 1
    %p623 = scmp.ne.s32.totalorder %s618, %s620
    %p624 = scmp.eq.s32.totalorder %s133, 0
    %p625 = por %p623, %p624
    %p626 = scmp.ne.s32.totalorder %s618, %s620
    %p627 = scmp.eq.s32.totalorder %s138, 1
    %p628 = por %p626, %p627
    %p629 = scmp.ne.s32.totalorder %s620, %s621
    %p630 = scmp.eq.s32.totalorder %s138, 0
    %p631 = por %p629, %p630
    %p632 = scmp.ne.s32.totalorder %s620, %s621
    %p633 = scmp.eq.s32.totalorder %s139, 1
    %p634 = por %p632, %p633
    %p636 = scmp.ne.s32.totalorder %s621, %s635
    %p637 = scmp.eq.s32.totalorder %s139, 0
    %p638 = por %p636, %p637
    %s640 = sadd.s32 %s639, 1
    %p643 = scmp.eq.s32.totalorder %s133, 1
    %p644 = scmp.ne.s32.totalorder %s639, %s641
    %p645 = scmp.eq.s32.totalorder %s133, 0
    %p646 = por %p644, %p645
    %p647 = scmp.ne.s32.totalorder %s639, %s641
    %p648 = scmp.eq.s32.totalorder %s138, 1
    %p649 = por %p647, %p648
    %p650 = scmp.ne.s32.totalorder %s641, %s642
    %p651 = scmp.eq.s32.totalorder %s138, 0
    %p652 = por %p650, %p651
    %p653 = scmp.ne.s32.totalorder %s641, %s642
    %p654 = scmp.eq.s32.totalorder %s139, 1
    %p655 = por %p653, %p654
    %p657 = scmp.ne.s32.totalorder %s642, %s656
    %p658 = scmp.eq.s32.totalorder %s139, 0
    %p659 = por %p657, %p658
    %s661 = sadd.s32 %s660, 1
    %p664 = scmp.eq.s32.totalorder %s133, 1
    %p665 = scmp.ne.s32.totalorder %s660, %s662
    %p666 = scmp.eq.s32.totalorder %s133, 0
    %p667 = por %p665, %p666
    %p668 = scmp.ne.s32.totalorder %s660, %s662
    %p669 = scmp.eq.s32.totalorder %s138, 1
    %p670 = por %p668, %p669
    %p671 = scmp.ne.s32.totalorder %s662, %s663
    %p672 = scmp.eq.s32.totalorder %s138, 0
    %p673 = por %p671, %p672
    %p674 = scmp.ne.s32.totalorder %s662, %s663
    %p675 = scmp.eq.s32.totalorder %s139, 1
    %p676 = por %p674, %p675
    %p678 = scmp.ne.s32.totalorder %s663, %s677
    %p679 = scmp.eq.s32.totalorder %s139, 0
    %p680 = por %p678, %p679
    %s682 = sadd.s32 %s681, 1
    %p685 = scmp.eq.s32.totalorder %s133, 1
    %p686 = scmp.ne.s32.totalorder %s681, %s683
    %p687 = scmp.eq.s32.totalorder %s133, 0
    %p688 = por %p686, %p687
    %p689 = scmp.ne.s32.totalorder %s681, %s683
    %p690 = scmp.eq.s32.totalorder %s138, 1
    %p691 = por %p689, %p690
    %p692 = scmp.ne.s32.totalorder %s683, %s684
    %p693 = scmp.eq.s32.totalorder %s138, 0
    %p694 = por %p692, %p693
    %p695 = scmp.ne.s32.totalorder %s683, %s684
    %p696 = scmp.eq.s32.totalorder %s139, 1
    %p697 = por %p695, %p696
    %p699 = scmp.ne.s32.totalorder %s684, %s698
    %p700 = scmp.eq.s32.totalorder %s139, 0
    %p701 = por %p699, %p700
    %s703 = sadd.s32 %s702, 1
    %p706 = scmp.eq.s32.totalorder %s133, 1
    %p707 = scmp.ne.s32.totalorder %s702, %s704
    %p708 = scmp.eq.s32.totalorder %s133, 0
    %p709 = por %p707, %p708
    %p710 = scmp.ne.s32.totalorder %s702, %s704
    %p711 = scmp.eq.s32.totalorder %s138, 1
    %p712 = por %p710, %p711
    %p713 = scmp.ne.s32.totalorder %s704, %s705
    %p714 = scmp.eq.s32.totalorder %s138, 0
    %p715 = por %p713, %p714
    %p716 = scmp.ne.s32.totalorder %s704, %s705
    %p717 = scmp.eq.s32.totalorder %s139, 1
    %p718 = por %p716, %p717
    %p720 = scmp.ne.s32.totalorder %s705, %s719
    %p721 = scmp.eq.s32.totalorder %s139, 0
    %p722 = por %p720, %p721
    %s724 = sadd.s32 %s723, 1
    %p727 = scmp.eq.s32.totalorder %s133, 1
    %p728 = scmp.ne.s32.totalorder %s723, %s725
    %p729 = scmp.eq.s32.totalorder %s133, 0
    %p730 = por %p728, %p729
    %p731 = scmp.ne.s32.totalorder %s723, %s725
    %p732 = scmp.eq.s32.totalorder %s138, 1
    %p733 = por %p731, %p732
    %p734 = scmp.ne.s32.totalorder %s725, %s726
    %p735 = scmp.eq.s32.totalorder %s138, 0
    %p736 = por %p734, %p735
    %p737 = scmp.ne.s32.totalorder %s725, %s726
    %p738 = scmp.eq.s32.totalorder %s139, 1
    %p739 = por %p737, %p738
    %p741 = scmp.ne.s32.totalorder %s726, %s740
    %p742 = scmp.eq.s32.totalorder %s139, 0
    %p743 = por %p741, %p742
    %s745 = sadd.s32 %s744, 1
    %p748 = scmp.eq.s32.totalorder %s133, 1
    %p749 = scmp.ne.s32.totalorder %s744, %s746
    %p750 = scmp.eq.s32.totalorder %s133, 0
    %p751 = por %p749, %p750
    %p752 = scmp.ne.s32.totalorder %s744, %s746
    %p753 = scmp.eq.s32.totalorder %s138, 1
    %p754 = por %p752, %p753
    %p755 = scmp.ne.s32.totalorder %s746, %s747
    %p756 = scmp.eq.s32.totalorder %s138, 0
    %p757 = por %p755, %p756
    %p758 = scmp.ne.s32.totalorder %s746, %s747
    %p759 = scmp.eq.s32.totalorder %s139, 1
    %p760 = por %p758, %p759
    %p762 = scmp.ne.s32.totalorder %s747, %s761
    %p763 = scmp.eq.s32.totalorder %s139, 0
    %p764 = por %p762, %p763
    %s766 = sadd.s32 %s765, 1
    %p769 = scmp.eq.s32.totalorder %s133, 1
    %p770 = scmp.ne.s32.totalorder %s765, %s767
    %p771 = scmp.eq.s32.totalorder %s133, 0
    %p772 = por %p770, %p771
    %p773 = scmp.ne.s32.totalorder %s765, %s767
    %p774 = scmp.eq.s32.totalorder %s138, 1
    %p775 = por %p773, %p774
    %p776 = scmp.ne.s32.totalorder %s767, %s768
    %p777 = scmp.eq.s32.totalorder %s138, 0
    %p778 = por %p776, %p777
    %p779 = scmp.ne.s32.totalorder %s767, %s768
    %p780 = scmp.eq.s32.totalorder %s139, 1
    %p781 = por %p779, %p780
    %p783 = scmp.ne.s32.totalorder %s768, %s782
    %p784 = scmp.eq.s32.totalorder %s139, 0
    %p785 = por %p783, %p784
    %s787 = sadd.s32 %s786, 1
    %p790 = scmp.eq.s32.totalorder %s133, 1
    %p791 = scmp.ne.s32.totalorder %s786, %s788
    %p792 = scmp.eq.s32.totalorder %s133, 0
    %p793 = por %p791, %p792
    %p794 = scmp.ne.s32.totalorder %s786, %s788
    %p795 = scmp.eq.s32.totalorder %s138, 1
    %p796 = por %p794, %p795
    %p797 = scmp.ne.s32.totalorder %s788, %s789
    %p798 = scmp.eq.s32.totalorder %s138, 0
    %p799 = por %p797, %p798
    %p800 = scmp.ne.s32.totalorder %s788, %s789
    %p801 = scmp.eq.s32.totalorder %s139, 1
    %p802 = por %p800, %p801
    %p804 = scmp.ne.s32.totalorder %s789, %s803
    %p805 = scmp.eq.s32.totalorder %s139, 0
    %p806 = por %p804, %p805
    %s808 = sadd.s32 %s807, 1
    %p811 = scmp.eq.s32.totalorder %s133, 1
    %p812 = scmp.ne.s32.totalorder %s807, %s809
    %p813 = scmp.eq.s32.totalorder %s133, 0
    %p814 = por %p812, %p813
    %p815 = scmp.ne.s32.totalorder %s807, %s809
    %p816 = scmp.eq.s32.totalorder %s138, 1
    %p817 = por %p815, %p816
    %p818 = scmp.ne.s32.totalorder %s809, %s810
    %p819 = scmp.eq.s32.totalorder %s138, 0
    %p820 = por %p818, %p819
    %p821 = scmp.ne.s32.totalorder %s809, %s810
    %p822 = scmp.eq.s32.totalorder %s139, 1
    %p823 = por %p821, %p822
    %p825 = scmp.ne.s32.totalorder %s810, %s824
    %p826 = scmp.eq.s32.totalorder %s139, 0
    %p827 = por %p825, %p826
    %s829 = sadd.s32 %s828, 1
    %p832 = scmp.eq.s32.totalorder %s133, 1
    %p833 = scmp.ne.s32.totalorder %s828, %s830
    %p834 = scmp.eq.s32.totalorder %s133, 0
    %p835 = por %p833, %p834
    %p836 = scmp.ne.s32.totalorder %s828, %s830
    %p837 = scmp.eq.s32.totalorder %s138, 1
    %p838 = por %p836, %p837
    %p839 = scmp.ne.s32.totalorder %s830, %s831
    %p840 = scmp.eq.s32.totalorder %s138, 0
    %p841 = por %p839, %p840
    %p842 = scmp.ne.s32.totalorder %s830, %s831
    %p843 = scmp.eq.s32.totalorder %s139, 1
    %p844 = por %p842, %p843
    %p846 = scmp.ne.s32.totalorder %s831, %s845
    %p847 = scmp.eq.s32.totalorder %s139, 0
    %p848 = por %p846, %p847
    %s850 = sadd.s32 %s849, 1
    %p853 = scmp.eq.s32.totalorder %s133, 1
    %p854 = scmp.ne.s32.totalorder %s849, %s851
    %p855 = scmp.eq.s32.totalorder %s133, 0
    %p856 = por %p854, %p855
    %p857 = scmp.ne.s32.totalorder %s849, %s851
    %p858 = scmp.eq.s32.totalorder %s138, 1
    %p859 = por %p857, %p858
    %p860 = scmp.ne.s32.totalorder %s851, %s852
    %p861 = scmp.eq.s32.totalorder %s138, 0
    %p862 = por %p860, %p861
    %p863 = scmp.ne.s32.totalorder %s851, %s852
    %p864 = scmp.eq.s32.totalorder %s139, 1
    %p865 = por %p863, %p864
    %p867 = scmp.ne.s32.totalorder %s852, %s866
    %p868 = scmp.eq.s32.totalorder %s139, 0
    %p869 = por %p867, %p868
    %s871 = sadd.s32 %s870, 1
    %p874 = scmp.eq.s32.totalorder %s133, 1
    %p875 = scmp.ne.s32.totalorder %s870, %s872
    %p876 = scmp.eq.s32.totalorder %s133, 0
    %p877 = por %p875, %p876
    %p878 = scmp.ne.s32.totalorder %s870, %s872
    %p879 = scmp.eq.s32.totalorder %s138, 1
    %p880 = por %p878, %p879
    %p881 = scmp.ne.s32.totalorder %s872, %s873
    %p882 = scmp.eq.s32.totalorder %s138, 0
    %p883 = por %p881, %p882
    %p884 = scmp.ne.s32.totalorder %s872, %s873
    %p885 = scmp.eq.s32.totalorder %s139, 1
    %p886 = por %p884, %p885
    %p888 = scmp.ne.s32.totalorder %s873, %s887
    %p889 = scmp.eq.s32.totalorder %s139, 0
    %p890 = por %p888, %p889
    %s892 = sadd.s32 %s891, 1
    %p895 = scmp.eq.s32.totalorder %s133, 1
    %p896 = scmp.ne.s32.totalorder %s891, %s893
    %p897 = scmp.eq.s32.totalorder %s133, 0
    %p898 = por %p896, %p897
    %p899 = scmp.ne.s32.totalorder %s891, %s893
    %p900 = scmp.eq.s32.totalorder %s138, 1
    %p901 = por %p899, %p900
    %p902 = scmp.ne.s32.totalorder %s893, %s894
    %p903 = scmp.eq.s32.totalorder %s138, 0
    %p904 = por %p902, %p903
    %p905 = scmp.ne.s32.totalorder %s893, %s894
    %p906 = scmp.eq.s32.totalorder %s139, 1
    %p907 = por %p905, %p906
    %p909 = scmp.ne.s32.totalorder %s894, %s908
    %p910 = scmp.eq.s32.totalorder %s139, 0
    %p911 = por %p909, %p910
    %s913 = sadd.s32 %s912, 1
    %p916 = scmp.eq.s32.totalorder %s133, 1
    %p917 = scmp.ne.s32.totalorder %s912, %s914
    %p918 = scmp.eq.s32.totalorder %s133, 0
    %p919 = por %p917, %p918
    %p920 = scmp.ne.s32.totalorder %s912, %s914
    %p921 = scmp.eq.s32.totalorder %s138, 1
    %p922 = por %p920, %p921
    %p923 = scmp.ne.s32.totalorder %s914, %s915
    %p924 = scmp.eq.s32.totalorder %s138, 0
    %p925 = por %p923, %p924
    %p926 = scmp.ne.s32.totalorder %s914, %s915
    %p927 = scmp.eq.s32.totalorder %s139, 1
    %p928 = por %p926, %p927
    %p930 = scmp.ne.s32.totalorder %s915, %s929
    %p931 = scmp.eq.s32.totalorder %s139, 0
    %p932 = por %p930, %p931
    %s934 = sadd.s32 %s933, 1
    %p937 = scmp.eq.s32.totalorder %s133, 1
    %p938 = scmp.ne.s32.totalorder %s933, %s935
    %p939 = scmp.eq.s32.totalorder %s133, 0
    %p940 = por %p938, %p939
    %p941 = scmp.ne.s32.totalorder %s933, %s935
    %p942 = scmp.eq.s32.totalorder %s138, 1
    %p943 = por %p941, %p942
    %p944 = scmp.ne.s32.totalorder %s935, %s936
    %p945 = scmp.eq.s32.totalorder %s138, 0
    %p946 = por %p944, %p945
    %p947 = scmp.ne.s32.totalorder %s935, %s936
    %p948 = scmp.eq.s32.totalorder %s139, 1
    %p949 = por %p947, %p948
    %p951 = scmp.ne.s32.totalorder %s936, %s950
    %p952 = scmp.eq.s32.totalorder %s139, 0
    %p953 = por %p951, %p952
    %s955 = sadd.s32 %s954, 1
    %p958 = scmp.eq.s32.totalorder %s133, 1
    %p959 = scmp.ne.s32.totalorder %s954, %s956
    %p960 = scmp.eq.s32.totalorder %s133, 0
    %p961 = por %p959, %p960
    %p962 = scmp.ne.s32.totalorder %s954, %s956
    %p963 = scmp.eq.s32.totalorder %s138, 1
    %p964 = por %p962, %p963
    %p965 = scmp.ne.s32.totalorder %s956, %s957
    %p966 = scmp.eq.s32.totalorder %s138, 0
    %p967 = por %p965, %p966
    %p968 = scmp.ne.s32.totalorder %s956, %s957
    %p969 = scmp.eq.s32.totalorder %s139, 1
    %p970 = por %p968, %p969
    %p972 = scmp.ne.s32.totalorder %s957, %s971
    %p973 = scmp.eq.s32.totalorder %s139, 0
    %p974 = por %p972, %p973
    %s976 = sadd.s32 %s975, 1
    %p979 = scmp.eq.s32.totalorder %s133, 1
    %p980 = scmp.ne.s32.totalorder %s975, %s977
    %p981 = scmp.eq.s32.totalorder %s133, 0
    %p982 = por %p980, %p981
    %p983 = scmp.ne.s32.totalorder %s975, %s977
    %p984 = scmp.eq.s32.totalorder %s138, 1
    %p985 = por %p983, %p984
    %p986 = scmp.ne.s32.totalorder %s977, %s978
    %p987 = scmp.eq.s32.totalorder %s138, 0
    %p988 = por %p986, %p987
    %p989 = scmp.ne.s32.totalorder %s977, %s978
    %p990 = scmp.eq.s32.totalorder %s139, 1
    %p991 = por %p989, %p990
    %p993 = scmp.ne.s32.totalorder %s978, %s992
    %p994 = scmp.eq.s32.totalorder %s139, 0
    %p995 = por %p993, %p994
    %s997 = sadd.s32 %s996, 1
    %p1000 = scmp.eq.s32.totalorder %s133, 1
    %p1001 = scmp.ne.s32.totalorder %s996, %s998
    %p1002 = scmp.eq.s32.totalorder %s133, 0
    %p1003 = por %p1001, %p1002
    %p1004 = scmp.ne.s32.totalorder %s996, %s998
    %p1005 = scmp.eq.s32.totalorder %s138, 1
    %p1006 = por %p1004, %p1005
    %p1007 = scmp.ne.s32.totalorder %s998, %s999
    %p1008 = scmp.eq.s32.totalorder %s138, 0
    %p1009 = por %p1007, %p1008
    %p1010 = scmp.ne.s32.totalorder %s998, %s999
    %p1011 = scmp.eq.s32.totalorder %s139, 1
    %p1012 = por %p1010, %p1011
    %p1014 = scmp.ne.s32.totalorder %s999, %s1013
    %p1015 = scmp.eq.s32.totalorder %s139, 0
    %p1016 = por %p1014, %p1015
    %s1018 = sadd.s32 %s1017, 1
    %p1021 = scmp.eq.s32.totalorder %s133, 1
    %p1022 = scmp.ne.s32.totalorder %s1017, %s1019
    %p1023 = scmp.eq.s32.totalorder %s133, 0
    %p1024 = por %p1022, %p1023
    %p1025 = scmp.ne.s32.totalorder %s1017, %s1019
    %p1026 = scmp.eq.s32.totalorder %s138, 1
    %p1027 = por %p1025, %p1026
    %p1028 = scmp.ne.s32.totalorder %s1019, %s1020
    %p1029 = scmp.eq.s32.totalorder %s138, 0
    %p1030 = por %p1028, %p1029
    %p1031 = scmp.ne.s32.totalorder %s1019, %s1020
    %p1032 = scmp.eq.s32.totalorder %s139, 1
    %p1033 = por %p1031, %p1032
    %p1035 = scmp.ne.s32.totalorder %s1020, %s1034
    %p1036 = scmp.eq.s32.totalorder %s139, 0
    %p1037 = por %p1035, %p1036
    %s1039 = sadd.s32 %s1038, 1
    %p1042 = scmp.eq.s32.totalorder %s133, 1
    %p1043 = scmp.ne.s32.totalorder %s1038, %s1040
    %p1044 = scmp.eq.s32.totalorder %s133, 0
    %p1045 = por %p1043, %p1044
    %p1046 = scmp.ne.s32.totalorder %s1038, %s1040
    %p1047 = scmp.eq.s32.totalorder %s138, 1
    %p1048 = por %p1046, %p1047
    %p1049 = scmp.ne.s32.totalorder %s1040, %s1041
    %p1050 = scmp.eq.s32.totalorder %s138, 0
    %p1051 = por %p1049, %p1050
    %p1052 = scmp.ne.s32.totalorder %s1040, %s1041
    %p1053 = scmp.eq.s32.totalorder %s139, 1
    %p1054 = por %p1052, %p1053
    %p1056 = scmp.ne.s32.totalorder %s1041, %s1055
    %p1057 = scmp.eq.s32.totalorder %s139, 0
    %p1058 = por %p1056, %p1057
    %s1060 = sadd.s32 %s1059, 1
    %p1063 = scmp.eq.s32.totalorder %s133, 1
    %p1064 = scmp.ne.s32.totalorder %s1059, %s1061
    %p1065 = scmp.eq.s32.totalorder %s133, 0
    %p1066 = por %p1064, %p1065
    %p1067 = scmp.ne.s32.totalorder %s1059, %s1061
    %p1068 = scmp.eq.s32.totalorder %s138, 1
    %p1069 = por %p1067, %p1068
    %p1070 = scmp.ne.s32.totalorder %s1061, %s1062
    %p1071 = scmp.eq.s32.totalorder %s138, 0
    %p1072 = por %p1070, %p1071
    %p1073 = scmp.ne.s32.totalorder %s1061, %s1062
    %p1074 = scmp.eq.s32.totalorder %s139, 1
    %p1075 = por %p1073, %p1074
    %p1077 = scmp.ne.s32.totalorder %s1062, %s1076
    %p1078 = scmp.eq.s32.totalorder %s139, 0
    %p1079 = por %p1077, %p1078
    %s1081 = sadd.s32 %s1080, 1
    %p1084 = scmp.eq.s32.totalorder %s133, 1
    %p1085 = scmp.ne.s32.totalorder %s1080, %s1082
    %p1086 = scmp.eq.s32.totalorder %s133, 0
    %p1087 = por %p1085, %p1086
    %p1088 = scmp.ne.s32.totalorder %s1080, %s1082
    %p1089 = scmp.eq.s32.totalorder %s138, 1
    %p1090 = por %p1088, %p1089
    %p1091 = scmp.ne.s32.totalorder %s1082, %s1083
    %p1092 = scmp.eq.s32.totalorder %s138, 0
    %p1093 = por %p1091, %p1092
    %p1094 = scmp.ne.s32.totalorder %s1082, %s1083
    %p1095 = scmp.eq.s32.totalorder %s139, 1
    %p1096 = por %p1094, %p1095
    %p1098 = scmp.ne.s32.totalorder %s1083, %s1097
    %p1099 = scmp.eq.s32.totalorder %s139, 0
    %p1100 = por %p1098, %p1099
    %s1102 = sadd.s32 %s1101, 1
    %p1105 = scmp.eq.s32.totalorder %s133, 1
    %p1106 = scmp.ne.s32.totalorder %s1101, %s1103
    %p1107 = scmp.eq.s32.totalorder %s133, 0
    %p1108 = por %p1106, %p1107
    %p1109 = scmp.ne.s32.totalorder %s1101, %s1103
    %p1110 = scmp.eq.s32.totalorder %s138, 1
    %p1111 = por %p1109, %p1110
    %p1112 = scmp.ne.s32.totalorder %s1103, %s1104
    %p1113 = scmp.eq.s32.totalorder %s138, 0
    %p1114 = por %p1112, %p1113
    %p1115 = scmp.ne.s32.totalorder %s1103, %s1104
    %p1116 = scmp.eq.s32.totalorder %s139, 1
    %p1117 = por %p1115, %p1116
    %p1119 = scmp.ne.s32.totalorder %s1104, %s1118
    %p1120 = scmp.eq.s32.totalorder %s139, 0
    %p1121 = por %p1119, %p1120
    %s1123 = sadd.s32 %s1122, 1
    %p1126 = scmp.eq.s32.totalorder %s133, 1
    %p1127 = scmp.ne.s32.totalorder %s1122, %s1124
    %p1128 = scmp.eq.s32.totalorder %s133, 0
    %p1129 = por %p1127, %p1128
    %p1130 = scmp.ne.s32.totalorder %s1122, %s1124
    %p1131 = scmp.eq.s32.totalorder %s138, 1
    %p1132 = por %p1130, %p1131
    %p1133 = scmp.ne.s32.totalorder %s1124, %s1125
    %p1134 = scmp.eq.s32.totalorder %s138, 0
    %p1135 = por %p1133, %p1134
    %p1136 = scmp.ne.s32.totalorder %s1124, %s1125
    %p1137 = scmp.eq.s32.totalorder %s139, 1
    %p1138 = por %p1136, %p1137
    %p1140 = scmp.ne.s32.totalorder %s1125, %s1139
    %p1141 = scmp.eq.s32.totalorder %s139, 0
    %p1142 = por %p1140, %p1141
    %s1144 = sadd.s32 %s1143, 1
    %p1147 = scmp.eq.s32.totalorder %s133, 1
    %p1148 = scmp.ne.s32.totalorder %s1143, %s1145
    %p1149 = scmp.eq.s32.totalorder %s133, 0
    %p1150 = por %p1148, %p1149
    %p1151 = scmp.ne.s32.totalorder %s1143, %s1145
    %p1152 = scmp.eq.s32.totalorder %s138, 1
    %p1153 = por %p1151, %p1152
    %p1154 = scmp.ne.s32.totalorder %s1145, %s1146
    %p1155 = scmp.eq.s32.totalorder %s138, 0
    %p1156 = por %p1154, %p1155
    %p1157 = scmp.ne.s32.totalorder %s1145, %s1146
    %p1158 = scmp.eq.s32.totalorder %s139, 1
    %p1159 = por %p1157, %p1158
    %p1161 = scmp.ne.s32.totalorder %s1146, %s1160
    %p1162 = scmp.eq.s32.totalorder %s139, 0
    %p1163 = por %p1161, %p1162
    %s1165 = sadd.s32 %s1164, 1
    %p1168 = scmp.eq.s32.totalorder %s133, 1
    %p1169 = scmp.ne.s32.totalorder %s1164, %s1166
    %p1170 = scmp.eq.s32.totalorder %s133, 0
    %p1171 = por %p1169, %p1170
    %p1172 = scmp.ne.s32.totalorder %s1164, %s1166
    %p1173 = scmp.eq.s32.totalorder %s138, 1
    %p1174 = por %p1172, %p1173
    %p1175 = scmp.ne.s32.totalorder %s1166, %s1167
    %p1176 = scmp.eq.s32.totalorder %s138, 0
    %p1177 = por %p1175, %p1176
    %p1178 = scmp.ne.s32.totalorder %s1166, %s1167
    %p1179 = scmp.eq.s32.totalorder %s139, 1
    %p1180 = por %p1178, %p1179
    %p1182 = scmp.ne.s32.totalorder %s1167, %s1181
    %p1183 = scmp.eq.s32.totalorder %s139, 0
    %p1184 = por %p1182, %p1183
    %s1186 = sadd.s32 %s1185, 1
    %p1189 = scmp.eq.s32.totalorder %s133, 1
    %p1190 = scmp.ne.s32.totalorder %s1185, %s1187
    %p1191 = scmp.eq.s32.totalorder %s133, 0
    %p1192 = por %p1190, %p1191
    %p1193 = scmp.ne.s32.totalorder %s1185, %s1187
    %p1194 = scmp.eq.s32.totalorder %s138, 1
    %p1195 = por %p1193, %p1194
    %p1196 = scmp.ne.s32.totalorder %s1187, %s1188
    %p1197 = scmp.eq.s32.totalorder %s138, 0
    %p1198 = por %p1196, %p1197
    %p1199 = scmp.ne.s32.totalorder %s1187, %s1188
    %p1200 = scmp.eq.s32.totalorder %s139, 1
    %p1201 = por %p1199, %p1200
    %p1203 = scmp.ne.s32.totalorder %s1188, %s1202
    %p1204 = scmp.eq.s32.totalorder %s139, 0
    %p1205 = por %p1203, %p1204
    %s1207 = sadd.s32 %s1206, 1
    %p1210 = scmp.eq.s32.totalorder %s133, 1
    %p1211 = scmp.ne.s32.totalorder %s1206, %s1208
    %p1212 = scmp.eq.s32.totalorder %s133, 0
    %p1213 = por %p1211, %p1212
    %p1214 = scmp.ne.s32.totalorder %s1206, %s1208
    %p1215 = scmp.eq.s32.totalorder %s138, 1
    %p1216 = por %p1214, %p1215
    %p1217 = scmp.ne.s32.totalorder %s1208, %s1209
    %p1218 = scmp.eq.s32.totalorder %s138, 0
    %p1219 = por %p1217, %p1218
    %p1220 = scmp.ne.s32.totalorder %s1208, %s1209
    %p1221 = scmp.eq.s32.totalorder %s139, 1
    %p1222 = por %p1220, %p1221
    %p1224 = scmp.ne.s32.totalorder %s1209, %s1223
    %p1225 = scmp.eq.s32.totalorder %s139, 0
    %p1226 = por %p1224, %p1225
    %s1228 = sadd.s32 %s1227, 1
    %p1231 = scmp.eq.s32.totalorder %s133, 1
    %p1232 = scmp.ne.s32.totalorder %s1227, %s1229
    %p1233 = scmp.eq.s32.totalorder %s133, 0
    %p1234 = por %p1232, %p1233
    %p1235 = scmp.ne.s32.totalorder %s1227, %s1229
    %p1236 = scmp.eq.s32.totalorder %s138, 1
    %p1237 = por %p1235, %p1236
    %p1238 = scmp.ne.s32.totalorder %s1229, %s1230
    %p1239 = scmp.eq.s32.totalorder %s138, 0
    %p1240 = por %p1238, %p1239
    %p1241 = scmp.ne.s32.totalorder %s1229, %s1230
    %p1242 = scmp.eq.s32.totalorder %s139, 1
    %p1243 = por %p1241, %p1242
    %p1245 = scmp.ne.s32.totalorder %s1230, %s1244
    %p1246 = scmp.eq.s32.totalorder %s139, 0
    %p1247 = por %p1245, %p1246
    %s1249 = sadd.s32 %s1248, 1
    %p1252 = scmp.eq.s32.totalorder %s133, 1
    %p1253 = scmp.ne.s32.totalorder %s1248, %s1250
    %p1254 = scmp.eq.s32.totalorder %s133, 0
    %p1255 = por %p1253, %p1254
    %p1256 = scmp.ne.s32.totalorder %s1248, %s1250
    %p1257 = scmp.eq.s32.totalorder %s138, 1
    %p1258 = por %p1256, %p1257
    %p1259 = scmp.ne.s32.totalorder %s1250, %s1251
    %p1260 = scmp.eq.s32.totalorder %s138, 0
    %p1261 = por %p1259, %p1260
    %p1262 = scmp.ne.s32.totalorder %s1250, %s1251
    %p1263 = scmp.eq.s32.totalorder %s139, 1
    %p1264 = por %p1262, %p1263
    %p1266 = scmp.ne.s32.totalorder %s1251, %s1265
    %p1267 = scmp.eq.s32.totalorder %s139, 0
    %p1268 = por %p1266, %p1267
    %s1270 = sadd.s32 %s1269, 1
    %p1273 = scmp.eq.s32.totalorder %s133, 1
    %p1274 = scmp.ne.s32.totalorder %s1269, %s1271
    %p1275 = scmp.eq.s32.totalorder %s133, 0
    %p1276 = por %p1274, %p1275
    %p1277 = scmp.ne.s32.totalorder %s1269, %s1271
    %p1278 = scmp.eq.s32.totalorder %s138, 1
    %p1279 = por %p1277, %p1278
    %p1280 = scmp.ne.s32.totalorder %s1271, %s1272
    %p1281 = scmp.eq.s32.totalorder %s138, 0
    %p1282 = por %p1280, %p1281
    %p1283 = scmp.ne.s32.totalorder %s1271, %s1272
    %p1284 = scmp.eq.s32.totalorder %s139, 1
    %p1285 = por %p1283, %p1284
    %p1287 = scmp.ne.s32.totalorder %s1272, %s1286
    %p1288 = scmp.eq.s32.totalorder %s139, 0
    %p1289 = por %p1287, %p1288
    %s1291 = sadd.s32 %s1290, 1
    %p1294 = scmp.eq.s32.totalorder %s133, 1
    %p1295 = scmp.ne.s32.totalorder %s1290, %s1292
    %p1296 = scmp.eq.s32.totalorder %s133, 0
    %p1297 = por %p1295, %p1296
    %p1298 = scmp.ne.s32.totalorder %s1290, %s1292
    %p1299 = scmp.eq.s32.totalorder %s138, 1
    %p1300 = por %p1298, %p1299
    %p1301 = scmp.ne.s32.totalorder %s1292, %s1293
    %p1302 = scmp.eq.s32.totalorder %s138, 0
    %p1303 = por %p1301, %p1302
    %p1304 = scmp.ne.s32.totalorder %s1292, %s1293
    %p1305 = scmp.eq.s32.totalorder %s139, 1
    %p1306 = por %p1304, %p1305
    %p1308 = scmp.ne.s32.totalorder %s1293, %s1307
    %p1309 = scmp.eq.s32.totalorder %s139, 0
    %p1310 = por %p1308, %p1309
    %s1312 = sadd.s32 %s1311, 1
    %p1315 = scmp.eq.s32.totalorder %s133, 1
    %p1316 = scmp.ne.s32.totalorder %s1311, %s1313
    %p1317 = scmp.eq.s32.totalorder %s133, 0
    %p1318 = por %p1316, %p1317
    %p1319 = scmp.ne.s32.totalorder %s1311, %s1313
    %p1320 = scmp.eq.s32.totalorder %s138, 1
    %p1321 = por %p1319, %p1320
    %p1322 = scmp.ne.s32.totalorder %s1313, %s1314
    %p1323 = scmp.eq.s32.totalorder %s138, 0
    %p1324 = por %p1322, %p1323
    %p1325 = scmp.ne.s32.totalorder %s1313, %s1314
    %p1326 = scmp.eq.s32.totalorder %s139, 1
    %p1327 = por %p1325, %p1326
    %p1329 = scmp.ne.s32.totalorder %s1314, %s1328
    %p1330 = scmp.eq.s32.totalorder %s139, 0
    %p1331 = por %p1329, %p1330
    %s1333 = sadd.s32 %s1332, 1
    %p1336 = scmp.eq.s32.totalorder %s133, 1
    %p1337 = scmp.ne.s32.totalorder %s1332, %s1334
    %p1338 = scmp.eq.s32.totalorder %s133, 0
    %p1339 = por %p1337, %p1338
    %p1340 = scmp.ne.s32.totalorder %s1332, %s1334
    %p1341 = scmp.eq.s32.totalorder %s138, 1
    %p1342 = por %p1340, %p1341
    %p1343 = scmp.ne.s32.totalorder %s1334, %s1335
    %p1344 = scmp.eq.s32.totalorder %s138, 0
    %p1345 = por %p1343, %p1344
    %p1346 = scmp.ne.s32.totalorder %s1334, %s1335
    %p1347 = scmp.eq.s32.totalorder %s139, 1
    %p1348 = por %p1346, %p1347
    %p1350 = scmp.ne.s32.totalorder %s1335, %s1349
    %p1351 = scmp.eq.s32.totalorder %s139, 0
    %p1352 = por %p1350, %p1351
    %s1354 = sadd.s32 %s1353, 1
    %p1357 = scmp.eq.s32.totalorder %s133, 1
    %p1358 = scmp.ne.s32.totalorder %s1353, %s1355
    %p1359 = scmp.eq.s32.totalorder %s133, 0
    %p1360 = por %p1358, %p1359
    %p1361 = scmp.ne.s32.totalorder %s1353, %s1355
    %p1362 = scmp.eq.s32.totalorder %s138, 1
    %p1363 = por %p1361, %p1362
    %p1364 = scmp.ne.s32.totalorder %s1355, %s1356
    %p1365 = scmp.eq.s32.totalorder %s138, 0
    %p1366 = por %p1364, %p1365
    %p1367 = scmp.ne.s32.totalorder %s1355, %s1356
    %p1368 = scmp.eq.s32.totalorder %s139, 1
    %p1369 = por %p1367, %p1368
    %p1371 = scmp.ne.s32.totalorder %s1356, %s1370
    %p1372 = scmp.eq.s32.totalorder %s139, 0
    %p1373 = por %p1371, %p1372
    %s1375 = sadd.s32 %s1374, 1
    %p1378 = scmp.eq.s32.totalorder %s133, 1
    %p1379 = scmp.ne.s32.totalorder %s1374, %s1376
    %p1380 = scmp.eq.s32.totalorder %s133, 0
    %p1381 = por %p1379, %p1380
    %p1382 = scmp.ne.s32.totalorder %s1374, %s1376
    %p1383 = scmp.eq.s32.totalorder %s138, 1
    %p1384 = por %p1382, %p1383
    %p1385 = scmp.ne.s32.totalorder %s1376, %s1377
    %p1386 = scmp.eq.s32.totalorder %s138, 0
    %p1387 = por %p1385, %p1386
    %p1388 = scmp.ne.s32.totalorder %s1376, %s1377
    %p1389 = scmp.eq.s32.totalorder %s139, 1
    %p1390 = por %p1388, %p1389
    %p1392 = scmp.ne.s32.totalorder %s1377, %s1391
    %p1393 = scmp.eq.s32.totalorder %s139, 0
    %p1394 = por %p1392, %p1393
    %s1396 = sadd.s32 %s1395, 1
    %p1399 = scmp.eq.s32.totalorder %s133, 1
    %p1400 = scmp.ne.s32.totalorder %s1395, %s1397
    %p1401 = scmp.eq.s32.totalorder %s133, 0
    %p1402 = por %p1400, %p1401
    %p1403 = scmp.ne.s32.totalorder %s1395, %s1397
    %p1404 = scmp.eq.s32.totalorder %s138, 1
    %p1405 = por %p1403, %p1404
    %p1406 = scmp.ne.s32.totalorder %s1397, %s1398
    %p1407 = scmp.eq.s32.totalorder %s138, 0
    %p1408 = por %p1406, %p1407
    %p1409 = scmp.ne.s32.totalorder %s1397, %s1398
    %p1410 = scmp.eq.s32.totalorder %s139, 1
    %p1411 = por %p1409, %p1410
    %p1413 = scmp.ne.s32.totalorder %s1398, %s1412
    %p1414 = scmp.eq.s32.totalorder %s139, 0
    %p1415 = por %p1413, %p1414
    %s1417 = sadd.s32 %s1416, 1
    %p1420 = scmp.eq.s32.totalorder %s133, 1
    %p1421 = scmp.ne.s32.totalorder %s1416, %s1418
    %p1422 = scmp.eq.s32.totalorder %s133, 0
    %p1423 = por %p1421, %p1422
    %p1424 = scmp.ne.s32.totalorder %s1416, %s1418
    %p1425 = scmp.eq.s32.totalorder %s138, 1
    %p1426 = por %p1424, %p1425
    %p1427 = scmp.ne.s32.totalorder %s1418, %s1419
    %p1428 = scmp.eq.s32.totalorder %s138, 0
    %p1429 = por %p1427, %p1428
    %p1430 = scmp.ne.s32.totalorder %s1418, %s1419
    %p1431 = scmp.eq.s32.totalorder %s139, 1
    %p1432 = por %p1430, %p1431
    %p1434 = scmp.ne.s32.totalorder %s1419, %s1433
    %p1435 = scmp.eq.s32.totalorder %s139, 0
    %p1436 = por %p1434, %p1435
    %s1438 = sadd.s32 %s1437, 1
    %p1441 = scmp.eq.s32.totalorder %s133, 1
    %p1442 = scmp.ne.s32.totalorder %s1437, %s1439
    %p1443 = scmp.eq.s32.totalorder %s133, 0
    %p1444 = por %p1442, %p1443
    %p1445 = scmp.ne.s32.totalorder %s1437, %s1439
    %p1446 = scmp.eq.s32.totalorder %s138, 1
    %p1447 = por %p1445, %p1446
    %p1448 = scmp.ne.s32.totalorder %s1439, %s1440
    %p1449 = scmp.eq.s32.totalorder %s138, 0
    %p1450 = por %p1448, %p1449
    %p1451 = scmp.ne.s32.totalorder %s1439, %s1440
    %p1452 = scmp.eq.s32.totalorder %s139, 1
    %p1453 = por %p1451, %p1452
    %p1455 = scmp.ne.s32.totalorder %s1440, %s1454
    %p1456 = scmp.eq.s32.totalorder %s139, 0
    %p1457 = por %p1455, %p1456
    %s1459 = sadd.s32 %s1458, 1
    %p1462 = scmp.eq.s32.totalorder %s133, 1
    %p1463 = scmp.ne.s32.totalorder %s1458, %s1460
    %p1464 = scmp.eq.s32.totalorder %s133, 0
    %p1465 = por %p1463, %p1464
    %p1466 = scmp.ne.s32.totalorder %s1458, %s1460
    %p1467 = scmp.eq.s32.totalorder %s138, 1
    %p1468 = por %p1466, %p1467
    %p1469 = scmp.ne.s32.totalorder %s1460, %s1461
    %p1470 = scmp.eq.s32.totalorder %s138, 0
    %p1471 = por %p1469, %p1470
    %p1472 = scmp.ne.s32.totalorder %s1460, %s1461
    %p1473 = scmp.eq.s32.totalorder %s139, 1
    %p1474 = por %p1472, %p1473
    %p1476 = scmp.ne.s32.totalorder %s1461, %s1475
    %p1477 = scmp.eq.s32.totalorder %s139, 0
    %p1478 = por %p1476, %p1477
    %s1479 = ssub.s32 %s133, %s140
    %p1480 = scmp.eq.s32.totalorder %s1479, 0
    %s1482 = sadd.s32 %s1481, 1
    %s1483 = scalar_select %p1480, %s1481, %s1482
    %p1486 = pneg %p1480
    %p1487 = scmp.eq.s32.totalorder %s133, 1
    %p1488 = por %p1486, %p1487
    %p1489 = scmp.ne.s32.totalorder %s1481, %s1484
    %p1490 = scmp.eq.s32.totalorder %s133, 0
    %p1491 = por %p1489, %p1490
    %p1492 = scmp.ne.s32.totalorder %s1481, %s1484
    %p1493 = scmp.eq.s32.totalorder %s138, 1
    %p1494 = por %p1492, %p1493
    %p1495 = scmp.ne.s32.totalorder %s1484, %s1485
    %p1496 = scmp.eq.s32.totalorder %s138, 0
    %p1497 = por %p1495, %p1496
    %p1498 = scmp.ne.s32.totalorder %s1484, %s1485
    %p1499 = scmp.eq.s32.totalorder %s139, 1
    %p1500 = por %p1498, %p1499
    %p1502 = scmp.ne.s32.totalorder %s1485, %s1501
    %p1503 = scmp.eq.s32.totalorder %s139, 0
    %p1504 = por %p1502, %p1503
    %p1505 = scmp.le.s32.totalorder 1, %s133
    %p1506 = scmp.lt.s32.totalorder %s133, 3
    %p1507 = pnand %p1505, %p1506
    %p1508 = pneg %p1507
    // Predicated region
    $region9: #{densewave_forward.1} parent=5 // pred_check
      _
    $region10: #{densewave_forward.1} parent=5 // pred_check_branch
      %1510 = sbr.rel (%p1507) target = $region12
    $region11: #{densewave_forward.1} parent=5 // pred_region
      %s1511 = ssub.s32 %s133, 1
      // Predicated region
      $region13: #{densewave_forward.1} parent=11 // pred_check
        %p1512 = pneg %p232
      $region14: #{densewave_forward.1} parent=11 // pred_check_branch
        %1514 = sbr.rel (%p1512) target = $region16
      $region15: #{densewave_forward.1} parent=11 // pred_region
        _
      $region16: #{densewave_forward.1} parent=11 // pred_fallthru
        _
      // Predicated region
      $region17: #{densewave_forward.1} parent=11 // pred_check
        %p1515 = pneg %p253
      $region18: #{densewave_forward.1} parent=11 // pred_check_branch
        %1517 = sbr.rel (%p1515) target = $region20
      $region19: #{densewave_forward.1} parent=11 // pred_region
        _
      $region20: #{densewave_forward.1} parent=11 // pred_fallthru
        _
      // Predicated region
      $region21: #{densewave_forward.1} parent=11 // pred_check
        %p1518 = pneg %p274
      $region22: #{densewave_forward.1} parent=11 // pred_check_branch
        %1520 = sbr.rel (%p1518) target = $region24
      $region23: #{densewave_forward.1} parent=11 // pred_region
        _
      $region24: #{densewave_forward.1} parent=11 // pred_fallthru
        _
      // Predicated region
      $region25: #{densewave_forward.1} parent=11 // pred_check
        %p1521 = pneg %p295
      $region26: #{densewave_forward.1} parent=11 // pred_check_branch
        %1523 = sbr.rel (%p1521) target = $region28
      $region27: #{densewave_forward.1} parent=11 // pred_region
        _
      $region28: #{densewave_forward.1} parent=11 // pred_fallthru
        _
      // Predicated region
      $region29: #{densewave_forward.1} parent=11 // pred_check
        %p1524 = pneg %p316
      $region30: #{densewave_forward.1} parent=11 // pred_check_branch
        %1526 = sbr.rel (%p1524) target = $region32
      $region31: #{densewave_forward.1} parent=11 // pred_region
        _
      $region32: #{densewave_forward.1} parent=11 // pred_fallthru
        _
      // Predicated region
      $region33: #{densewave_forward.1} parent=11 // pred_check
        %p1527 = pneg %p337
      $region34: #{densewave_forward.1} parent=11 // pred_check_branch
        %1529 = sbr.rel (%p1527) target = $region36
      $region35: #{densewave_forward.1} parent=11 // pred_region
        _
      $region36: #{densewave_forward.1} parent=11 // pred_fallthru
        _
      // Predicated region
      $region37: #{densewave_forward.1} parent=11 // pred_check
        %p1530 = pneg %p358
      $region38: #{densewave_forward.1} parent=11 // pred_check_branch
        %1532 = sbr.rel (%p1530) target = $region40
      $region39: #{densewave_forward.1} parent=11 // pred_region
        _
      $region40: #{densewave_forward.1} parent=11 // pred_fallthru
        _
      // Predicated region
      $region41: #{densewave_forward.1} parent=11 // pred_check
        %p1533 = pneg %p379
      $region42: #{densewave_forward.1} parent=11 // pred_check_branch
        %1535 = sbr.rel (%p1533) target = $region44
      $region43: #{densewave_forward.1} parent=11 // pred_region
        _
      $region44: #{densewave_forward.1} parent=11 // pred_fallthru
        _
      // Predicated region
      $region45: #{densewave_forward.1} parent=11 // pred_check
        %p1536 = pneg %p400
      $region46: #{densewave_forward.1} parent=11 // pred_check_branch
        %1538 = sbr.rel (%p1536) target = $region48
      $region47: #{densewave_forward.1} parent=11 // pred_region
        _
      $region48: #{densewave_forward.1} parent=11 // pred_fallthru
        _
      // Predicated region
      $region49: #{densewave_forward.1} parent=11 // pred_check
        %p1539 = pneg %p421
      $region50: #{densewave_forward.1} parent=11 // pred_check_branch
        %1541 = sbr.rel (%p1539) target = $region52
      $region51: #{densewave_forward.1} parent=11 // pred_region
        _
      $region52: #{densewave_forward.1} parent=11 // pred_fallthru
        _
      // Predicated region
      $region53: #{densewave_forward.1} parent=11 // pred_check
        %p1542 = pneg %p442
      $region54: #{densewave_forward.1} parent=11 // pred_check_branch
        %1544 = sbr.rel (%p1542) target = $region56
      $region55: #{densewave_forward.1} parent=11 // pred_region
        _
      $region56: #{densewave_forward.1} parent=11 // pred_fallthru
        _
      // Predicated region
      $region57: #{densewave_forward.1} parent=11 // pred_check
        %p1545 = pneg %p463
      $region58: #{densewave_forward.1} parent=11 // pred_check_branch
        %1547 = sbr.rel (%p1545) target = $region60
      $region59: #{densewave_forward.1} parent=11 // pred_region
        _
      $region60: #{densewave_forward.1} parent=11 // pred_fallthru
        _
      // Predicated region
      $region61: #{densewave_forward.1} parent=11 // pred_check
        %p1548 = pneg %p484
      $region62: #{densewave_forward.1} parent=11 // pred_check_branch
        %1550 = sbr.rel (%p1548) target = $region64
      $region63: #{densewave_forward.1} parent=11 // pred_region
        _
      $region64: #{densewave_forward.1} parent=11 // pred_fallthru
        _
      // Predicated region
      $region65: #{densewave_forward.1} parent=11 // pred_check
        %p1551 = pneg %p505
      $region66: #{densewave_forward.1} parent=11 // pred_check_branch
        %1553 = sbr.rel (%p1551) target = $region68
      $region67: #{densewave_forward.1} parent=11 // pred_region
        _
      $region68: #{densewave_forward.1} parent=11 // pred_fallthru
        _
      // Predicated region
      $region69: #{densewave_forward.1} parent=11 // pred_check
        %p1554 = pneg %p526
      $region70: #{densewave_forward.1} parent=11 // pred_check_branch
        %1556 = sbr.rel (%p1554) target = $region72
      $region71: #{densewave_forward.1} parent=11 // pred_region
        _
      $region72: #{densewave_forward.1} parent=11 // pred_fallthru
        _
      // Predicated region
      $region73: #{densewave_forward.1} parent=11 // pred_check
        %p1557 = pneg %p547
      $region74: #{densewave_forward.1} parent=11 // pred_check_branch
        %1559 = sbr.rel (%p1557) target = $region76
      $region75: #{densewave_forward.1} parent=11 // pred_region
        _
      $region76: #{densewave_forward.1} parent=11 // pred_fallthru
        _
      // Predicated region
      $region77: #{densewave_forward.1} parent=11 // pred_check
        %p1560 = pneg %p568
      $region78: #{densewave_forward.1} parent=11 // pred_check_branch
        %1562 = sbr.rel (%p1560) target = $region80
      $region79: #{densewave_forward.1} parent=11 // pred_region
        _
      $region80: #{densewave_forward.1} parent=11 // pred_fallthru
        _
      // Predicated region
      $region81: #{densewave_forward.1} parent=11 // pred_check
        %p1563 = pneg %p589
      $region82: #{densewave_forward.1} parent=11 // pred_check_branch
        %1565 = sbr.rel (%p1563) target = $region84
      $region83: #{densewave_forward.1} parent=11 // pred_region
        _
      $region84: #{densewave_forward.1} parent=11 // pred_fallthru
        _
      // Predicated region
      $region85: #{densewave_forward.1} parent=11 // pred_check
        %p1566 = pneg %p610
      $region86: #{densewave_forward.1} parent=11 // pred_check_branch
        %1568 = sbr.rel (%p1566) target = $region88
      $region87: #{densewave_forward.1} parent=11 // pred_region
        _
      $region88: #{densewave_forward.1} parent=11 // pred_fallthru
        _
      // Predicated region
      $region89: #{densewave_forward.1} parent=11 // pred_check
        %p1569 = pneg %p631
      $region90: #{densewave_forward.1} parent=11 // pred_check_branch
        %1571 = sbr.rel (%p1569) target = $region92
      $region91: #{densewave_forward.1} parent=11 // pred_region
        _
      $region92: #{densewave_forward.1} parent=11 // pred_fallthru
        _
      // Predicated region
      $region93: #{densewave_forward.1} parent=11 // pred_check
        %p1572 = pneg %p652
      $region94: #{densewave_forward.1} parent=11 // pred_check_branch
        %1574 = sbr.rel (%p1572) target = $region96
      $region95: #{densewave_forward.1} parent=11 // pred_region
        _
      $region96: #{densewave_forward.1} parent=11 // pred_fallthru
        _
      // Predicated region
      $region97: #{densewave_forward.1} parent=11 // pred_check
        %p1575 = pneg %p673
      $region98: #{densewave_forward.1} parent=11 // pred_check_branch
        %1577 = sbr.rel (%p1575) target = $region100
      $region99: #{densewave_forward.1} parent=11 // pred_region
        _
      $region100: #{densewave_forward.1} parent=11 // pred_fallthru
        _
      // Predicated region
      $region101: #{densewave_forward.1} parent=11 // pred_check
        %p1578 = pneg %p694
      $region102: #{densewave_forward.1} parent=11 // pred_check_branch
        %1580 = sbr.rel (%p1578) target = $region104
      $region103: #{densewave_forward.1} parent=11 // pred_region
        _
      $region104: #{densewave_forward.1} parent=11 // pred_fallthru
        _
      // Predicated region
      $region105: #{densewave_forward.1} parent=11 // pred_check
        %p1581 = pneg %p715
      $region106: #{densewave_forward.1} parent=11 // pred_check_branch
        %1583 = sbr.rel (%p1581) target = $region108
      $region107: #{densewave_forward.1} parent=11 // pred_region
        _
      $region108: #{densewave_forward.1} parent=11 // pred_fallthru
        _
      // Predicated region
      $region109: #{densewave_forward.1} parent=11 // pred_check
        %p1584 = pneg %p736
      $region110: #{densewave_forward.1} parent=11 // pred_check_branch
        %1586 = sbr.rel (%p1584) target = $region112
      $region111: #{densewave_forward.1} parent=11 // pred_region
        _
      $region112: #{densewave_forward.1} parent=11 // pred_fallthru
        _
      // Predicated region
      $region113: #{densewave_forward.1} parent=11 // pred_check
        %p1587 = pneg %p757
      $region114: #{densewave_forward.1} parent=11 // pred_check_branch
        %1589 = sbr.rel (%p1587) target = $region116
      $region115: #{densewave_forward.1} parent=11 // pred_region
        _
      $region116: #{densewave_forward.1} parent=11 // pred_fallthru
        _
      // Predicated region
      $region117: #{densewave_forward.1} parent=11 // pred_check
        %p1590 = pneg %p778
      $region118: #{densewave_forward.1} parent=11 // pred_check_branch
        %1592 = sbr.rel (%p1590) target = $region120
      $region119: #{densewave_forward.1} parent=11 // pred_region
        _
      $region120: #{densewave_forward.1} parent=11 // pred_fallthru
        _
      // Predicated region
      $region121: #{densewave_forward.1} parent=11 // pred_check
        %p1593 = pneg %p799
      $region122: #{densewave_forward.1} parent=11 // pred_check_branch
        %1595 = sbr.rel (%p1593) target = $region124
      $region123: #{densewave_forward.1} parent=11 // pred_region
        _
      $region124: #{densewave_forward.1} parent=11 // pred_fallthru
        _
      // Predicated region
      $region125: #{densewave_forward.1} parent=11 // pred_check
        %p1596 = pneg %p820
      $region126: #{densewave_forward.1} parent=11 // pred_check_branch
        %1598 = sbr.rel (%p1596) target = $region128
      $region127: #{densewave_forward.1} parent=11 // pred_region
        _
      $region128: #{densewave_forward.1} parent=11 // pred_fallthru
        _
      // Predicated region
      $region129: #{densewave_forward.1} parent=11 // pred_check
        %p1599 = pneg %p841
      $region130: #{densewave_forward.1} parent=11 // pred_check_branch
        %1601 = sbr.rel (%p1599) target = $region132
      $region131: #{densewave_forward.1} parent=11 // pred_region
        _
      $region132: #{densewave_forward.1} parent=11 // pred_fallthru
        _
      // Predicated region
      $region133: #{densewave_forward.1} parent=11 // pred_check
        %p1602 = pneg %p862
      $region134: #{densewave_forward.1} parent=11 // pred_check_branch
        %1604 = sbr.rel (%p1602) target = $region136
      $region135: #{densewave_forward.1} parent=11 // pred_region
        _
      $region136: #{densewave_forward.1} parent=11 // pred_fallthru
        _
      // Predicated region
      $region137: #{densewave_forward.1} parent=11 // pred_check
        %p1605 = pneg %p883
      $region138: #{densewave_forward.1} parent=11 // pred_check_branch
        %1607 = sbr.rel (%p1605) target = $region140
      $region139: #{densewave_forward.1} parent=11 // pred_region
        _
      $region140: #{densewave_forward.1} parent=11 // pred_fallthru
        _
      // Predicated region
      $region141: #{densewave_forward.1} parent=11 // pred_check
        %p1608 = pneg %p904
      $region142: #{densewave_forward.1} parent=11 // pred_check_branch
        %1610 = sbr.rel (%p1608) target = $region144
      $region143: #{densewave_forward.1} parent=11 // pred_region
        _
      $region144: #{densewave_forward.1} parent=11 // pred_fallthru
        _
      // Predicated region
      $region145: #{densewave_forward.1} parent=11 // pred_check
        %p1611 = pneg %p925
      $region146: #{densewave_forward.1} parent=11 // pred_check_branch
        %1613 = sbr.rel (%p1611) target = $region148
      $region147: #{densewave_forward.1} parent=11 // pred_region
        _
      $region148: #{densewave_forward.1} parent=11 // pred_fallthru
        _
      // Predicated region
      $region149: #{densewave_forward.1} parent=11 // pred_check
        %p1614 = pneg %p946
      $region150: #{densewave_forward.1} parent=11 // pred_check_branch
        %1616 = sbr.rel (%p1614) target = $region152
      $region151: #{densewave_forward.1} parent=11 // pred_region
        _
      $region152: #{densewave_forward.1} parent=11 // pred_fallthru
        _
      // Predicated region
      $region153: #{densewave_forward.1} parent=11 // pred_check
        %p1617 = pneg %p967
      $region154: #{densewave_forward.1} parent=11 // pred_check_branch
        %1619 = sbr.rel (%p1617) target = $region156
      $region155: #{densewave_forward.1} parent=11 // pred_region
        _
      $region156: #{densewave_forward.1} parent=11 // pred_fallthru
        _
      // Predicated region
      $region157: #{densewave_forward.1} parent=11 // pred_check
        %p1620 = pneg %p988
      $region158: #{densewave_forward.1} parent=11 // pred_check_branch
        %1622 = sbr.rel (%p1620) target = $region160
      $region159: #{densewave_forward.1} parent=11 // pred_region
        _
      $region160: #{densewave_forward.1} parent=11 // pred_fallthru
        _
      // Predicated region
      $region161: #{densewave_forward.1} parent=11 // pred_check
        %p1623 = pneg %p1009
      $region162: #{densewave_forward.1} parent=11 // pred_check_branch
        %1625 = sbr.rel (%p1623) target = $region164
      $region163: #{densewave_forward.1} parent=11 // pred_region
        _
      $region164: #{densewave_forward.1} parent=11 // pred_fallthru
        _
      // Predicated region
      $region165: #{densewave_forward.1} parent=11 // pred_check
        %p1626 = pneg %p1030
      $region166: #{densewave_forward.1} parent=11 // pred_check_branch
        %1628 = sbr.rel (%p1626) target = $region168
      $region167: #{densewave_forward.1} parent=11 // pred_region
        _
      $region168: #{densewave_forward.1} parent=11 // pred_fallthru
        _
      // Predicated region
      $region169: #{densewave_forward.1} parent=11 // pred_check
        %p1629 = pneg %p1051
      $region170: #{densewave_forward.1} parent=11 // pred_check_branch
        %1631 = sbr.rel (%p1629) target = $region172
      $region171: #{densewave_forward.1} parent=11 // pred_region
        _
      $region172: #{densewave_forward.1} parent=11 // pred_fallthru
        _
      // Predicated region
      $region173: #{densewave_forward.1} parent=11 // pred_check
        %p1632 = pneg %p1072
      $region174: #{densewave_forward.1} parent=11 // pred_check_branch
        %1634 = sbr.rel (%p1632) target = $region176
      $region175: #{densewave_forward.1} parent=11 // pred_region
        _
      $region176: #{densewave_forward.1} parent=11 // pred_fallthru
        _
      // Predicated region
      $region177: #{densewave_forward.1} parent=11 // pred_check
        %p1635 = pneg %p1093
      $region178: #{densewave_forward.1} parent=11 // pred_check_branch
        %1637 = sbr.rel (%p1635) target = $region180
      $region179: #{densewave_forward.1} parent=11 // pred_region
        _
      $region180: #{densewave_forward.1} parent=11 // pred_fallthru
        _
      // Predicated region
      $region181: #{densewave_forward.1} parent=11 // pred_check
        %p1638 = pneg %p1114
      $region182: #{densewave_forward.1} parent=11 // pred_check_branch
        %1640 = sbr.rel (%p1638) target = $region184
      $region183: #{densewave_forward.1} parent=11 // pred_region
        _
      $region184: #{densewave_forward.1} parent=11 // pred_fallthru
        _
      // Predicated region
      $region185: #{densewave_forward.1} parent=11 // pred_check
        %p1641 = pneg %p1135
      $region186: #{densewave_forward.1} parent=11 // pred_check_branch
        %1643 = sbr.rel (%p1641) target = $region188
      $region187: #{densewave_forward.1} parent=11 // pred_region
        _
      $region188: #{densewave_forward.1} parent=11 // pred_fallthru
        _
      // Predicated region
      $region189: #{densewave_forward.1} parent=11 // pred_check
        %p1644 = pneg %p1156
      $region190: #{densewave_forward.1} parent=11 // pred_check_branch
        %1646 = sbr.rel (%p1644) target = $region192
      $region191: #{densewave_forward.1} parent=11 // pred_region
        _
      $region192: #{densewave_forward.1} parent=11 // pred_fallthru
        _
      // Predicated region
      $region193: #{densewave_forward.1} parent=11 // pred_check
        %p1647 = pneg %p1177
      $region194: #{densewave_forward.1} parent=11 // pred_check_branch
        %1649 = sbr.rel (%p1647) target = $region196
      $region195: #{densewave_forward.1} parent=11 // pred_region
        _
      $region196: #{densewave_forward.1} parent=11 // pred_fallthru
        _
      // Predicated region
      $region197: #{densewave_forward.1} parent=11 // pred_check
        %p1650 = pneg %p1198
      $region198: #{densewave_forward.1} parent=11 // pred_check_branch
        %1652 = sbr.rel (%p1650) target = $region200
      $region199: #{densewave_forward.1} parent=11 // pred_region
        _
      $region200: #{densewave_forward.1} parent=11 // pred_fallthru
        _
      // Predicated region
      $region201: #{densewave_forward.1} parent=11 // pred_check
        %p1653 = pneg %p1219
      $region202: #{densewave_forward.1} parent=11 // pred_check_branch
        %1655 = sbr.rel (%p1653) target = $region204
      $region203: #{densewave_forward.1} parent=11 // pred_region
        _
      $region204: #{densewave_forward.1} parent=11 // pred_fallthru
        _
      // Predicated region
      $region205: #{densewave_forward.1} parent=11 // pred_check
        %p1656 = pneg %p1240
      $region206: #{densewave_forward.1} parent=11 // pred_check_branch
        %1658 = sbr.rel (%p1656) target = $region208
      $region207: #{densewave_forward.1} parent=11 // pred_region
        _
      $region208: #{densewave_forward.1} parent=11 // pred_fallthru
        _
      // Predicated region
      $region209: #{densewave_forward.1} parent=11 // pred_check
        %p1659 = pneg %p1261
      $region210: #{densewave_forward.1} parent=11 // pred_check_branch
        %1661 = sbr.rel (%p1659) target = $region212
      $region211: #{densewave_forward.1} parent=11 // pred_region
        _
      $region212: #{densewave_forward.1} parent=11 // pred_fallthru
        _
      // Predicated region
      $region213: #{densewave_forward.1} parent=11 // pred_check
        %p1662 = pneg %p1282
      $region214: #{densewave_forward.1} parent=11 // pred_check_branch
        %1664 = sbr.rel (%p1662) target = $region216
      $region215: #{densewave_forward.1} parent=11 // pred_region
        _
      $region216: #{densewave_forward.1} parent=11 // pred_fallthru
        _
      // Predicated region
      $region217: #{densewave_forward.1} parent=11 // pred_check
        %p1665 = pneg %p1303
      $region218: #{densewave_forward.1} parent=11 // pred_check_branch
        %1667 = sbr.rel (%p1665) target = $region220
      $region219: #{densewave_forward.1} parent=11 // pred_region
        _
      $region220: #{densewave_forward.1} parent=11 // pred_fallthru
        _
      // Predicated region
      $region221: #{densewave_forward.1} parent=11 // pred_check
        %p1668 = pneg %p1324
      $region222: #{densewave_forward.1} parent=11 // pred_check_branch
        %1670 = sbr.rel (%p1668) target = $region224
      $region223: #{densewave_forward.1} parent=11 // pred_region
        _
      $region224: #{densewave_forward.1} parent=11 // pred_fallthru
        _
      // Predicated region
      $region225: #{densewave_forward.1} parent=11 // pred_check
        %p1671 = pneg %p1345
      $region226: #{densewave_forward.1} parent=11 // pred_check_branch
        %1673 = sbr.rel (%p1671) target = $region228
      $region227: #{densewave_forward.1} parent=11 // pred_region
        _
      $region228: #{densewave_forward.1} parent=11 // pred_fallthru
        _
      // Predicated region
      $region229: #{densewave_forward.1} parent=11 // pred_check
        %p1674 = pneg %p1366
      $region230: #{densewave_forward.1} parent=11 // pred_check_branch
        %1676 = sbr.rel (%p1674) target = $region232
      $region231: #{densewave_forward.1} parent=11 // pred_region
        _
      $region232: #{densewave_forward.1} parent=11 // pred_fallthru
        _
      // Predicated region
      $region233: #{densewave_forward.1} parent=11 // pred_check
        %p1677 = pneg %p1387
      $region234: #{densewave_forward.1} parent=11 // pred_check_branch
        %1679 = sbr.rel (%p1677) target = $region236
      $region235: #{densewave_forward.1} parent=11 // pred_region
        _
      $region236: #{densewave_forward.1} parent=11 // pred_fallthru
        _
      // Predicated region
      $region237: #{densewave_forward.1} parent=11 // pred_check
        %p1680 = pneg %p1408
      $region238: #{densewave_forward.1} parent=11 // pred_check_branch
        %1682 = sbr.rel (%p1680) target = $region240
      $region239: #{densewave_forward.1} parent=11 // pred_region
        _
      $region240: #{densewave_forward.1} parent=11 // pred_fallthru
        _
      // Predicated region
      $region241: #{densewave_forward.1} parent=11 // pred_check
        %p1683 = pneg %p1429
      $region242: #{densewave_forward.1} parent=11 // pred_check_branch
        %1685 = sbr.rel (%p1683) target = $region244
      $region243: #{densewave_forward.1} parent=11 // pred_region
        _
      $region244: #{densewave_forward.1} parent=11 // pred_fallthru
        _
      // Predicated region
      $region245: #{densewave_forward.1} parent=11 // pred_check
        %p1686 = pneg %p1450
      $region246: #{densewave_forward.1} parent=11 // pred_check_branch
        %1688 = sbr.rel (%p1686) target = $region248
      $region247: #{densewave_forward.1} parent=11 // pred_region
        _
      $region248: #{densewave_forward.1} parent=11 // pred_fallthru
        _
      // Predicated region
      $region249: #{densewave_forward.1} parent=11 // pred_check
        %p1689 = pneg %p1471
      $region250: #{densewave_forward.1} parent=11 // pred_check_branch
        %1691 = sbr.rel (%p1689) target = $region252
      $region251: #{densewave_forward.1} parent=11 // pred_region
        _
      $region252: #{densewave_forward.1} parent=11 // pred_fallthru
        _
    $region12: #{densewave_forward.1} parent=5 // pred_fallthru
      _
    %p1692 = scmp.lt.s32.totalorder %s133, 2
    // Predicated region
    $region253: #{densewave_forward.1} parent=5 // pred_check
      %p1693 = pneg %p1692
    $region254: #{densewave_forward.1} parent=5 // pred_check_branch
      %1695 = sbr.rel (%p1693) target = $region256
    $region255: #{densewave_forward.1} parent=5 // pred_region
      // Predicated region
      $region257: #{densewave_forward.1} parent=255 // pred_check
        %p1696 = pneg %p153
      $region258: #{densewave_forward.1} parent=255 // pred_check_branch
        %1698 = sbr.rel (%p1696) target = $region260
      $region259: #{densewave_forward.1} parent=255 // pred_region
        %p1699 = scmp.lt.s32.totalorder %s133, 1
        %s1700 = scalar_select %p1699, %s133, 1
        %s1701 = smul.addr %s1700, 2
        %s1702 = smul.addr %s1701, 8
        %s1703 = scalar_lea.vmem %s1, %s1702
      $region260: #{densewave_forward.1} parent=255 // pred_fallthru
        _
      // Predicated region
      $region261: #{densewave_forward.1} parent=255 // pred_check
        %p1704 = pneg %p179
      $region262: #{densewave_forward.1} parent=255 // pred_check_branch
        %1706 = sbr.rel (%p1704) target = $region264
      $region263: #{densewave_forward.1} parent=255 // pred_region
        %p1707 = scmp.lt.s32.totalorder %s133, 1
        %s1708 = scalar_select %p1707, %s133, 1
        %s1709 = smul.addr %s1708, 2
        %s1710 = smul.addr %s1709, 8
        %s1711 = scalar_lea.vmem %s3, %s1710
      $region264: #{densewave_forward.1} parent=255 // pred_fallthru
        _
      // Predicated region
      $region265: #{densewave_forward.1} parent=255 // pred_check
        %p1712 = pneg %p205
      $region266: #{densewave_forward.1} parent=255 // pred_check_branch
        %1714 = sbr.rel (%p1712) target = $region268
      $region267: #{densewave_forward.1} parent=255 // pred_region
        %p1715 = scmp.lt.s32.totalorder %s133, 1
        %s1716 = scalar_select %p1715, %s133, 1
        %s1717 = smul.addr %s1716, 2
        %s1718 = smul.addr %s1717, 8
        %s1719 = scalar_lea.vmem %s5, %s1718
      $region268: #{densewave_forward.1} parent=255 // pred_fallthru
        _
    $region256: #{densewave_forward.1} parent=5 // pred_fallthru
      _
    %p1720 = scmp.le.s32.totalorder 1, %s133
    %p1721 = scmp.lt.s32.totalorder %s133, 3
    %p1722 = pnand %p1720, %p1721
    %p1723 = pneg %p1722
    // Predicated region
    $region269: #{densewave_forward.1} parent=5 // pred_check
      _
    $region270: #{densewave_forward.1} parent=5 // pred_check_branch
      %1725 = sbr.rel (%p1722) target = $region272
    $region271: #{densewave_forward.1} parent=5 // pred_region
      %s1726 = ssub.s32 %s133, 1
      %p1727 = scmp.lt.s32.totalorder %s138, 1
      %s1728 = scalar_select %p1727, %s138, 1
      %s1729 = smul.addr %s1728, 2
      %s1730 = smul.addr %s1729, 8
      %s1731 = scalar_lea.vmem %s1, %s1730
      %p1732 = pneg %p159
      %p1733 = pneg %p156
      %p1734 = scmp.lt.s32.totalorder %s138, 1
      %s1735 = scalar_select %p1734, %s138, 1
      %s1736 = smul.addr %s1735, 2
      %s1737 = smul.addr %s1736, 8
      %s1738 = scalar_lea.vmem %s3, %s1737
      %p1739 = pneg %p185
      %p1740 = pneg %p182
      %p1741 = scmp.lt.s32.totalorder %s138, 1
      %s1742 = scalar_select %p1741, %s138, 1
      %s1743 = smul.addr %s1742, 2
      %s1744 = smul.addr %s1743, 8
      %s1745 = scalar_lea.vmem %s5, %s1744
      %p1746 = pneg %p211
      %p1747 = pneg %p208
      %p1748 = pneg %p232
      %p1749 = pneg %p229
      %p1750 = pneg %p253
      %p1751 = pneg %p250
      %p1752 = pneg %p274
      %p1753 = pneg %p271
      %p1754 = pneg %p295
      %p1755 = pneg %p292
      %p1756 = pneg %p316
      %p1757 = pneg %p313
      %p1758 = pneg %p337
      %p1759 = pneg %p334
      %p1760 = pneg %p358
      %p1761 = pneg %p355
      %p1762 = pneg %p379
      %p1763 = pneg %p376
      %p1764 = pneg %p400
      %p1765 = pneg %p397
      %p1766 = pneg %p421
      %p1767 = pneg %p418
      %p1768 = pneg %p442
      %p1769 = pneg %p439
      %p1770 = pneg %p463
      %p1771 = pneg %p460
      %p1772 = pneg %p484
      %p1773 = pneg %p481
      %p1774 = pneg %p505
      %p1775 = pneg %p502
      %p1776 = pneg %p526
      %p1777 = pneg %p523
      %p1778 = pneg %p547
      %p1779 = pneg %p544
      %p1780 = pneg %p568
      %p1781 = pneg %p565
      %p1782 = pneg %p589
      %p1783 = pneg %p586
      %p1784 = pneg %p610
      %p1785 = pneg %p607
      %p1786 = pneg %p631
      %p1787 = pneg %p628
      %p1788 = pneg %p652
      %p1789 = pneg %p649
      %p1790 = pneg %p673
      %p1791 = pneg %p670
      %p1792 = pneg %p694
      %p1793 = pneg %p691
      %p1794 = pneg %p715
      %p1795 = pneg %p712
      %p1796 = pneg %p736
      %p1797 = pneg %p733
      %p1798 = pneg %p757
      %p1799 = pneg %p754
      %p1800 = pneg %p778
      %p1801 = pneg %p775
      %p1802 = pneg %p799
      %p1803 = pneg %p796
      %p1804 = pneg %p820
      %p1805 = pneg %p817
      %p1806 = pneg %p841
      %p1807 = pneg %p838
      %p1808 = pneg %p862
      %p1809 = pneg %p859
      %p1810 = pneg %p883
      %p1811 = pneg %p880
      %p1812 = pneg %p904
      %p1813 = pneg %p901
      %p1814 = pneg %p925
      %p1815 = pneg %p922
      %p1816 = pneg %p946
      %p1817 = pneg %p943
      %p1818 = pneg %p967
      %p1819 = pneg %p964
      %p1820 = pneg %p988
      %p1821 = pneg %p985
      %p1822 = pneg %p1009
      %p1823 = pneg %p1006
      %p1824 = pneg %p1030
      %p1825 = pneg %p1027
      %p1826 = pneg %p1051
      %p1827 = pneg %p1048
      %p1828 = pneg %p1072
      %p1829 = pneg %p1069
      %p1830 = pneg %p1093
      %p1831 = pneg %p1090
      %p1832 = pneg %p1114
      %p1833 = pneg %p1111
      %p1834 = pneg %p1135
      %p1835 = pneg %p1132
      %p1836 = pneg %p1156
      %p1837 = pneg %p1153
      %p1838 = pneg %p1177
      %p1839 = pneg %p1174
      %p1840 = pneg %p1198
      %p1841 = pneg %p1195
      %p1842 = pneg %p1219
      %p1843 = pneg %p1216
      %p1844 = pneg %p1240
      %p1845 = pneg %p1237
      %p1846 = pneg %p1261
      %p1847 = pneg %p1258
      %p1848 = pneg %p1282
      %p1849 = pneg %p1279
      %p1850 = pneg %p1303
      %p1851 = pneg %p1300
      %p1852 = pneg %p1324
      %p1853 = pneg %p1321
      %p1854 = pneg %p1345
      %p1855 = pneg %p1342
      %p1856 = pneg %p1366
      %p1857 = pneg %p1363
      %p1858 = pneg %p1387
      %p1859 = pneg %p1384
      %p1860 = pneg %p1408
      %p1861 = pneg %p1405
      %p1862 = pneg %p1429
      %p1863 = pneg %p1426
      %p1864 = pneg %p1450
      %p1865 = pneg %p1447
      %p1866 = pneg %p1471
      %p1867 = pneg %p1468
      %p1868 = pneg %p1497
      %p1869 = pneg %p1494
      %p1870 = scmp.lt.s32.totalorder %s138, 1
      %s1871 = scalar_select %p1870, %s138, 1
      %s1872 = smul.addr %s1871, 8
      %s1873 = smul.addr %s1872, 8
      %s1874 = scalar_lea.vmem %s127, %s1873
      %p1875 = scmp.lt.s32.totalorder %s138, 1
      %s1876 = scalar_select %p1875, %s138, 1
      %s1877 = smul.addr %s1876, 2
      %s1878 = smul.addr %s1877, 8
      %s1879 = scalar_lea.vmem %s1, %s1878
      %p1880 = scmp.lt.s32.totalorder %s138, 1
      %s1881 = scalar_select %p1880, %s138, 1
      %s1882 = smul.addr %s1881, 2
      %s1883 = smul.addr %s1882, 8
      %s1884 = scalar_lea.vmem %s3, %s1883
      %p1885 = scmp.lt.s32.totalorder %s138, 1
      %s1886 = scalar_select %p1885, %s138, 1
      %s1887 = smul.addr %s1886, 2
      %s1888 = smul.addr %s1887, 8
      %s1889 = scalar_lea.vmem %s5, %s1888
      %p1890 = scmp.lt.s32.totalorder %s138, 1
      %s1891 = scalar_select %p1890, %s138, 1
      %s1892 = smul.addr %s1891, 8
      %s1893 = smul.addr %s1892, 8
      %s1894 = scalar_lea.vmem %s127, %s1893
      %v1895 = vld [vmem:[%s1879] sm:$0xff]
      %v1896 = vld [vmem:[%s1879 + $0x8] sm:$0xff]
      %v1897 = vld [vmem:[%s1884] sm:$0xff]
      %v1898 = vld [vmem:[%s1884 + $0x8] sm:$0xff]
      %v1899 = vld [vmem:[%s1889] sm:$0xff]
      %v1900 = vld [vmem:[%s1889 + $0x8] sm:$0xff]
      %v1901 = vld [vmem:[%s7] sm:$0xff]
      %v1902 = vld [vmem:[%s7 + $0x8] sm:$0xff]
      %v1903 = vld [vmem:[%s7 + $0x10] sm:$0xff]
      %v1904 = vld [vmem:[%s7 + $0x18] sm:$0xff]
      %v1905 = vld [vmem:[%s9] sm:$0xff]
      %v1906 = vld [vmem:[%s9 + $0x8] sm:$0xff]
      %v1907 = vld [vmem:[%s9 + $0x10] sm:$0xff]
      %v1908 = vld [vmem:[%s9 + $0x18] sm:$0xff]
      %v1909 = vlaneseq
      %v1910 = vand.u32 %v1909, 127
      %vm1911 = vcmp.eq.s32.totalorder %v1910, 0
      %1912 = vrot.lane.b32.xlu0 %v1895, 1
      %v1913 = vpop.permute.xlu0 %1912
      %1914 = vrot.lane.b32.xlu0 %v1896, 1
      %v1915 = vpop.permute.xlu0 %1914
      %v1916 = vsel %vm1911, 0.0, %v1913
      %v1917 = vsel %vm1911, 0.0, %v1915
      %vm1918 = vcmp.eq.s32.totalorder %v1910, 127
      %1919 = vrot.lane.b32.xlu0 %v1895, 127
      %v1920 = vpop.permute.xlu0 %1919
      %1921 = vrot.lane.b32.xlu0 %v1896, 127
      %v1922 = vpop.permute.xlu0 %1921
      %v1923 = vsel %vm1918, 0.0, %v1920
      %v1924 = vsel %vm1918, 0.0, %v1922
      %1926 = vset.pattern.permute.xlu0 0
      %1927 = vperm.xlu0 %1926, %v1905
      %v1928 = vpop.permute.xlu0 %1927
      %1931 = vset.pattern.permute.xlu0 0
      %1932 = vperm.xlu0 %1931, %v1906
      %v1933 = vpop.permute.xlu0 %1932
      %1936 = vset.pattern.permute.xlu0 0
      %1937 = vperm.xlu0 %1936, %v1907
      %v1938 = vpop.permute.xlu0 %1937
      %1941 = vset.pattern.permute.xlu0 0
      %1942 = vperm.xlu0 %1941, %v1908
      %v1943 = vpop.permute.xlu0 %1942
      %vm1945 = vcmask 392192
      %v1947 = vsel %vm1945, %v1901, 0
      %v1950 = vsel %vm1945, %v1902, 0
      %v1953 = vsel %vm1945, %v1903, 0
      %v1956 = vsel %vm1945, %v1904, 0
      %1958 = vmatpush.msra.mxu0 0.0
      %1959 = vmatpush.msra.mxu0 0.0
      %1960 = vmatpush.msra.mxu0 0.0
      %1961 = vmatpush.msra.mxu0 0.0
      %1962 = vmatpush.msra.mxu0 0.0
      %1963 = vmatpush.msra.mxu0 0.0
      %1964 = vmatpush.msra.mxu0 0.0
      %1965 = vmatpush.msra.mxu0 0.0
      %1966 = vmatpush.msra.mxu0 0.0
      %1967 = vmatpush.msra.mxu0 0.0
      %1968 = vmatpush.msra.mxu0 %v1924
      %1969 = vmatpush.msra.mxu0 %v1923
      %1970 = vmatpush.msra.mxu0 %v1896
      %1971 = vmatpush.msra.mxu0 %v1895
      %1972 = vmatpush.msra.mxu0 %v1917
      %1973 = vmatpush.msra.mxu0 %v1916
      %1974 = vmatmul.f32.gmra.mxu0 %v1947
      %v1975 = vpop.f32.mrf.mxu0
      %v1976 = vadd.f32 %v1928, %v1975
      %1977 = vmatmul.f32.gmra.mxu0 %v1950
      %v1978 = vpop.f32.mrf.mxu0
      %v1979 = vadd.f32 %v1933, %v1978
      %1980 = vmatmul.f32.gmra.mxu0 %v1953
      %v1981 = vpop.f32.mrf.mxu0
      %v1982 = vadd.f32 %v1938, %v1981
      %1983 = vmatmul.f32.gmra.mxu0 %v1956
      %v1984 = vpop.f32.mrf.mxu0
      %v1985 = vadd.f32 %v1943, %v1984
      %1986 = vdwg.mxu0
      %v1987 = vld [vmem:[%s11] sm:$0xff]
      %v1988 = vld [vmem:[%s11 + $0x8] sm:$0xff]
      %v1989 = vld [vmem:[%s11 + $0x10] sm:$0xff]
      %v1990 = vld [vmem:[%s11 + $0x18] sm:$0xff]
      %v1991 = vld [vmem:[%s13] sm:$0xff]
      %v1992 = vld [vmem:[%s13 + $0x8] sm:$0xff]
      %v1993 = vld [vmem:[%s13 + $0x10] sm:$0xff]
      %v1994 = vld [vmem:[%s13 + $0x18] sm:$0xff]
      %vm1995 = vcmask 1048064
      %1996 = vrot.lane.b32.xlu0 %v1897, 64
      %v1997 = vpop.permute.xlu0 %1996
      %v1998 = vsel %vm1995, %v1997, %v1897
      %1999 = vrot.lane.b32.xlu0 %v1898, 64
      %v2000 = vpop.permute.xlu0 %1999
      %v2001 = vsel %vm1995, %v2000, %v1898
      %2002 = vrot.lane.b32.xlu0 %v1998, 64
      %v2003 = vpop.permute.xlu0 %2002
      %2004 = vrot.lane.b32.xlu0 %v2001, 64
      %v2005 = vpop.permute.xlu0 %2004
      %v2006 = vsel %vm1995, %v2003, %v1897
      %v2007 = vsel %vm1995, %v2005, %v1898
      %2010 = vrot.lane.b32.xlu0 %v2006, 65
      %v2011 = vpop.permute.xlu0 %2010
      %2012 = vrot.lane.b32.xlu0 %v2007, 65
      %v2013 = vpop.permute.xlu0 %2012
      %v2016 = vsel %vm1911, 0.0, %v2011
      %v2017 = vsel %vm1911, 0.0, %v2013
      %vm2018 = vcmp.eq.s32.totalorder %v1910, 63
      %2019 = vrot.lane.b32.xlu0 %v2006, 127
      %v2020 = vpop.permute.xlu0 %2019
      %2021 = vrot.lane.b32.xlu0 %v2007, 127
      %v2022 = vpop.permute.xlu0 %2021
      %v2025 = vsel %vm2018, 0.0, %v2020
      %v2026 = vsel %vm2018, 0.0, %v2022
      %2028 = vset.pattern.permute.xlu0 0
      %2029 = vperm.xlu0 %2028, %v1991
      %v2030 = vpop.permute.xlu0 %2029
      %2033 = vset.pattern.permute.xlu0 0
      %2034 = vperm.xlu0 %2033, %v1992
      %v2035 = vpop.permute.xlu0 %2034
      %2038 = vset.pattern.permute.xlu0 0
      %2039 = vperm.xlu0 %2038, %v1993
      %v2040 = vpop.permute.xlu0 %2039
      %2043 = vset.pattern.permute.xlu0 0
      %2044 = vperm.xlu0 %2043, %v1994
      %v2045 = vpop.permute.xlu0 %2044
      %v2048 = vsel %vm1945, %v1987, 0
      %v2051 = vsel %vm1945, %v1988, 0
      %v2054 = vsel %vm1945, %v1989, 0
      %v2057 = vsel %vm1945, %v1990, 0
      %2059 = vmatpush.msra.mxu0 0.0
      %2060 = vmatpush.msra.mxu0 0.0
      %2061 = vmatpush.msra.mxu0 0.0
      %2062 = vmatpush.msra.mxu0 0.0
      %2063 = vmatpush.msra.mxu0 0.0
      %2064 = vmatpush.msra.mxu0 0.0
      %2065 = vmatpush.msra.mxu0 0.0
      %2066 = vmatpush.msra.mxu0 0.0
      %2067 = vmatpush.msra.mxu0 0.0
      %2068 = vmatpush.msra.mxu0 0.0
      %2069 = vmatpush.msra.mxu0 %v2026
      %2070 = vmatpush.msra.mxu0 %v2025
      %2071 = vmatpush.msra.mxu0 %v1898
      %2072 = vmatpush.msra.mxu0 %v1897
      %2073 = vmatpush.msra.mxu0 %v2017
      %2074 = vmatpush.msra.mxu0 %v2016
      %2075 = vmatmul.f32.gmra.mxu0 %v2048
      %v2076 = vpop.f32.mrf.mxu0
      %v2077 = vadd.f32 %v2030, %v2076
      %2078 = vmatmul.f32.gmra.mxu0 %v2051
      %v2079 = vpop.f32.mrf.mxu0
      %v2080 = vadd.f32 %v2035, %v2079
      %2081 = vmatmul.f32.gmra.mxu0 %v2054
      %v2082 = vpop.f32.mrf.mxu0
      %v2083 = vadd.f32 %v2040, %v2082
      %2084 = vmatmul.f32.gmra.mxu0 %v2057
      %v2085 = vpop.f32.mrf.mxu0
      %v2086 = vadd.f32 %v2045, %v2085
      %2087 = vdwg.mxu0
      %v2088 = vmax.f32 %v2077, 0.0
      %v2089 = vmax.f32 %v2080, 0.0
      %v2090 = vmax.f32 %v2083, 0.0
      %v2091 = vmax.f32 %v2086, 0.0
      %v2092 = vld [vmem:[%s15] sm:$0xff]
      %v2093 = vld [vmem:[%s15 + $0x8] sm:$0xff]
      %v2094 = vld [vmem:[%s15 + $0x10] sm:$0xff]
      %v2095 = vld [vmem:[%s17] sm:$0xff]
      %v2096 = vld [vmem:[%s17 + $0x8] sm:$0xff]
      %v2097 = vld [vmem:[%s17 + $0x10] sm:$0xff]
      %vm2098 = vcmask 1047808
      %2099 = vrot.lane.b32.xlu0 %v1899, 32
      %v2100 = vpop.permute.xlu0 %2099
      %v2101 = vsel %vm2098, %v2100, %v1899
      %2102 = vrot.lane.b32.xlu0 %v1900, 32
      %v2103 = vpop.permute.xlu0 %2102
      %v2104 = vsel %vm2098, %v2103, %v1900
      %2105 = vrot.lane.b32.xlu0 %v2101, 32
      %v2106 = vpop.permute.xlu0 %2105
      %2107 = vrot.lane.b32.xlu0 %v2104, 32
      %v2108 = vpop.permute.xlu0 %2107
      %v2109 = vsel %vm2098, %v2106, %v1899
      %v2110 = vsel %vm2098, %v2108, %v1900
      %2113 = vrot.lane.b32.xlu0 %v2109, 97
      %v2114 = vpop.permute.xlu0 %2113
      %2115 = vrot.lane.b32.xlu0 %v2110, 97
      %v2116 = vpop.permute.xlu0 %2115
      %v2119 = vsel %vm1911, 0.0, %v2114
      %v2120 = vsel %vm1911, 0.0, %v2116
      %vm2121 = vcmp.eq.s32.totalorder %v1910, 31
      %2122 = vrot.lane.b32.xlu0 %v2109, 127
      %v2123 = vpop.permute.xlu0 %2122
      %2124 = vrot.lane.b32.xlu0 %v2110, 127
      %v2125 = vpop.permute.xlu0 %2124
      %v2128 = vsel %vm2121, 0.0, %v2123
      %v2129 = vsel %vm2121, 0.0, %v2125
      %2131 = vset.pattern.permute.xlu0 0
      %2132 = vperm.xlu0 %2131, %v2095
      %v2133 = vpop.permute.xlu0 %2132
      %2136 = vset.pattern.permute.xlu0 0
      %2137 = vperm.xlu0 %2136, %v2096
      %v2138 = vpop.permute.xlu0 %2137
      %2141 = vset.pattern.permute.xlu0 0
      %2142 = vperm.xlu0 %2141, %v2097
      %v2143 = vpop.permute.xlu0 %2142
      %v2146 = vsel %vm1945, %v2092, 0
      %v2149 = vsel %vm1945, %v2093, 0
      %v2152 = vsel %vm1945, %v2094, 0
      %2154 = vmatpush.msra.mxu0 0.0
      %2155 = vmatpush.msra.mxu0 0.0
      %2156 = vmatpush.msra.mxu0 0.0
      %2157 = vmatpush.msra.mxu0 0.0
      %2158 = vmatpush.msra.mxu0 0.0
      %2159 = vmatpush.msra.mxu0 0.0
      %2160 = vmatpush.msra.mxu0 0.0
      %2161 = vmatpush.msra.mxu0 0.0
      %2162 = vmatpush.msra.mxu0 0.0
      %2163 = vmatpush.msra.mxu0 0.0
      %2164 = vmatpush.msra.mxu0 %v2129
      %2165 = vmatpush.msra.mxu0 %v2128
      %2166 = vmatpush.msra.mxu0 %v1900
      %2167 = vmatpush.msra.mxu0 %v1899
      %2168 = vmatpush.msra.mxu0 %v2120
      %2169 = vmatpush.msra.mxu0 %v2119
      %2170 = vmatmul.f32.gmra.mxu0 %v2146
      %v2171 = vpop.f32.mrf.mxu0
      %v2172 = vadd.f32 %v2133, %v2171
      %2173 = vmatmul.f32.gmra.mxu0 %v2149
      %v2174 = vpop.f32.mrf.mxu0
      %v2175 = vadd.f32 %v2138, %v2174
      %2176 = vmatmul.f32.gmra.mxu0 %v2152
      %v2177 = vpop.f32.mrf.mxu0
      %v2178 = vadd.f32 %v2143, %v2177
      %2179 = vdwg.mxu0
      %v2180 = vmax.f32 %v2172, 0.0
      %v2181 = vmax.f32 %v2175, 0.0
      %v2182 = vmax.f32 %v2178, 0.0
      %v2183 = vld [vmem:[%s19] sm:$0xff]
      %v2184 = vld [vmem:[%s19 + $0x8] sm:$0xff]
      %v2185 = vld [vmem:[%s19 + $0x10] sm:$0xff]
      %v2186 = vld [vmem:[%s19 + $0x18] sm:$0xff]
      %v2187 = vld [vmem:[%s21] sm:$0xff]
      %v2188 = vld [vmem:[%s21 + $0x8] sm:$0xff]
      %v2189 = vld [vmem:[%s21 + $0x10] sm:$0xff]
      %v2190 = vld [vmem:[%s21 + $0x18] sm:$0xff]
      %v2191 = vld [vmem:[%s23] sm:$0xff]
      %v2192 = vld [vmem:[%s23 + $0x8] sm:$0xff]
      %v2193 = vld [vmem:[%s23 + $0x10] sm:$0xff]
      %v2194 = vld [vmem:[%s23 + $0x18] sm:$0xff]
      %v2195 = vld [vmem:[%s25] sm:$0xff]
      %v2196 = vld [vmem:[%s25 + $0x8] sm:$0xff]
      %v2197 = vld [vmem:[%s25 + $0x10] sm:$0xff]
      %v2198 = vld [vmem:[%s25 + $0x18] sm:$0xff]
      %v2199 = vld [vmem:[%s27] sm:$0xff]
      %2201 = vset.pattern.permute.xlu0 0
      %2202 = vperm.xlu0 %2201, %v2183
      %v2203 = vpop.permute.xlu0 %2202
      %2206 = vset.pattern.permute.xlu0 0
      %2207 = vperm.xlu0 %2206, %v2184
      %v2208 = vpop.permute.xlu0 %2207
      %2211 = vset.pattern.permute.xlu0 0
      %2212 = vperm.xlu0 %2211, %v2185
      %v2213 = vpop.permute.xlu0 %2212
      %2216 = vset.pattern.permute.xlu0 0
      %2217 = vperm.xlu0 %2216, %v2186
      %v2218 = vpop.permute.xlu0 %2217
      %v2220 = vmul.f32 %v1976, %v2203
      %v2221 = vmul.f32 %v1979, %v2208
      %v2222 = vmul.f32 %v1982, %v2213
      %v2223 = vmul.f32 %v1985, %v2218
      %2225 = vset.pattern.permute.xlu0 0
      %2226 = vperm.xlu0 %2225, %v2187
      %v2227 = vpop.permute.xlu0 %2226
      %2230 = vset.pattern.permute.xlu0 0
      %2231 = vperm.xlu0 %2230, %v2188
      %v2232 = vpop.permute.xlu0 %2231
      %2235 = vset.pattern.permute.xlu0 0
      %2236 = vperm.xlu0 %2235, %v2189
      %v2237 = vpop.permute.xlu0 %2236
      %2240 = vset.pattern.permute.xlu0 0
      %2241 = vperm.xlu0 %2240, %v2190
      %v2242 = vpop.permute.xlu0 %2241
      %v2244 = vadd.f32 %v2220, %v2227
      %v2245 = vadd.f32 %v2221, %v2232
      %v2246 = vadd.f32 %v2222, %v2237
      %v2247 = vadd.f32 %v2223, %v2242
      %v2248 = vmax.f32 %v2244, 0.0
      %v2249 = vmax.f32 %v2245, 0.0
      %v2250 = vmax.f32 %v2246, 0.0
      %v2251 = vmax.f32 %v2247, 0.0
      %2253 = vset.pattern.permute.xlu0 0
      %2254 = vperm.xlu0 %2253, %v2195
      %v2255 = vpop.permute.xlu0 %2254
      %2258 = vset.pattern.permute.xlu0 0
      %2259 = vperm.xlu0 %2258, %v2196
      %v2260 = vpop.permute.xlu0 %2259
      %2263 = vset.pattern.permute.xlu0 0
      %2264 = vperm.xlu0 %2263, %v2197
      %v2265 = vpop.permute.xlu0 %2264
      %2268 = vset.pattern.permute.xlu0 0
      %2269 = vperm.xlu0 %2268, %v2198
      %v2270 = vpop.permute.xlu0 %2269
      %vm2272 = vcmask 261120
      %v2274 = vsel %vm2272, %v2191, 0
      %v2277 = vsel %vm2272, %v2192, 0
      %v2280 = vsel %vm2272, %v2193, 0
      %v2283 = vsel %vm2272, %v2194, 0
      %2285 = vmatpush.msra.mxu0 0.0
      %2286 = vmatpush.msra.mxu0 0.0
      %2287 = vmatpush.msra.mxu0 0.0
      %2288 = vmatpush.msra.mxu0 0.0
      %2289 = vmatpush.msra.mxu0 0.0
      %2290 = vmatpush.msra.mxu0 0.0
      %2291 = vmatpush.msra.mxu0 0.0
      %2292 = vmatpush.msra.mxu0 0.0
      %2293 = vmatpush.msra.mxu0 0.0
      %2294 = vmatpush.msra.mxu0 0.0
      %2295 = vmatpush.msra.mxu0 0.0
      %2296 = vmatpush.msra.mxu0 0.0
      %2297 = vmatpush.msra.mxu0 %v2251
      %2298 = vmatpush.msra.mxu0 %v2250
      %2299 = vmatpush.msra.mxu0 %v2249
      %2300 = vmatpush.msra.mxu0 %v2248
      %2301 = vmatmul.f32.gmra.mxu0 %v2274
      %v2302 = vpop.f32.mrf.mxu0
      %v2303 = vadd.f32 %v2255, %v2302
      %2304 = vmatmul.f32.gmra.mxu0 %v2277
      %v2305 = vpop.f32.mrf.mxu0
      %v2306 = vadd.f32 %v2260, %v2305
      %2307 = vmatmul.f32.gmra.mxu0 %v2280
      %v2308 = vpop.f32.mrf.mxu0
      %v2309 = vadd.f32 %v2265, %v2308
      %2310 = vmatmul.f32.gmra.mxu0 %v2283
      %v2311 = vpop.f32.mrf.mxu0
      %v2312 = vadd.f32 %v2270, %v2311
      %2313 = vdwg.mxu0
      %v2314 = vmax.f32 %v2303, 0.0
      %v2315 = vmax.f32 %v2306, 0.0
      %v2316 = vmax.f32 %v2309, 0.0
      %v2317 = vmax.f32 %v2312, 0.0
      %2318 = vrot.lane.b32.xlu0 %v2314, 1
      %v2319 = vpop.permute.xlu0 %2318
      %2320 = vrot.lane.b32.xlu0 %v2315, 1
      %v2321 = vpop.permute.xlu0 %2320
      %2322 = vrot.lane.b32.xlu0 %v2316, 1
      %v2323 = vpop.permute.xlu0 %2322
      %2324 = vrot.lane.b32.xlu0 %v2317, 1
      %v2325 = vpop.permute.xlu0 %2324
      %v2326 = vsel %vm1911, 0.0, %v2319
      %v2327 = vsel %vm1911, 0.0, %v2321
      %v2328 = vsel %vm1911, 0.0, %v2323
      %v2329 = vsel %vm1911, 0.0, %v2325
      %2330 = vrot.lane.b32.xlu0 %v2314, 127
      %v2331 = vpop.permute.xlu0 %2330
      %2332 = vrot.lane.b32.xlu0 %v2315, 127
      %v2333 = vpop.permute.xlu0 %2332
      %2334 = vrot.lane.b32.xlu0 %v2316, 127
      %v2335 = vpop.permute.xlu0 %2334
      %2336 = vrot.lane.b32.xlu0 %v2317, 127
      %v2337 = vpop.permute.xlu0 %2336
      %v2338 = vsel %vm1918, 0.0, %v2331
      %v2339 = vsel %vm1918, 0.0, %v2333
      %v2340 = vsel %vm1918, 0.0, %v2335
      %v2341 = vsel %vm1918, 0.0, %v2337
      %vm2342 = vcmask 785408
      %v2344 = vsel %vm2342, %v2199, 0
      %2346 = vmatpush.msra.mxu0 0.0
      %2347 = vmatpush.msra.mxu0 0.0
      %2348 = vmatpush.msra.mxu0 0.0
      %2349 = vmatpush.msra.mxu0 0.0
      %2350 = vmatpush.msra.mxu0 %v2341
      %2351 = vmatpush.msra.mxu0 %v2340
      %2352 = vmatpush.msra.mxu0 %v2339
      %2353 = vmatpush.msra.mxu0 %v2338
      %2354 = vmatpush.msra.mxu0 %v2317
      %2355 = vmatpush.msra.mxu0 %v2316
      %2356 = vmatpush.msra.mxu0 %v2315
      %2357 = vmatpush.msra.mxu0 %v2314
      %2358 = vmatpush.msra.mxu0 %v2329
      %2359 = vmatpush.msra.mxu0 %v2328
      %2360 = vmatpush.msra.mxu0 %v2327
      %2361 = vmatpush.msra.mxu0 %v2326
      %2362 = vmatmul.f32.gmra.mxu0 %v2344
      %v2363 = vpop.f32.mrf.mxu0
      %v2364 = vadd.f32 0.0, %v2363
      %2365 = vdwg.mxu0
      %v2366 = vld [vmem:[%s29] sm:$0xff]
      %v2367 = vld [vmem:[%s29 + $0x8] sm:$0xff]
      %v2368 = vld [vmem:[%s29 + $0x10] sm:$0xff]
      %v2369 = vld [vmem:[%s29 + $0x18] sm:$0xff]
      %v2370 = vld [vmem:[%s29 + $0x20] sm:$0xff]
      %v2371 = vld [vmem:[%s31] sm:$0xff]
      %v2372 = vld [vmem:[%s31 + $0x8] sm:$0xff]
      %v2373 = vld [vmem:[%s31 + $0x10] sm:$0xff]
      %v2374 = vld [vmem:[%s31 + $0x18] sm:$0xff]
      %v2375 = vld [vmem:[%s31 + $0x20] sm:$0xff]
      %v2376 = vld [vmem:[%s33] sm:$0xff]
      %v2377 = vld [vmem:[%s33 + $0x8] sm:$0xff]
      %v2378 = vld [vmem:[%s33 + $0x10] sm:$0xff]
      %v2379 = vld [vmem:[%s33 + $0x18] sm:$0xff]
      %v2380 = vld [vmem:[%s35] sm:$0xff]
      %v2381 = vld [vmem:[%s35 + $0x8] sm:$0xff]
      %v2382 = vld [vmem:[%s35 + $0x10] sm:$0xff]
      %v2383 = vld [vmem:[%s35 + $0x18] sm:$0xff]
      %v2384 = vld [vmem:[%s37] sm:$0xff]
      %2386 = vset.pattern.permute.xlu0 0
      %2387 = vperm.xlu0 %2386, %v2366
      %v2388 = vpop.permute.xlu0 %2387
      %2391 = vset.pattern.permute.xlu0 0
      %2392 = vperm.xlu0 %2391, %v2367
      %v2393 = vpop.permute.xlu0 %2392
      %2396 = vset.pattern.permute.xlu0 0
      %2397 = vperm.xlu0 %2396, %v2368
      %v2398 = vpop.permute.xlu0 %2397
      %2401 = vset.pattern.permute.xlu0 0
      %2402 = vperm.xlu0 %2401, %v2369
      %v2403 = vpop.permute.xlu0 %2402
      %2406 = vset.pattern.permute.xlu0 0
      %2407 = vperm.xlu0 %2406, %v2370
      %v2408 = vpop.permute.xlu0 %2407
      %v2410 = vmul.f32 %v1976, %v2388
      %v2411 = vmul.f32 %v1979, %v2393
      %v2412 = vmul.f32 %v1982, %v2398
      %v2413 = vmul.f32 %v1985, %v2403
      %v2414 = vmul.f32 %v2364, %v2408
      %2416 = vset.pattern.permute.xlu0 0
      %2417 = vperm.xlu0 %2416, %v2371
      %v2418 = vpop.permute.xlu0 %2417
      %2421 = vset.pattern.permute.xlu0 0
      %2422 = vperm.xlu0 %2421, %v2372
      %v2423 = vpop.permute.xlu0 %2422
      %2426 = vset.pattern.permute.xlu0 0
      %2427 = vperm.xlu0 %2426, %v2373
      %v2428 = vpop.permute.xlu0 %2427
      %2431 = vset.pattern.permute.xlu0 0
      %2432 = vperm.xlu0 %2431, %v2374
      %v2433 = vpop.permute.xlu0 %2432
      %2436 = vset.pattern.permute.xlu0 0
      %2437 = vperm.xlu0 %2436, %v2375
      %v2438 = vpop.permute.xlu0 %2437
      %v2440 = vadd.f32 %v2410, %v2418
      %v2441 = vadd.f32 %v2411, %v2423
      %v2442 = vadd.f32 %v2412, %v2428
      %v2443 = vadd.f32 %v2413, %v2433
      %v2444 = vadd.f32 %v2414, %v2438
      %v2445 = vmax.f32 %v2440, 0.0
      %v2446 = vmax.f32 %v2441, 0.0
      %v2447 = vmax.f32 %v2442, 0.0
      %v2448 = vmax.f32 %v2443, 0.0
      %v2449 = vmax.f32 %v2444, 0.0
      %2451 = vset.pattern.permute.xlu0 0
      %2452 = vperm.xlu0 %2451, %v2380
      %v2453 = vpop.permute.xlu0 %2452
      %2456 = vset.pattern.permute.xlu0 0
      %2457 = vperm.xlu0 %2456, %v2381
      %v2458 = vpop.permute.xlu0 %2457
      %2461 = vset.pattern.permute.xlu0 0
      %2462 = vperm.xlu0 %2461, %v2382
      %v2463 = vpop.permute.xlu0 %2462
      %2466 = vset.pattern.permute.xlu0 0
      %2467 = vperm.xlu0 %2466, %v2383
      %v2468 = vpop.permute.xlu0 %2467
      %vm2470 = vcmask 326656
      %v2472 = vsel %vm2470, %v2376, 0
      %v2475 = vsel %vm2470, %v2377, 0
      %v2478 = vsel %vm2470, %v2378, 0
      %v2481 = vsel %vm2470, %v2379, 0
      %2483 = vmatpush.msra.mxu0 0.0
      %2484 = vmatpush.msra.mxu0 0.0
      %2485 = vmatpush.msra.mxu0 0.0
      %2486 = vmatpush.msra.mxu0 0.0
      %2487 = vmatpush.msra.mxu0 0.0
      %2488 = vmatpush.msra.mxu0 0.0
      %2489 = vmatpush.msra.mxu0 0.0
      %2490 = vmatpush.msra.mxu0 0.0
      %2491 = vmatpush.msra.mxu0 0.0
      %2492 = vmatpush.msra.mxu0 0.0
      %2493 = vmatpush.msra.mxu0 0.0
      %2494 = vmatpush.msra.mxu0 %v2449
      %2495 = vmatpush.msra.mxu0 %v2448
      %2496 = vmatpush.msra.mxu0 %v2447
      %2497 = vmatpush.msra.mxu0 %v2446
      %2498 = vmatpush.msra.mxu0 %v2445
      %2499 = vmatmul.f32.gmra.mxu0 %v2472
      %v2500 = vpop.f32.mrf.mxu0
      %v2501 = vadd.f32 %v2453, %v2500
      %2502 = vmatmul.f32.gmra.mxu0 %v2475
      %v2503 = vpop.f32.mrf.mxu0
      %v2504 = vadd.f32 %v2458, %v2503
      %2505 = vmatmul.f32.gmra.mxu0 %v2478
      %v2506 = vpop.f32.mrf.mxu0
      %v2507 = vadd.f32 %v2463, %v2506
      %2508 = vmatmul.f32.gmra.mxu0 %v2481
      %v2509 = vpop.f32.mrf.mxu0
      %v2510 = vadd.f32 %v2468, %v2509
      %2511 = vdwg.mxu0
      %v2512 = vmax.f32 %v2501, 0.0
      %v2513 = vmax.f32 %v2504, 0.0
      %v2514 = vmax.f32 %v2507, 0.0
      %v2515 = vmax.f32 %v2510, 0.0
      %2516 = vrot.lane.b32.xlu0 %v2512, 1
      %v2517 = vpop.permute.xlu0 %2516
      %2518 = vrot.lane.b32.xlu0 %v2513, 1
      %v2519 = vpop.permute.xlu0 %2518
      %2520 = vrot.lane.b32.xlu0 %v2514, 1
      %v2521 = vpop.permute.xlu0 %2520
      %2522 = vrot.lane.b32.xlu0 %v2515, 1
      %v2523 = vpop.permute.xlu0 %2522
      %v2524 = vsel %vm1911, 0.0, %v2517
      %v2525 = vsel %vm1911, 0.0, %v2519
      %v2526 = vsel %vm1911, 0.0, %v2521
      %v2527 = vsel %vm1911, 0.0, %v2523
      %2528 = vrot.lane.b32.xlu0 %v2512, 127
      %v2529 = vpop.permute.xlu0 %2528
      %2530 = vrot.lane.b32.xlu0 %v2513, 127
      %v2531 = vpop.permute.xlu0 %2530
      %2532 = vrot.lane.b32.xlu0 %v2514, 127
      %v2533 = vpop.permute.xlu0 %2532
      %2534 = vrot.lane.b32.xlu0 %v2515, 127
      %v2535 = vpop.permute.xlu0 %2534
      %v2536 = vsel %vm1918, 0.0, %v2529
      %v2537 = vsel %vm1918, 0.0, %v2531
      %v2538 = vsel %vm1918, 0.0, %v2533
      %v2539 = vsel %vm1918, 0.0, %v2535
      %v2541 = vsel %vm2342, %v2384, 0
      %2543 = vmatpush.msra.mxu0 0.0
      %2544 = vmatpush.msra.mxu0 0.0
      %2545 = vmatpush.msra.mxu0 0.0
      %2546 = vmatpush.msra.mxu0 0.0
      %2547 = vmatpush.msra.mxu0 %v2539
      %2548 = vmatpush.msra.mxu0 %v2538
      %2549 = vmatpush.msra.mxu0 %v2537
      %2550 = vmatpush.msra.mxu0 %v2536
      %2551 = vmatpush.msra.mxu0 %v2515
      %2552 = vmatpush.msra.mxu0 %v2514
      %2553 = vmatpush.msra.mxu0 %v2513
      %2554 = vmatpush.msra.mxu0 %v2512
      %2555 = vmatpush.msra.mxu0 %v2527
      %2556 = vmatpush.msra.mxu0 %v2526
      %2557 = vmatpush.msra.mxu0 %v2525
      %2558 = vmatpush.msra.mxu0 %v2524
      %2559 = vmatmul.f32.gmra.mxu0 %v2541
      %v2560 = vpop.f32.mrf.mxu0
      %v2561 = vadd.f32 0.0, %v2560
      %2562 = vdwg.mxu0
      %v2563 = vld [vmem:[%s39] sm:$0xff]
      %v2564 = vld [vmem:[%s39 + $0x8] sm:$0xff]
      %v2565 = vld [vmem:[%s39 + $0x10] sm:$0xff]
      %v2566 = vld [vmem:[%s39 + $0x18] sm:$0xff]
      %v2567 = vld [vmem:[%s39 + $0x20] sm:$0xff]
      %v2568 = vld [vmem:[%s39 + $0x28] sm:$0xff]
      %v2569 = vld [vmem:[%s41] sm:$0xff]
      %v2570 = vld [vmem:[%s41 + $0x8] sm:$0xff]
      %v2571 = vld [vmem:[%s41 + $0x10] sm:$0xff]
      %v2572 = vld [vmem:[%s41 + $0x18] sm:$0xff]
      %v2573 = vld [vmem:[%s41 + $0x20] sm:$0xff]
      %v2574 = vld [vmem:[%s41 + $0x28] sm:$0xff]
      %v2575 = vld [vmem:[%s43] sm:$0xff]
      %v2576 = vld [vmem:[%s43 + $0x8] sm:$0xff]
      %v2577 = vld [vmem:[%s43 + $0x10] sm:$0xff]
      %v2578 = vld [vmem:[%s43 + $0x18] sm:$0xff]
      %v2579 = vld [vmem:[%s45] sm:$0xff]
      %v2580 = vld [vmem:[%s45 + $0x8] sm:$0xff]
      %v2581 = vld [vmem:[%s45 + $0x10] sm:$0xff]
      %v2582 = vld [vmem:[%s45 + $0x18] sm:$0xff]
      %v2583 = vld [vmem:[%s47] sm:$0xff]
      %2585 = vset.pattern.permute.xlu0 0
      %2586 = vperm.xlu0 %2585, %v2563
      %v2587 = vpop.permute.xlu0 %2586
      %2590 = vset.pattern.permute.xlu0 0
      %2591 = vperm.xlu0 %2590, %v2564
      %v2592 = vpop.permute.xlu0 %2591
      %2595 = vset.pattern.permute.xlu0 0
      %2596 = vperm.xlu0 %2595, %v2565
      %v2597 = vpop.permute.xlu0 %2596
      %2600 = vset.pattern.permute.xlu0 0
      %2601 = vperm.xlu0 %2600, %v2566
      %v2602 = vpop.permute.xlu0 %2601
      %2605 = vset.pattern.permute.xlu0 0
      %2606 = vperm.xlu0 %2605, %v2567
      %v2607 = vpop.permute.xlu0 %2606
      %2610 = vset.pattern.permute.xlu0 0
      %2611 = vperm.xlu0 %2610, %v2568
      %v2612 = vpop.permute.xlu0 %2611
      %v2614 = vmul.f32 %v1976, %v2587
      %v2615 = vmul.f32 %v1979, %v2592
      %v2616 = vmul.f32 %v1982, %v2597
      %v2617 = vmul.f32 %v1985, %v2602
      %v2618 = vmul.f32 %v2364, %v2607
      %v2619 = vmul.f32 %v2561, %v2612
      %2621 = vset.pattern.permute.xlu0 0
      %2622 = vperm.xlu0 %2621, %v2569
      %v2623 = vpop.permute.xlu0 %2622
      %2626 = vset.pattern.permute.xlu0 0
      %2627 = vperm.xlu0 %2626, %v2570
      %v2628 = vpop.permute.xlu0 %2627
      %2631 = vset.pattern.permute.xlu0 0
      %2632 = vperm.xlu0 %2631, %v2571
      %v2633 = vpop.permute.xlu0 %2632
      %2636 = vset.pattern.permute.xlu0 0
      %2637 = vperm.xlu0 %2636, %v2572
      %v2638 = vpop.permute.xlu0 %2637
      %2641 = vset.pattern.permute.xlu0 0
      %2642 = vperm.xlu0 %2641, %v2573
      %v2643 = vpop.permute.xlu0 %2642
      %2646 = vset.pattern.permute.xlu0 0
      %2647 = vperm.xlu0 %2646, %v2574
      %v2648 = vpop.permute.xlu0 %2647
      %v2650 = vadd.f32 %v2614, %v2623
      %v2651 = vadd.f32 %v2615, %v2628
      %v2652 = vadd.f32 %v2616, %v2633
      %v2653 = vadd.f32 %v2617, %v2638
      %v2654 = vadd.f32 %v2618, %v2643
      %v2655 = vadd.f32 %v2619, %v2648
      %v2656 = vmax.f32 %v2650, 0.0
      %v2657 = vmax.f32 %v2651, 0.0
      %v2658 = vmax.f32 %v2652, 0.0
      %v2659 = vmax.f32 %v2653, 0.0
      %v2660 = vmax.f32 %v2654, 0.0
      %v2661 = vmax.f32 %v2655, 0.0
      %2663 = vset.pattern.permute.xlu0 0
      %2664 = vperm.xlu0 %2663, %v2579
      %v2665 = vpop.permute.xlu0 %2664
      %2668 = vset.pattern.permute.xlu0 0
      %2669 = vperm.xlu0 %2668, %v2580
      %v2670 = vpop.permute.xlu0 %2669
      %2673 = vset.pattern.permute.xlu0 0
      %2674 = vperm.xlu0 %2673, %v2581
      %v2675 = vpop.permute.xlu0 %2674
      %2678 = vset.pattern.permute.xlu0 0
      %2679 = vperm.xlu0 %2678, %v2582
      %v2680 = vpop.permute.xlu0 %2679
      %v2683 = vsel %vm1945, %v2575, 0
      %v2686 = vsel %vm1945, %v2576, 0
      %v2689 = vsel %vm1945, %v2577, 0
      %v2692 = vsel %vm1945, %v2578, 0
      %2694 = vmatpush.msra.mxu0 0.0
      %2695 = vmatpush.msra.mxu0 0.0
      %2696 = vmatpush.msra.mxu0 0.0
      %2697 = vmatpush.msra.mxu0 0.0
      %2698 = vmatpush.msra.mxu0 0.0
      %2699 = vmatpush.msra.mxu0 0.0
      %2700 = vmatpush.msra.mxu0 0.0
      %2701 = vmatpush.msra.mxu0 0.0
      %2702 = vmatpush.msra.mxu0 0.0
      %2703 = vmatpush.msra.mxu0 0.0
      %2704 = vmatpush.msra.mxu0 %v2661
      %2705 = vmatpush.msra.mxu0 %v2660
      %2706 = vmatpush.msra.mxu0 %v2659
      %2707 = vmatpush.msra.mxu0 %v2658
      %2708 = vmatpush.msra.mxu0 %v2657
      %2709 = vmatpush.msra.mxu0 %v2656
      %2710 = vmatmul.f32.gmra.mxu0 %v2683
      %v2711 = vpop.f32.mrf.mxu0
      %v2712 = vadd.f32 %v2665, %v2711
      %2713 = vmatmul.f32.gmra.mxu0 %v2686
      %v2714 = vpop.f32.mrf.mxu0
      %v2715 = vadd.f32 %v2670, %v2714
      %2716 = vmatmul.f32.gmra.mxu0 %v2689
      %v2717 = vpop.f32.mrf.mxu0
      %v2718 = vadd.f32 %v2675, %v2717
      %2719 = vmatmul.f32.gmra.mxu0 %v2692
      %v2720 = vpop.f32.mrf.mxu0
      %v2721 = vadd.f32 %v2680, %v2720
      %2722 = vdwg.mxu0
      %v2723 = vmax.f32 %v2712, 0.0
      %v2724 = vmax.f32 %v2715, 0.0
      %v2725 = vmax.f32 %v2718, 0.0
      %v2726 = vmax.f32 %v2721, 0.0
      %2727 = vrot.lane.b32.xlu0 %v2723, 1
      %v2728 = vpop.permute.xlu0 %2727
      %2729 = vrot.lane.b32.xlu0 %v2724, 1
      %v2730 = vpop.permute.xlu0 %2729
      %2731 = vrot.lane.b32.xlu0 %v2725, 1
      %v2732 = vpop.permute.xlu0 %2731
      %2733 = vrot.lane.b32.xlu0 %v2726, 1
      %v2734 = vpop.permute.xlu0 %2733
      %v2735 = vsel %vm1911, 0.0, %v2728
      %v2736 = vsel %vm1911, 0.0, %v2730
      %v2737 = vsel %vm1911, 0.0, %v2732
      %v2738 = vsel %vm1911, 0.0, %v2734
      %2739 = vrot.lane.b32.xlu0 %v2723, 127
      %v2740 = vpop.permute.xlu0 %2739
      %2741 = vrot.lane.b32.xlu0 %v2724, 127
      %v2742 = vpop.permute.xlu0 %2741
      %2743 = vrot.lane.b32.xlu0 %v2725, 127
      %v2744 = vpop.permute.xlu0 %2743
      %2745 = vrot.lane.b32.xlu0 %v2726, 127
      %v2746 = vpop.permute.xlu0 %2745
      %v2747 = vsel %vm1918, 0.0, %v2740
      %v2748 = vsel %vm1918, 0.0, %v2742
      %v2749 = vsel %vm1918, 0.0, %v2744
      %v2750 = vsel %vm1918, 0.0, %v2746
      %v2752 = vsel %vm2342, %v2583, 0
      %2754 = vmatpush.msra.mxu0 0.0
      %2755 = vmatpush.msra.mxu0 0.0
      %2756 = vmatpush.msra.mxu0 0.0
      %2757 = vmatpush.msra.mxu0 0.0
      %2758 = vmatpush.msra.mxu0 %v2750
      %2759 = vmatpush.msra.mxu0 %v2749
      %2760 = vmatpush.msra.mxu0 %v2748
      %2761 = vmatpush.msra.mxu0 %v2747
      %2762 = vmatpush.msra.mxu0 %v2726
      %2763 = vmatpush.msra.mxu0 %v2725
      %2764 = vmatpush.msra.mxu0 %v2724
      %2765 = vmatpush.msra.mxu0 %v2723
      %2766 = vmatpush.msra.mxu0 %v2738
      %2767 = vmatpush.msra.mxu0 %v2737
      %2768 = vmatpush.msra.mxu0 %v2736
      %2769 = vmatpush.msra.mxu0 %v2735
      %2770 = vmatmul.f32.gmra.mxu0 %v2752
      %v2771 = vpop.f32.mrf.mxu0
      %v2772 = vadd.f32 0.0, %v2771
      %2773 = vdwg.mxu0
      %v2774 = vld [vmem:[%s49] sm:$0xff]
      %v2775 = vld [vmem:[%s49 + $0x8] sm:$0xff]
      %v2776 = vld [vmem:[%s49 + $0x10] sm:$0xff]
      %v2777 = vld [vmem:[%s49 + $0x18] sm:$0xff]
      %v2778 = vld [vmem:[%s49 + $0x20] sm:$0xff]
      %v2779 = vld [vmem:[%s49 + $0x28] sm:$0xff]
      %v2780 = vld [vmem:[%s49 + $0x30] sm:$0xff]
      %v2781 = vld [vmem:[%s51] sm:$0xff]
      %v2782 = vld [vmem:[%s51 + $0x8] sm:$0xff]
      %v2783 = vld [vmem:[%s51 + $0x10] sm:$0xff]
      %v2784 = vld [vmem:[%s51 + $0x18] sm:$0xff]
      %v2785 = vld [vmem:[%s51 + $0x20] sm:$0xff]
      %v2786 = vld [vmem:[%s51 + $0x28] sm:$0xff]
      %v2787 = vld [vmem:[%s51 + $0x30] sm:$0xff]
      %v2788 = vld [vmem:[%s53] sm:$0xff]
      %v2789 = vld [vmem:[%s53 + $0x8] sm:$0xff]
      %v2790 = vld [vmem:[%s53 + $0x10] sm:$0xff]
      %v2791 = vld [vmem:[%s53 + $0x18] sm:$0xff]
      %v2792 = vld [vmem:[%s55] sm:$0xff]
      %v2793 = vld [vmem:[%s55 + $0x8] sm:$0xff]
      %v2794 = vld [vmem:[%s55 + $0x10] sm:$0xff]
      %v2795 = vld [vmem:[%s55 + $0x18] sm:$0xff]
      %v2796 = vld [vmem:[%s57] sm:$0xff]
      %2798 = vset.pattern.permute.xlu0 0
      %2799 = vperm.xlu0 %2798, %v2774
      %v2800 = vpop.permute.xlu0 %2799
      %2803 = vset.pattern.permute.xlu0 0
      %2804 = vperm.xlu0 %2803, %v2775
      %v2805 = vpop.permute.xlu0 %2804
      %2808 = vset.pattern.permute.xlu0 0
      %2809 = vperm.xlu0 %2808, %v2776
      %v2810 = vpop.permute.xlu0 %2809
      %2813 = vset.pattern.permute.xlu0 0
      %2814 = vperm.xlu0 %2813, %v2777
      %v2815 = vpop.permute.xlu0 %2814
      %2818 = vset.pattern.permute.xlu0 0
      %2819 = vperm.xlu0 %2818, %v2778
      %v2820 = vpop.permute.xlu0 %2819
      %2823 = vset.pattern.permute.xlu0 0
      %2824 = vperm.xlu0 %2823, %v2779
      %v2825 = vpop.permute.xlu0 %2824
      %2828 = vset.pattern.permute.xlu0 0
      %2829 = vperm.xlu0 %2828, %v2780
      %v2830 = vpop.permute.xlu0 %2829
      %v2832 = vmul.f32 %v1976, %v2800
      %v2833 = vmul.f32 %v1979, %v2805
      %v2834 = vmul.f32 %v1982, %v2810
      %v2835 = vmul.f32 %v1985, %v2815
      %v2836 = vmul.f32 %v2364, %v2820
      %v2837 = vmul.f32 %v2561, %v2825
      %v2838 = vmul.f32 %v2772, %v2830
      %2840 = vset.pattern.permute.xlu0 0
      %2841 = vperm.xlu0 %2840, %v2781
      %v2842 = vpop.permute.xlu0 %2841
      %2845 = vset.pattern.permute.xlu0 0
      %2846 = vperm.xlu0 %2845, %v2782
      %v2847 = vpop.permute.xlu0 %2846
      %2850 = vset.pattern.permute.xlu0 0
      %2851 = vperm.xlu0 %2850, %v2783
      %v2852 = vpop.permute.xlu0 %2851
      %2855 = vset.pattern.permute.xlu0 0
      %2856 = vperm.xlu0 %2855, %v2784
      %v2857 = vpop.permute.xlu0 %2856
      %2860 = vset.pattern.permute.xlu0 0
      %2861 = vperm.xlu0 %2860, %v2785
      %v2862 = vpop.permute.xlu0 %2861
      %2865 = vset.pattern.permute.xlu0 0
      %2866 = vperm.xlu0 %2865, %v2786
      %v2867 = vpop.permute.xlu0 %2866
      %2870 = vset.pattern.permute.xlu0 0
      %2871 = vperm.xlu0 %2870, %v2787
      %v2872 = vpop.permute.xlu0 %2871
      %v2874 = vadd.f32 %v2832, %v2842
      %v2875 = vadd.f32 %v2833, %v2847
      %v2876 = vadd.f32 %v2834, %v2852
      %v2877 = vadd.f32 %v2835, %v2857
      %v2878 = vadd.f32 %v2836, %v2862
      %v2879 = vadd.f32 %v2837, %v2867
      %v2880 = vadd.f32 %v2838, %v2872
      %v2881 = vmax.f32 %v2874, 0.0
      %v2882 = vmax.f32 %v2875, 0.0
      %v2883 = vmax.f32 %v2876, 0.0
      %v2884 = vmax.f32 %v2877, 0.0
      %v2885 = vmax.f32 %v2878, 0.0
      %v2886 = vmax.f32 %v2879, 0.0
      %v2887 = vmax.f32 %v2880, 0.0
      %2889 = vset.pattern.permute.xlu0 0
      %2890 = vperm.xlu0 %2889, %v2792
      %v2891 = vpop.permute.xlu0 %2890
      %2894 = vset.pattern.permute.xlu0 0
      %2895 = vperm.xlu0 %2894, %v2793
      %v2896 = vpop.permute.xlu0 %2895
      %2899 = vset.pattern.permute.xlu0 0
      %2900 = vperm.xlu0 %2899, %v2794
      %v2901 = vpop.permute.xlu0 %2900
      %2904 = vset.pattern.permute.xlu0 0
      %2905 = vperm.xlu0 %2904, %v2795
      %v2906 = vpop.permute.xlu0 %2905
      %vm2908 = vcmask 457728
      %v2910 = vsel %vm2908, %v2788, 0
      %v2913 = vsel %vm2908, %v2789, 0
      %v2916 = vsel %vm2908, %v2790, 0
      %v2919 = vsel %vm2908, %v2791, 0
      %2921 = vmatpush.msra.mxu0 0.0
      %2922 = vmatpush.msra.mxu0 0.0
      %2923 = vmatpush.msra.mxu0 0.0
      %2924 = vmatpush.msra.mxu0 0.0
      %2925 = vmatpush.msra.mxu0 0.0
      %2926 = vmatpush.msra.mxu0 0.0
      %2927 = vmatpush.msra.mxu0 0.0
      %2928 = vmatpush.msra.mxu0 0.0
      %2929 = vmatpush.msra.mxu0 0.0
      %2930 = vmatpush.msra.mxu0 %v2887
      %2931 = vmatpush.msra.mxu0 %v2886
      %2932 = vmatpush.msra.mxu0 %v2885
      %2933 = vmatpush.msra.mxu0 %v2884
      %2934 = vmatpush.msra.mxu0 %v2883
      %2935 = vmatpush.msra.mxu0 %v2882
      %2936 = vmatpush.msra.mxu0 %v2881
      %2937 = vmatmul.f32.gmra.mxu0 %v2910
      %v2938 = vpop.f32.mrf.mxu0
      %v2939 = vadd.f32 %v2891, %v2938
      %2940 = vmatmul.f32.gmra.mxu0 %v2913
      %v2941 = vpop.f32.mrf.mxu0
      %v2942 = vadd.f32 %v2896, %v2941
      %2943 = vmatmul.f32.gmra.mxu0 %v2916
      %v2944 = vpop.f32.mrf.mxu0
      %v2945 = vadd.f32 %v2901, %v2944
      %2946 = vmatmul.f32.gmra.mxu0 %v2919
      %v2947 = vpop.f32.mrf.mxu0
      %v2948 = vadd.f32 %v2906, %v2947
      %2949 = vdwg.mxu0
      %v2950 = vmax.f32 %v2939, 0.0
      %v2951 = vmax.f32 %v2942, 0.0
      %v2952 = vmax.f32 %v2945, 0.0
      %v2953 = vmax.f32 %v2948, 0.0
      %2954 = vrot.lane.b32.xlu0 %v2950, 1
      %v2955 = vpop.permute.xlu0 %2954
      %2956 = vrot.lane.b32.xlu0 %v2951, 1
      %v2957 = vpop.permute.xlu0 %2956
      %2958 = vrot.lane.b32.xlu0 %v2952, 1
      %v2959 = vpop.permute.xlu0 %2958
      %2960 = vrot.lane.b32.xlu0 %v2953, 1
      %v2961 = vpop.permute.xlu0 %2960
      %v2962 = vsel %vm1911, 0.0, %v2955
      %v2963 = vsel %vm1911, 0.0, %v2957
      %v2964 = vsel %vm1911, 0.0, %v2959
      %v2965 = vsel %vm1911, 0.0, %v2961
      %2966 = vrot.lane.b32.xlu0 %v2950, 127
      %v2967 = vpop.permute.xlu0 %2966
      %2968 = vrot.lane.b32.xlu0 %v2951, 127
      %v2969 = vpop.permute.xlu0 %2968
      %2970 = vrot.lane.b32.xlu0 %v2952, 127
      %v2971 = vpop.permute.xlu0 %2970
      %2972 = vrot.lane.b32.xlu0 %v2953, 127
      %v2973 = vpop.permute.xlu0 %2972
      %v2974 = vsel %vm1918, 0.0, %v2967
      %v2975 = vsel %vm1918, 0.0, %v2969
      %v2976 = vsel %vm1918, 0.0, %v2971
      %v2977 = vsel %vm1918, 0.0, %v2973
      %v2979 = vsel %vm2342, %v2796, 0
      %2981 = vmatpush.msra.mxu0 0.0
      %2982 = vmatpush.msra.mxu0 0.0
      %2983 = vmatpush.msra.mxu0 0.0
      %2984 = vmatpush.msra.mxu0 0.0
      %2985 = vmatpush.msra.mxu0 %v2977
      %2986 = vmatpush.msra.mxu0 %v2976
      %2987 = vmatpush.msra.mxu0 %v2975
      %2988 = vmatpush.msra.mxu0 %v2974
      %2989 = vmatpush.msra.mxu0 %v2953
      %2990 = vmatpush.msra.mxu0 %v2952
      %2991 = vmatpush.msra.mxu0 %v2951
      %2992 = vmatpush.msra.mxu0 %v2950
      %2993 = vmatpush.msra.mxu0 %v2965
      %2994 = vmatpush.msra.mxu0 %v2964
      %2995 = vmatpush.msra.mxu0 %v2963
      %2996 = vmatpush.msra.mxu0 %v2962
      %2997 = vmatmul.f32.gmra.mxu0 %v2979
      %v2998 = vpop.f32.mrf.mxu0
      %v2999 = vadd.f32 0.0, %v2998
      %3000 = vdwg.mxu0
      %v3001 = vld [vmem:[%s59] sm:$0xff]
      %v3002 = vld [vmem:[%s59 + $0x8] sm:$0xff]
      %v3003 = vld [vmem:[%s59 + $0x10] sm:$0xff]
      %v3004 = vld [vmem:[%s59 + $0x18] sm:$0xff]
      %v3005 = vld [vmem:[%s59 + $0x20] sm:$0xff]
      %v3006 = vld [vmem:[%s59 + $0x28] sm:$0xff]
      %v3007 = vld [vmem:[%s59 + $0x30] sm:$0xff]
      %v3008 = vld [vmem:[%s59 + $0x38] sm:$0xff]
      %v3009 = vld [vmem:[%s61] sm:$0xff]
      %v3010 = vld [vmem:[%s61 + $0x8] sm:$0xff]
      %v3011 = vld [vmem:[%s61 + $0x10] sm:$0xff]
      %v3012 = vld [vmem:[%s61 + $0x18] sm:$0xff]
      %v3013 = vld [vmem:[%s61 + $0x20] sm:$0xff]
      %v3014 = vld [vmem:[%s61 + $0x28] sm:$0xff]
      %v3015 = vld [vmem:[%s61 + $0x30] sm:$0xff]
      %v3016 = vld [vmem:[%s61 + $0x38] sm:$0xff]
      %v3017 = vld [vmem:[%s63] sm:$0xff]
      %v3018 = vld [vmem:[%s63 + $0x8] sm:$0xff]
      %v3019 = vld [vmem:[%s63 + $0x10] sm:$0xff]
      %v3020 = vld [vmem:[%s63 + $0x18] sm:$0xff]
      %v3021 = vld [vmem:[%s65] sm:$0xff]
      %v3022 = vld [vmem:[%s65 + $0x8] sm:$0xff]
      %v3023 = vld [vmem:[%s65 + $0x10] sm:$0xff]
      %v3024 = vld [vmem:[%s65 + $0x18] sm:$0xff]
      %v3025 = vld [vmem:[%s65 + $0x20] sm:$0xff]
      %v3026 = vld [vmem:[%s65 + $0x28] sm:$0xff]
      %v3027 = vld [vmem:[%s65 + $0x30] sm:$0xff]
      %v3028 = vld [vmem:[%s65 + $0x38] sm:$0xff]
      %v3029 = vld [vmem:[%s65 + $0x40] sm:$0xff]
      %v3030 = vld [vmem:[%s65 + $0x48] sm:$0xff]
      %v3031 = vld [vmem:[%s65 + $0x50] sm:$0xff]
      %v3032 = vld [vmem:[%s65 + $0x58] sm:$0xff]
      %v3033 = vld [vmem:[%s65 + $0x60] sm:$0xff]
      %v3034 = vld [vmem:[%s65 + $0x68] sm:$0xff]
      %v3035 = vld [vmem:[%s65 + $0x70] sm:$0xff]
      %v3036 = vld [vmem:[%s65 + $0x78] sm:$0xff]
      %3038 = vset.pattern.permute.xlu0 0
      %3039 = vperm.xlu0 %3038, %v3001
      %v3040 = vpop.permute.xlu0 %3039
      %3043 = vset.pattern.permute.xlu0 0
      %3044 = vperm.xlu0 %3043, %v3002
      %v3045 = vpop.permute.xlu0 %3044
      %3048 = vset.pattern.permute.xlu0 0
      %3049 = vperm.xlu0 %3048, %v3003
      %v3050 = vpop.permute.xlu0 %3049
      %3053 = vset.pattern.permute.xlu0 0
      %3054 = vperm.xlu0 %3053, %v3004
      %v3055 = vpop.permute.xlu0 %3054
      %3058 = vset.pattern.permute.xlu0 0
      %3059 = vperm.xlu0 %3058, %v3005
      %v3060 = vpop.permute.xlu0 %3059
      %3063 = vset.pattern.permute.xlu0 0
      %3064 = vperm.xlu0 %3063, %v3006
      %v3065 = vpop.permute.xlu0 %3064
      %3068 = vset.pattern.permute.xlu0 0
      %3069 = vperm.xlu0 %3068, %v3007
      %v3070 = vpop.permute.xlu0 %3069
      %3073 = vset.pattern.permute.xlu0 0
      %3074 = vperm.xlu0 %3073, %v3008
      %v3075 = vpop.permute.xlu0 %3074
      %v3077 = vmul.f32 %v1976, %v3040
      %v3078 = vmul.f32 %v1979, %v3045
      %v3079 = vmul.f32 %v1982, %v3050
      %v3080 = vmul.f32 %v1985, %v3055
      %v3081 = vmul.f32 %v2364, %v3060
      %v3082 = vmul.f32 %v2561, %v3065
      %v3083 = vmul.f32 %v2772, %v3070
      %v3084 = vmul.f32 %v2999, %v3075
      %3086 = vset.pattern.permute.xlu0 0
      %3087 = vperm.xlu0 %3086, %v3009
      %v3088 = vpop.permute.xlu0 %3087
      %3091 = vset.pattern.permute.xlu0 0
      %3092 = vperm.xlu0 %3091, %v3010
      %v3093 = vpop.permute.xlu0 %3092
      %3096 = vset.pattern.permute.xlu0 0
      %3097 = vperm.xlu0 %3096, %v3011
      %v3098 = vpop.permute.xlu0 %3097
      %3101 = vset.pattern.permute.xlu0 0
      %3102 = vperm.xlu0 %3101, %v3012
      %v3103 = vpop.permute.xlu0 %3102
      %3106 = vset.pattern.permute.xlu0 0
      %3107 = vperm.xlu0 %3106, %v3013
      %v3108 = vpop.permute.xlu0 %3107
      %3111 = vset.pattern.permute.xlu0 0
      %3112 = vperm.xlu0 %3111, %v3014
      %v3113 = vpop.permute.xlu0 %3112
      %3116 = vset.pattern.permute.xlu0 0
      %3117 = vperm.xlu0 %3116, %v3015
      %v3118 = vpop.permute.xlu0 %3117
      %3121 = vset.pattern.permute.xlu0 0
      %3122 = vperm.xlu0 %3121, %v3016
      %v3123 = vpop.permute.xlu0 %3122
      %v3125 = vadd.f32 %v3077, %v3088
      %v3126 = vadd.f32 %v3078, %v3093
      %v3127 = vadd.f32 %v3079, %v3098
      %v3128 = vadd.f32 %v3080, %v3103
      %v3129 = vadd.f32 %v3081, %v3108
      %v3130 = vadd.f32 %v3082, %v3113
      %v3131 = vadd.f32 %v3083, %v3118
      %v3132 = vadd.f32 %v3084, %v3123
      %v3133 = vmax.f32 %v3125, 0.0
      %v3134 = vmax.f32 %v3126, 0.0
      %v3135 = vmax.f32 %v3127, 0.0
      %v3136 = vmax.f32 %v3128, 0.0
      %v3137 = vmax.f32 %v3129, 0.0
      %v3138 = vmax.f32 %v3130, 0.0
      %v3139 = vmax.f32 %v3131, 0.0
      %v3140 = vmax.f32 %v3132, 0.0
      %vm3141 = vcmask 523264
      %v3143 = vsel %vm3141, %v3017, 0
      %v3146 = vsel %vm3141, %v3018, 0
      %v3149 = vsel %vm3141, %v3019, 0
      %v3152 = vsel %vm3141, %v3020, 0
      %3154 = vmatpush.msra.mxu0 0.0
      %3155 = vmatpush.msra.mxu0 0.0
      %3156 = vmatpush.msra.mxu0 0.0
      %3157 = vmatpush.msra.mxu0 0.0
      %3158 = vmatpush.msra.mxu0 0.0
      %3159 = vmatpush.msra.mxu0 0.0
      %3160 = vmatpush.msra.mxu0 0.0
      %3161 = vmatpush.msra.mxu0 0.0
      %3162 = vmatpush.msra.mxu0 %v3140
      %3163 = vmatpush.msra.mxu0 %v3139
      %3164 = vmatpush.msra.mxu0 %v3138
      %3165 = vmatpush.msra.mxu0 %v3137
      %3166 = vmatpush.msra.mxu0 %v3136
      %3167 = vmatpush.msra.mxu0 %v3135
      %3168 = vmatpush.msra.mxu0 %v3134
      %3169 = vmatpush.msra.mxu0 %v3133
      %3170 = vmatmul.f32.gmra.mxu0 %v3143
      %v3171 = vpop.f32.mrf.mxu0
      %v3172 = vadd.f32 0.0, %v3171
      %3173 = vmatmul.f32.gmra.mxu0 %v3146
      %v3174 = vpop.f32.mrf.mxu0
      %v3175 = vadd.f32 0.0, %v3174
      %3176 = vmatmul.f32.gmra.mxu0 %v3149
      %v3177 = vpop.f32.mrf.mxu0
      %v3178 = vadd.f32 0.0, %v3177
      %3179 = vmatmul.f32.gmra.mxu0 %v3152
      %v3180 = vpop.f32.mrf.mxu0
      %v3181 = vadd.f32 0.0, %v3180
      %3182 = vdwg.mxu0
      %3183 = vmatpush.msra.mxu0 %v3036
      %3184 = vmatpush.msra.mxu0 %v3035
      %3185 = vmatpush.msra.mxu0 %v3034
      %3186 = vmatpush.msra.mxu0 %v3033
      %3187 = vmatpush.msra.mxu0 %v3032
      %3188 = vmatpush.msra.mxu0 %v3031
      %3189 = vmatpush.msra.mxu0 %v3030
      %3190 = vmatpush.msra.mxu0 %v3029
      %3191 = vmatpush.msra.mxu0 %v3028
      %3192 = vmatpush.msra.mxu0 %v3027
      %3193 = vmatpush.msra.mxu0 %v3026
      %3194 = vmatpush.msra.mxu0 %v3025
      %3195 = vmatpush.msra.mxu0 %v3024
      %3196 = vmatpush.msra.mxu0 %v3023
      %3197 = vmatpush.msra.mxu0 %v3022
      %3198 = vmatpush.msra.mxu0 %v3021
      %3199 = vmatmul.f32.gmra.mxu0 %v3172
      %v3200 = vpop.f32.mrf.mxu0
      %v3201 = vadd.f32 %v2088, %v3200
      %3202 = vmatmul.f32.gmra.mxu0 %v3175
      %v3203 = vpop.f32.mrf.mxu0
      %v3204 = vadd.f32 %v2089, %v3203
      %3205 = vmatmul.f32.gmra.mxu0 %v3178
      %v3206 = vpop.f32.mrf.mxu0
      %v3207 = vadd.f32 %v2090, %v3206
      %3208 = vmatmul.f32.gmra.mxu0 %v3181
      %v3209 = vpop.f32.mrf.mxu0
      %v3210 = vadd.f32 %v2091, %v3209
      %3211 = vdwg.mxu0
      %v3212 = vld [vmem:[%s67] sm:$0xff]
      %v3213 = vld [vmem:[%s67 + $0x8] sm:$0xff]
      %v3214 = vld [vmem:[%s67 + $0x10] sm:$0xff]
      %v3215 = vld [vmem:[%s67 + $0x18] sm:$0xff]
      %v3216 = vld [vmem:[%s69] sm:$0xff]
      %v3217 = vld [vmem:[%s69 + $0x8] sm:$0xff]
      %v3218 = vld [vmem:[%s69 + $0x10] sm:$0xff]
      %v3219 = vld [vmem:[%s69 + $0x18] sm:$0xff]
      %v3220 = vld [vmem:[%s71] sm:$0xff]
      %v3221 = vld [vmem:[%s71 + $0x8] sm:$0xff]
      %v3222 = vld [vmem:[%s71 + $0x10] sm:$0xff]
      %v3223 = vld [vmem:[%s71 + $0x18] sm:$0xff]
      %v3224 = vld [vmem:[%s73] sm:$0xff]
      %v3225 = vld [vmem:[%s73 + $0x8] sm:$0xff]
      %v3226 = vld [vmem:[%s73 + $0x10] sm:$0xff]
      %v3227 = vld [vmem:[%s73 + $0x18] sm:$0xff]
      %v3228 = vld [vmem:[%s75] sm:$0xff]
      %3230 = vset.pattern.permute.xlu0 0
      %3231 = vperm.xlu0 %3230, %v3212
      %v3232 = vpop.permute.xlu0 %3231
      %3235 = vset.pattern.permute.xlu0 0
      %3236 = vperm.xlu0 %3235, %v3213
      %v3237 = vpop.permute.xlu0 %3236
      %3240 = vset.pattern.permute.xlu0 0
      %3241 = vperm.xlu0 %3240, %v3214
      %v3242 = vpop.permute.xlu0 %3241
      %3245 = vset.pattern.permute.xlu0 0
      %3246 = vperm.xlu0 %3245, %v3215
      %v3247 = vpop.permute.xlu0 %3246
      %v3249 = vmul.f32 %v3201, %v3232
      %v3250 = vmul.f32 %v3204, %v3237
      %v3251 = vmul.f32 %v3207, %v3242
      %v3252 = vmul.f32 %v3210, %v3247
      %3254 = vset.pattern.permute.xlu0 0
      %3255 = vperm.xlu0 %3254, %v3216
      %v3256 = vpop.permute.xlu0 %3255
      %3259 = vset.pattern.permute.xlu0 0
      %3260 = vperm.xlu0 %3259, %v3217
      %v3261 = vpop.permute.xlu0 %3260
      %3264 = vset.pattern.permute.xlu0 0
      %3265 = vperm.xlu0 %3264, %v3218
      %v3266 = vpop.permute.xlu0 %3265
      %3269 = vset.pattern.permute.xlu0 0
      %3270 = vperm.xlu0 %3269, %v3219
      %v3271 = vpop.permute.xlu0 %3270
      %v3273 = vadd.f32 %v3249, %v3256
      %v3274 = vadd.f32 %v3250, %v3261
      %v3275 = vadd.f32 %v3251, %v3266
      %v3276 = vadd.f32 %v3252, %v3271
      %v3277 = vmax.f32 %v3273, 0.0
      %v3278 = vmax.f32 %v3274, 0.0
      %v3279 = vmax.f32 %v3275, 0.0
      %v3280 = vmax.f32 %v3276, 0.0
      %3282 = vset.pattern.permute.xlu0 0
      %3283 = vperm.xlu0 %3282, %v3224
      %v3284 = vpop.permute.xlu0 %3283
      %3287 = vset.pattern.permute.xlu0 0
      %3288 = vperm.xlu0 %3287, %v3225
      %v3289 = vpop.permute.xlu0 %3288
      %3292 = vset.pattern.permute.xlu0 0
      %3293 = vperm.xlu0 %3292, %v3226
      %v3294 = vpop.permute.xlu0 %3293
      %3297 = vset.pattern.permute.xlu0 0
      %3298 = vperm.xlu0 %3297, %v3227
      %v3299 = vpop.permute.xlu0 %3298
      %v3302 = vsel %vm2272, %v3220, 0
      %v3305 = vsel %vm2272, %v3221, 0
      %v3308 = vsel %vm2272, %v3222, 0
      %v3311 = vsel %vm2272, %v3223, 0
      %3313 = vmatpush.msra.mxu0 0.0
      %3314 = vmatpush.msra.mxu0 0.0
      %3315 = vmatpush.msra.mxu0 0.0
      %3316 = vmatpush.msra.mxu0 0.0
      %3317 = vmatpush.msra.mxu0 0.0
      %3318 = vmatpush.msra.mxu0 0.0
      %3319 = vmatpush.msra.mxu0 0.0
      %3320 = vmatpush.msra.mxu0 0.0
      %3321 = vmatpush.msra.mxu0 0.0
      %3322 = vmatpush.msra.mxu0 0.0
      %3323 = vmatpush.msra.mxu0 0.0
      %3324 = vmatpush.msra.mxu0 0.0
      %3325 = vmatpush.msra.mxu0 %v3280
      %3326 = vmatpush.msra.mxu0 %v3279
      %3327 = vmatpush.msra.mxu0 %v3278
      %3328 = vmatpush.msra.mxu0 %v3277
      %3329 = vmatmul.f32.gmra.mxu0 %v3302
      %v3330 = vpop.f32.mrf.mxu0
      %v3331 = vadd.f32 %v3284, %v3330
      %3332 = vmatmul.f32.gmra.mxu0 %v3305
      %v3333 = vpop.f32.mrf.mxu0
      %v3334 = vadd.f32 %v3289, %v3333
      %3335 = vmatmul.f32.gmra.mxu0 %v3308
      %v3336 = vpop.f32.mrf.mxu0
      %v3337 = vadd.f32 %v3294, %v3336
      %3338 = vmatmul.f32.gmra.mxu0 %v3311
      %v3339 = vpop.f32.mrf.mxu0
      %v3340 = vadd.f32 %v3299, %v3339
      %3341 = vdwg.mxu0
      %v3342 = vmax.f32 %v3331, 0.0
      %v3343 = vmax.f32 %v3334, 0.0
      %v3344 = vmax.f32 %v3337, 0.0
      %v3345 = vmax.f32 %v3340, 0.0
      %3346 = vrot.lane.b32.xlu0 %v3342, 64
      %v3347 = vpop.permute.xlu0 %3346
      %v3348 = vsel %vm1995, %v3347, %v3342
      %3349 = vrot.lane.b32.xlu0 %v3343, 64
      %v3350 = vpop.permute.xlu0 %3349
      %v3351 = vsel %vm1995, %v3350, %v3343
      %3352 = vrot.lane.b32.xlu0 %v3344, 64
      %v3353 = vpop.permute.xlu0 %3352
      %v3354 = vsel %vm1995, %v3353, %v3344
      %3355 = vrot.lane.b32.xlu0 %v3345, 64
      %v3356 = vpop.permute.xlu0 %3355
      %v3357 = vsel %vm1995, %v3356, %v3345
      %3358 = vrot.lane.b32.xlu0 %v3348, 64
      %v3359 = vpop.permute.xlu0 %3358
      %3360 = vrot.lane.b32.xlu0 %v3351, 64
      %v3361 = vpop.permute.xlu0 %3360
      %3362 = vrot.lane.b32.xlu0 %v3354, 64
      %v3363 = vpop.permute.xlu0 %3362
      %3364 = vrot.lane.b32.xlu0 %v3357, 64
      %v3365 = vpop.permute.xlu0 %3364
      %v3366 = vsel %vm1995, %v3359, %v3342
      %v3367 = vsel %vm1995, %v3361, %v3343
      %v3368 = vsel %vm1995, %v3363, %v3344
      %v3369 = vsel %vm1995, %v3365, %v3345
      %3374 = vrot.lane.b32.xlu0 %v3366, 65
      %v3375 = vpop.permute.xlu0 %3374
      %3376 = vrot.lane.b32.xlu0 %v3367, 65
      %v3377 = vpop.permute.xlu0 %3376
      %3378 = vrot.lane.b32.xlu0 %v3368, 65
      %v3379 = vpop.permute.xlu0 %3378
      %3380 = vrot.lane.b32.xlu0 %v3369, 65
      %v3381 = vpop.permute.xlu0 %3380
      %v3386 = vsel %vm1911, 0.0, %v3375
      %v3387 = vsel %vm1911, 0.0, %v3377
      %v3388 = vsel %vm1911, 0.0, %v3379
      %v3389 = vsel %vm1911, 0.0, %v3381
      %3390 = vrot.lane.b32.xlu0 %v3366, 127
      %v3391 = vpop.permute.xlu0 %3390
      %3392 = vrot.lane.b32.xlu0 %v3367, 127
      %v3393 = vpop.permute.xlu0 %3392
      %3394 = vrot.lane.b32.xlu0 %v3368, 127
      %v3395 = vpop.permute.xlu0 %3394
      %3396 = vrot.lane.b32.xlu0 %v3369, 127
      %v3397 = vpop.permute.xlu0 %3396
      %v3402 = vsel %vm2018, 0.0, %v3391
      %v3403 = vsel %vm2018, 0.0, %v3393
      %v3404 = vsel %vm2018, 0.0, %v3395
      %v3405 = vsel %vm2018, 0.0, %v3397
      %v3407 = vsel %vm2342, %v3228, 0
      %3409 = vmatpush.msra.mxu0 0.0
      %3410 = vmatpush.msra.mxu0 0.0
      %3411 = vmatpush.msra.mxu0 0.0
      %3412 = vmatpush.msra.mxu0 0.0
      %3413 = vmatpush.msra.mxu0 %v3405
      %3414 = vmatpush.msra.mxu0 %v3404
      %3415 = vmatpush.msra.mxu0 %v3403
      %3416 = vmatpush.msra.mxu0 %v3402
      %3417 = vmatpush.msra.mxu0 %v3345
      %3418 = vmatpush.msra.mxu0 %v3344
      %3419 = vmatpush.msra.mxu0 %v3343
      %3420 = vmatpush.msra.mxu0 %v3342
      %3421 = vmatpush.msra.mxu0 %v3389
      %3422 = vmatpush.msra.mxu0 %v3388
      %3423 = vmatpush.msra.mxu0 %v3387
      %3424 = vmatpush.msra.mxu0 %v3386
      %3425 = vmatmul.f32.gmra.mxu0 %v3407
      %v3426 = vpop.f32.mrf.mxu0
      %v3427 = vadd.f32 0.0, %v3426
      %3428 = vdwg.mxu0
      %v3429 = vld [vmem:[%s77] sm:$0xff]
      %v3430 = vld [vmem:[%s77 + $0x8] sm:$0xff]
      %v3431 = vld [vmem:[%s77 + $0x10] sm:$0xff]
      %v3432 = vld [vmem:[%s77 + $0x18] sm:$0xff]
      %v3433 = vld [vmem:[%s77 + $0x20] sm:$0xff]
      %v3434 = vld [vmem:[%s79] sm:$0xff]
      %v3435 = vld [vmem:[%s79 + $0x8] sm:$0xff]
      %v3436 = vld [vmem:[%s79 + $0x10] sm:$0xff]
      %v3437 = vld [vmem:[%s79 + $0x18] sm:$0xff]
      %v3438 = vld [vmem:[%s79 + $0x20] sm:$0xff]
      %v3439 = vld [vmem:[%s81] sm:$0xff]
      %v3440 = vld [vmem:[%s81 + $0x8] sm:$0xff]
      %v3441 = vld [vmem:[%s81 + $0x10] sm:$0xff]
      %v3442 = vld [vmem:[%s81 + $0x18] sm:$0xff]
      %v3443 = vld [vmem:[%s83] sm:$0xff]
      %v3444 = vld [vmem:[%s83 + $0x8] sm:$0xff]
      %v3445 = vld [vmem:[%s83 + $0x10] sm:$0xff]
      %v3446 = vld [vmem:[%s83 + $0x18] sm:$0xff]
      %v3447 = vld [vmem:[%s85] sm:$0xff]
      %3449 = vset.pattern.permute.xlu0 0
      %3450 = vperm.xlu0 %3449, %v3429
      %v3451 = vpop.permute.xlu0 %3450
      %3454 = vset.pattern.permute.xlu0 0
      %3455 = vperm.xlu0 %3454, %v3430
      %v3456 = vpop.permute.xlu0 %3455
      %3459 = vset.pattern.permute.xlu0 0
      %3460 = vperm.xlu0 %3459, %v3431
      %v3461 = vpop.permute.xlu0 %3460
      %3464 = vset.pattern.permute.xlu0 0
      %3465 = vperm.xlu0 %3464, %v3432
      %v3466 = vpop.permute.xlu0 %3465
      %3469 = vset.pattern.permute.xlu0 0
      %3470 = vperm.xlu0 %3469, %v3433
      %v3471 = vpop.permute.xlu0 %3470
      %v3473 = vmul.f32 %v3201, %v3451
      %v3474 = vmul.f32 %v3204, %v3456
      %v3475 = vmul.f32 %v3207, %v3461
      %v3476 = vmul.f32 %v3210, %v3466
      %v3477 = vmul.f32 %v3427, %v3471
      %3479 = vset.pattern.permute.xlu0 0
      %3480 = vperm.xlu0 %3479, %v3434
      %v3481 = vpop.permute.xlu0 %3480
      %3484 = vset.pattern.permute.xlu0 0
      %3485 = vperm.xlu0 %3484, %v3435
      %v3486 = vpop.permute.xlu0 %3485
      %3489 = vset.pattern.permute.xlu0 0
      %3490 = vperm.xlu0 %3489, %v3436
      %v3491 = vpop.permute.xlu0 %3490
      %3494 = vset.pattern.permute.xlu0 0
      %3495 = vperm.xlu0 %3494, %v3437
      %v3496 = vpop.permute.xlu0 %3495
      %3499 = vset.pattern.permute.xlu0 0
      %3500 = vperm.xlu0 %3499, %v3438
      %v3501 = vpop.permute.xlu0 %3500
      %v3503 = vadd.f32 %v3473, %v3481
      %v3504 = vadd.f32 %v3474, %v3486
      %v3505 = vadd.f32 %v3475, %v3491
      %v3506 = vadd.f32 %v3476, %v3496
      %v3507 = vadd.f32 %v3477, %v3501
      %v3508 = vmax.f32 %v3503, 0.0
      %v3509 = vmax.f32 %v3504, 0.0
      %v3510 = vmax.f32 %v3505, 0.0
      %v3511 = vmax.f32 %v3506, 0.0
      %v3512 = vmax.f32 %v3507, 0.0
      %3514 = vset.pattern.permute.xlu0 0
      %3515 = vperm.xlu0 %3514, %v3443
      %v3516 = vpop.permute.xlu0 %3515
      %3519 = vset.pattern.permute.xlu0 0
      %3520 = vperm.xlu0 %3519, %v3444
      %v3521 = vpop.permute.xlu0 %3520
      %3524 = vset.pattern.permute.xlu0 0
      %3525 = vperm.xlu0 %3524, %v3445
      %v3526 = vpop.permute.xlu0 %3525
      %3529 = vset.pattern.permute.xlu0 0
      %3530 = vperm.xlu0 %3529, %v3446
      %v3531 = vpop.permute.xlu0 %3530
      %v3534 = vsel %vm2470, %v3439, 0
      %v3537 = vsel %vm2470, %v3440, 0
      %v3540 = vsel %vm2470, %v3441, 0
      %v3543 = vsel %vm2470, %v3442, 0
      %3545 = vmatpush.msra.mxu0 0.0
      %3546 = vmatpush.msra.mxu0 0.0
      %3547 = vmatpush.msra.mxu0 0.0
      %3548 = vmatpush.msra.mxu0 0.0
      %3549 = vmatpush.msra.mxu0 0.0
      %3550 = vmatpush.msra.mxu0 0.0
      %3551 = vmatpush.msra.mxu0 0.0
      %3552 = vmatpush.msra.mxu0 0.0
      %3553 = vmatpush.msra.mxu0 0.0
      %3554 = vmatpush.msra.mxu0 0.0
      %3555 = vmatpush.msra.mxu0 0.0
      %3556 = vmatpush.msra.mxu0 %v3512
      %3557 = vmatpush.msra.mxu0 %v3511
      %3558 = vmatpush.msra.mxu0 %v3510
      %3559 = vmatpush.msra.mxu0 %v3509
      %3560 = vmatpush.msra.mxu0 %v3508
      %3561 = vmatmul.f32.gmra.mxu0 %v3534
      %v3562 = vpop.f32.mrf.mxu0
      %v3563 = vadd.f32 %v3516, %v3562
      %3564 = vmatmul.f32.gmra.mxu0 %v3537
      %v3565 = vpop.f32.mrf.mxu0
      %v3566 = vadd.f32 %v3521, %v3565
      %3567 = vmatmul.f32.gmra.mxu0 %v3540
      %v3568 = vpop.f32.mrf.mxu0
      %v3569 = vadd.f32 %v3526, %v3568
      %3570 = vmatmul.f32.gmra.mxu0 %v3543
      %v3571 = vpop.f32.mrf.mxu0
      %v3572 = vadd.f32 %v3531, %v3571
      %3573 = vdwg.mxu0
      %v3574 = vmax.f32 %v3563, 0.0
      %v3575 = vmax.f32 %v3566, 0.0
      %v3576 = vmax.f32 %v3569, 0.0
      %v3577 = vmax.f32 %v3572, 0.0
      %3578 = vrot.lane.b32.xlu0 %v3574, 64
      %v3579 = vpop.permute.xlu0 %3578
      %v3580 = vsel %vm1995, %v3579, %v3574
      %3581 = vrot.lane.b32.xlu0 %v3575, 64
      %v3582 = vpop.permute.xlu0 %3581
      %v3583 = vsel %vm1995, %v3582, %v3575
      %3584 = vrot.lane.b32.xlu0 %v3576, 64
      %v3585 = vpop.permute.xlu0 %3584
      %v3586 = vsel %vm1995, %v3585, %v3576
      %3587 = vrot.lane.b32.xlu0 %v3577, 64
      %v3588 = vpop.permute.xlu0 %3587
      %v3589 = vsel %vm1995, %v3588, %v3577
      %3590 = vrot.lane.b32.xlu0 %v3580, 64
      %v3591 = vpop.permute.xlu0 %3590
      %3592 = vrot.lane.b32.xlu0 %v3583, 64
      %v3593 = vpop.permute.xlu0 %3592
      %3594 = vrot.lane.b32.xlu0 %v3586, 64
      %v3595 = vpop.permute.xlu0 %3594
      %3596 = vrot.lane.b32.xlu0 %v3589, 64
      %v3597 = vpop.permute.xlu0 %3596
      %v3598 = vsel %vm1995, %v3591, %v3574
      %v3599 = vsel %vm1995, %v3593, %v3575
      %v3600 = vsel %vm1995, %v3595, %v3576
      %v3601 = vsel %vm1995, %v3597, %v3577
      %3606 = vrot.lane.b32.xlu0 %v3598, 65
      %v3607 = vpop.permute.xlu0 %3606
      %3608 = vrot.lane.b32.xlu0 %v3599, 65
      %v3609 = vpop.permute.xlu0 %3608
      %3610 = vrot.lane.b32.xlu0 %v3600, 65
      %v3611 = vpop.permute.xlu0 %3610
      %3612 = vrot.lane.b32.xlu0 %v3601, 65
      %v3613 = vpop.permute.xlu0 %3612
      %v3618 = vsel %vm1911, 0.0, %v3607
      %v3619 = vsel %vm1911, 0.0, %v3609
      %v3620 = vsel %vm1911, 0.0, %v3611
      %v3621 = vsel %vm1911, 0.0, %v3613
      %3622 = vrot.lane.b32.xlu0 %v3598, 127
      %v3623 = vpop.permute.xlu0 %3622
      %3624 = vrot.lane.b32.xlu0 %v3599, 127
      %v3625 = vpop.permute.xlu0 %3624
      %3626 = vrot.lane.b32.xlu0 %v3600, 127
      %v3627 = vpop.permute.xlu0 %3626
      %3628 = vrot.lane.b32.xlu0 %v3601, 127
      %v3629 = vpop.permute.xlu0 %3628
      %v3634 = vsel %vm2018, 0.0, %v3623
      %v3635 = vsel %vm2018, 0.0, %v3625
      %v3636 = vsel %vm2018, 0.0, %v3627
      %v3637 = vsel %vm2018, 0.0, %v3629
      %v3639 = vsel %vm2342, %v3447, 0
      %3641 = vmatpush.msra.mxu0 0.0
      %3642 = vmatpush.msra.mxu0 0.0
      %3643 = vmatpush.msra.mxu0 0.0
      %3644 = vmatpush.msra.mxu0 0.0
      %3645 = vmatpush.msra.mxu0 %v3637
      %3646 = vmatpush.msra.mxu0 %v3636
      %3647 = vmatpush.msra.mxu0 %v3635
      %3648 = vmatpush.msra.mxu0 %v3634
      %3649 = vmatpush.msra.mxu0 %v3577
      %3650 = vmatpush.msra.mxu0 %v3576
      %3651 = vmatpush.msra.mxu0 %v3575
      %3652 = vmatpush.msra.mxu0 %v3574
      %3653 = vmatpush.msra.mxu0 %v3621
      %3654 = vmatpush.msra.mxu0 %v3620
      %3655 = vmatpush.msra.mxu0 %v3619
      %3656 = vmatpush.msra.mxu0 %v3618
      %3657 = vmatmul.f32.gmra.mxu0 %v3639
      %v3658 = vpop.f32.mrf.mxu0
      %v3659 = vadd.f32 0.0, %v3658
      %3660 = vdwg.mxu0
      %v3661 = vld [vmem:[%s87] sm:$0xff]
      %v3662 = vld [vmem:[%s87 + $0x8] sm:$0xff]
      %v3663 = vld [vmem:[%s87 + $0x10] sm:$0xff]
      %v3664 = vld [vmem:[%s87 + $0x18] sm:$0xff]
      %v3665 = vld [vmem:[%s87 + $0x20] sm:$0xff]
      %v3666 = vld [vmem:[%s87 + $0x28] sm:$0xff]
      %v3667 = vld [vmem:[%s89] sm:$0xff]
      %v3668 = vld [vmem:[%s89 + $0x8] sm:$0xff]
      %v3669 = vld [vmem:[%s89 + $0x10] sm:$0xff]
      %v3670 = vld [vmem:[%s89 + $0x18] sm:$0xff]
      %v3671 = vld [vmem:[%s89 + $0x20] sm:$0xff]
      %v3672 = vld [vmem:[%s89 + $0x28] sm:$0xff]
      %v3673 = vld [vmem:[%s91] sm:$0xff]
      %v3674 = vld [vmem:[%s91 + $0x8] sm:$0xff]
      %v3675 = vld [vmem:[%s91 + $0x10] sm:$0xff]
      %v3676 = vld [vmem:[%s91 + $0x18] sm:$0xff]
      %v3677 = vld [vmem:[%s93] sm:$0xff]
      %v3678 = vld [vmem:[%s93 + $0x8] sm:$0xff]
      %v3679 = vld [vmem:[%s93 + $0x10] sm:$0xff]
      %v3680 = vld [vmem:[%s93 + $0x18] sm:$0xff]
      %v3681 = vld [vmem:[%s95] sm:$0xff]
      %3683 = vset.pattern.permute.xlu0 0
      %3684 = vperm.xlu0 %3683, %v3661
      %v3685 = vpop.permute.xlu0 %3684
      %3688 = vset.pattern.permute.xlu0 0
      %3689 = vperm.xlu0 %3688, %v3662
      %v3690 = vpop.permute.xlu0 %3689
      %3693 = vset.pattern.permute.xlu0 0
      %3694 = vperm.xlu0 %3693, %v3663
      %v3695 = vpop.permute.xlu0 %3694
      %3698 = vset.pattern.permute.xlu0 0
      %3699 = vperm.xlu0 %3698, %v3664
      %v3700 = vpop.permute.xlu0 %3699
      %3703 = vset.pattern.permute.xlu0 0
      %3704 = vperm.xlu0 %3703, %v3665
      %v3705 = vpop.permute.xlu0 %3704
      %3708 = vset.pattern.permute.xlu0 0
      %3709 = vperm.xlu0 %3708, %v3666
      %v3710 = vpop.permute.xlu0 %3709
      %v3712 = vmul.f32 %v3201, %v3685
      %v3713 = vmul.f32 %v3204, %v3690
      %v3714 = vmul.f32 %v3207, %v3695
      %v3715 = vmul.f32 %v3210, %v3700
      %v3716 = vmul.f32 %v3427, %v3705
      %v3717 = vmul.f32 %v3659, %v3710
      %3719 = vset.pattern.permute.xlu0 0
      %3720 = vperm.xlu0 %3719, %v3667
      %v3721 = vpop.permute.xlu0 %3720
      %3724 = vset.pattern.permute.xlu0 0
      %3725 = vperm.xlu0 %3724, %v3668
      %v3726 = vpop.permute.xlu0 %3725
      %3729 = vset.pattern.permute.xlu0 0
      %3730 = vperm.xlu0 %3729, %v3669
      %v3731 = vpop.permute.xlu0 %3730
      %3734 = vset.pattern.permute.xlu0 0
      %3735 = vperm.xlu0 %3734, %v3670
      %v3736 = vpop.permute.xlu0 %3735
      %3739 = vset.pattern.permute.xlu0 0
      %3740 = vperm.xlu0 %3739, %v3671
      %v3741 = vpop.permute.xlu0 %3740
      %3744 = vset.pattern.permute.xlu0 0
      %3745 = vperm.xlu0 %3744, %v3672
      %v3746 = vpop.permute.xlu0 %3745
      %v3748 = vadd.f32 %v3712, %v3721
      %v3749 = vadd.f32 %v3713, %v3726
      %v3750 = vadd.f32 %v3714, %v3731
      %v3751 = vadd.f32 %v3715, %v3736
      %v3752 = vadd.f32 %v3716, %v3741
      %v3753 = vadd.f32 %v3717, %v3746
      %v3754 = vmax.f32 %v3748, 0.0
      %v3755 = vmax.f32 %v3749, 0.0
      %v3756 = vmax.f32 %v3750, 0.0
      %v3757 = vmax.f32 %v3751, 0.0
      %v3758 = vmax.f32 %v3752, 0.0
      %v3759 = vmax.f32 %v3753, 0.0
      %3761 = vset.pattern.permute.xlu0 0
      %3762 = vperm.xlu0 %3761, %v3677
      %v3763 = vpop.permute.xlu0 %3762
      %3766 = vset.pattern.permute.xlu0 0
      %3767 = vperm.xlu0 %3766, %v3678
      %v3768 = vpop.permute.xlu0 %3767
      %3771 = vset.pattern.permute.xlu0 0
      %3772 = vperm.xlu0 %3771, %v3679
      %v3773 = vpop.permute.xlu0 %3772
      %3776 = vset.pattern.permute.xlu0 0
      %3777 = vperm.xlu0 %3776, %v3680
      %v3778 = vpop.permute.xlu0 %3777
      %v3781 = vsel %vm1945, %v3673, 0
      %v3784 = vsel %vm1945, %v3674, 0
      %v3787 = vsel %vm1945, %v3675, 0
      %v3790 = vsel %vm1945, %v3676, 0
      %3792 = vmatpush.msra.mxu0 0.0
      %3793 = vmatpush.msra.mxu0 0.0
      %3794 = vmatpush.msra.mxu0 0.0
      %3795 = vmatpush.msra.mxu0 0.0
      %3796 = vmatpush.msra.mxu0 0.0
      %3797 = vmatpush.msra.mxu0 0.0
      %3798 = vmatpush.msra.mxu0 0.0
      %3799 = vmatpush.msra.mxu0 0.0
      %3800 = vmatpush.msra.mxu0 0.0
      %3801 = vmatpush.msra.mxu0 0.0
      %3802 = vmatpush.msra.mxu0 %v3759
      %3803 = vmatpush.msra.mxu0 %v3758
      %3804 = vmatpush.msra.mxu0 %v3757
      %3805 = vmatpush.msra.mxu0 %v3756
      %3806 = vmatpush.msra.mxu0 %v3755
      %3807 = vmatpush.msra.mxu0 %v3754
      %3808 = vmatmul.f32.gmra.mxu0 %v3781
      %v3809 = vpop.f32.mrf.mxu0
      %v3810 = vadd.f32 %v3763, %v3809
      %3811 = vmatmul.f32.gmra.mxu0 %v3784
      %v3812 = vpop.f32.mrf.mxu0
      %v3813 = vadd.f32 %v3768, %v3812
      %3814 = vmatmul.f32.gmra.mxu0 %v3787
      %v3815 = vpop.f32.mrf.mxu0
      %v3816 = vadd.f32 %v3773, %v3815
      %3817 = vmatmul.f32.gmra.mxu0 %v3790
      %v3818 = vpop.f32.mrf.mxu0
      %v3819 = vadd.f32 %v3778, %v3818
      %3820 = vdwg.mxu0
      %v3821 = vmax.f32 %v3810, 0.0
      %v3822 = vmax.f32 %v3813, 0.0
      %v3823 = vmax.f32 %v3816, 0.0
      %v3824 = vmax.f32 %v3819, 0.0
      %3825 = vrot.lane.b32.xlu0 %v3821, 64
      %v3826 = vpop.permute.xlu0 %3825
      %v3827 = vsel %vm1995, %v3826, %v3821
      %3828 = vrot.lane.b32.xlu0 %v3822, 64
      %v3829 = vpop.permute.xlu0 %3828
      %v3830 = vsel %vm1995, %v3829, %v3822
      %3831 = vrot.lane.b32.xlu0 %v3823, 64
      %v3832 = vpop.permute.xlu0 %3831
      %v3833 = vsel %vm1995, %v3832, %v3823
      %3834 = vrot.lane.b32.xlu0 %v3824, 64
      %v3835 = vpop.permute.xlu0 %3834
      %v3836 = vsel %vm1995, %v3835, %v3824
      %3837 = vrot.lane.b32.xlu0 %v3827, 64
      %v3838 = vpop.permute.xlu0 %3837
      %3839 = vrot.lane.b32.xlu0 %v3830, 64
      %v3840 = vpop.permute.xlu0 %3839
      %3841 = vrot.lane.b32.xlu0 %v3833, 64
      %v3842 = vpop.permute.xlu0 %3841
      %3843 = vrot.lane.b32.xlu0 %v3836, 64
      %v3844 = vpop.permute.xlu0 %3843
      %v3845 = vsel %vm1995, %v3838, %v3821
      %v3846 = vsel %vm1995, %v3840, %v3822
      %v3847 = vsel %vm1995, %v3842, %v3823
      %v3848 = vsel %vm1995, %v3844, %v3824
      %3853 = vrot.lane.b32.xlu0 %v3845, 65
      %v3854 = vpop.permute.xlu0 %3853
      %3855 = vrot.lane.b32.xlu0 %v3846, 65
      %v3856 = vpop.permute.xlu0 %3855
      %3857 = vrot.lane.b32.xlu0 %v3847, 65
      %v3858 = vpop.permute.xlu0 %3857
      %3859 = vrot.lane.b32.xlu0 %v3848, 65
      %v3860 = vpop.permute.xlu0 %3859
      %v3865 = vsel %vm1911, 0.0, %v3854
      %v3866 = vsel %vm1911, 0.0, %v3856
      %v3867 = vsel %vm1911, 0.0, %v3858
      %v3868 = vsel %vm1911, 0.0, %v3860
      %3869 = vrot.lane.b32.xlu0 %v3845, 127
      %v3870 = vpop.permute.xlu0 %3869
      %3871 = vrot.lane.b32.xlu0 %v3846, 127
      %v3872 = vpop.permute.xlu0 %3871
      %3873 = vrot.lane.b32.xlu0 %v3847, 127
      %v3874 = vpop.permute.xlu0 %3873
      %3875 = vrot.lane.b32.xlu0 %v3848, 127
      %v3876 = vpop.permute.xlu0 %3875
      %v3881 = vsel %vm2018, 0.0, %v3870
      %v3882 = vsel %vm2018, 0.0, %v3872
      %v3883 = vsel %vm2018, 0.0, %v3874
      %v3884 = vsel %vm2018, 0.0, %v3876
      %v3886 = vsel %vm2342, %v3681, 0
      %3888 = vmatpush.msra.mxu0 0.0
      %3889 = vmatpush.msra.mxu0 0.0
      %3890 = vmatpush.msra.mxu0 0.0
      %3891 = vmatpush.msra.mxu0 0.0
      %3892 = vmatpush.msra.mxu0 %v3884
      %3893 = vmatpush.msra.mxu0 %v3883
      %3894 = vmatpush.msra.mxu0 %v3882
      %3895 = vmatpush.msra.mxu0 %v3881
      %3896 = vmatpush.msra.mxu0 %v3824
      %3897 = vmatpush.msra.mxu0 %v3823
      %3898 = vmatpush.msra.mxu0 %v3822
      %3899 = vmatpush.msra.mxu0 %v3821
      %3900 = vmatpush.msra.mxu0 %v3868
      %3901 = vmatpush.msra.mxu0 %v3867
      %3902 = vmatpush.msra.mxu0 %v3866
      %3903 = vmatpush.msra.mxu0 %v3865
      %3904 = vmatmul.f32.gmra.mxu0 %v3886
      %v3905 = vpop.f32.mrf.mxu0
      %v3906 = vadd.f32 0.0, %v3905
      %3907 = vdwg.mxu0
      %v3908 = vld [vmem:[%s97] sm:$0xff]
      %v3909 = vld [vmem:[%s97 + $0x8] sm:$0xff]
      %v3910 = vld [vmem:[%s97 + $0x10] sm:$0xff]
      %v3911 = vld [vmem:[%s97 + $0x18] sm:$0xff]
      %v3912 = vld [vmem:[%s97 + $0x20] sm:$0xff]
      %v3913 = vld [vmem:[%s97 + $0x28] sm:$0xff]
      %v3914 = vld [vmem:[%s97 + $0x30] sm:$0xff]
      %v3915 = vld [vmem:[%s99] sm:$0xff]
      %v3916 = vld [vmem:[%s99 + $0x8] sm:$0xff]
      %v3917 = vld [vmem:[%s99 + $0x10] sm:$0xff]
      %v3918 = vld [vmem:[%s99 + $0x18] sm:$0xff]
      %v3919 = vld [vmem:[%s99 + $0x20] sm:$0xff]
      %v3920 = vld [vmem:[%s99 + $0x28] sm:$0xff]
      %v3921 = vld [vmem:[%s99 + $0x30] sm:$0xff]
      %v3922 = vld [vmem:[%s101] sm:$0xff]
      %v3923 = vld [vmem:[%s101 + $0x8] sm:$0xff]
      %v3924 = vld [vmem:[%s101 + $0x10] sm:$0xff]
      %v3925 = vld [vmem:[%s101 + $0x18] sm:$0xff]
      %v3926 = vld [vmem:[%s103] sm:$0xff]
      %v3927 = vld [vmem:[%s103 + $0x8] sm:$0xff]
      %v3928 = vld [vmem:[%s103 + $0x10] sm:$0xff]
      %v3929 = vld [vmem:[%s103 + $0x18] sm:$0xff]
      %v3930 = vld [vmem:[%s105] sm:$0xff]
      %3932 = vset.pattern.permute.xlu0 0
      %3933 = vperm.xlu0 %3932, %v3908
      %v3934 = vpop.permute.xlu0 %3933
      %3937 = vset.pattern.permute.xlu0 0
      %3938 = vperm.xlu0 %3937, %v3909
      %v3939 = vpop.permute.xlu0 %3938
      %3942 = vset.pattern.permute.xlu0 0
      %3943 = vperm.xlu0 %3942, %v3910
      %v3944 = vpop.permute.xlu0 %3943
      %3947 = vset.pattern.permute.xlu0 0
      %3948 = vperm.xlu0 %3947, %v3911
      %v3949 = vpop.permute.xlu0 %3948
      %3952 = vset.pattern.permute.xlu0 0
      %3953 = vperm.xlu0 %3952, %v3912
      %v3954 = vpop.permute.xlu0 %3953
      %3957 = vset.pattern.permute.xlu0 0
      %3958 = vperm.xlu0 %3957, %v3913
      %v3959 = vpop.permute.xlu0 %3958
      %3962 = vset.pattern.permute.xlu0 0
      %3963 = vperm.xlu0 %3962, %v3914
      %v3964 = vpop.permute.xlu0 %3963
      %v3966 = vmul.f32 %v3201, %v3934
      %v3967 = vmul.f32 %v3204, %v3939
      %v3968 = vmul.f32 %v3207, %v3944
      %v3969 = vmul.f32 %v3210, %v3949
      %v3970 = vmul.f32 %v3427, %v3954
      %v3971 = vmul.f32 %v3659, %v3959
      %v3972 = vmul.f32 %v3906, %v3964
      %3974 = vset.pattern.permute.xlu0 0
      %3975 = vperm.xlu0 %3974, %v3915
      %v3976 = vpop.permute.xlu0 %3975
      %3979 = vset.pattern.permute.xlu0 0
      %3980 = vperm.xlu0 %3979, %v3916
      %v3981 = vpop.permute.xlu0 %3980
      %3984 = vset.pattern.permute.xlu0 0
      %3985 = vperm.xlu0 %3984, %v3917
      %v3986 = vpop.permute.xlu0 %3985
      %3989 = vset.pattern.permute.xlu0 0
      %3990 = vperm.xlu0 %3989, %v3918
      %v3991 = vpop.permute.xlu0 %3990
      %3994 = vset.pattern.permute.xlu0 0
      %3995 = vperm.xlu0 %3994, %v3919
      %v3996 = vpop.permute.xlu0 %3995
      %3999 = vset.pattern.permute.xlu0 0
      %4000 = vperm.xlu0 %3999, %v3920
      %v4001 = vpop.permute.xlu0 %4000
      %4004 = vset.pattern.permute.xlu0 0
      %4005 = vperm.xlu0 %4004, %v3921
      %v4006 = vpop.permute.xlu0 %4005
      %v4008 = vadd.f32 %v3966, %v3976
      %v4009 = vadd.f32 %v3967, %v3981
      %v4010 = vadd.f32 %v3968, %v3986
      %v4011 = vadd.f32 %v3969, %v3991
      %v4012 = vadd.f32 %v3970, %v3996
      %v4013 = vadd.f32 %v3971, %v4001
      %v4014 = vadd.f32 %v3972, %v4006
      %v4015 = vmax.f32 %v4008, 0.0
      %v4016 = vmax.f32 %v4009, 0.0
      %v4017 = vmax.f32 %v4010, 0.0
      %v4018 = vmax.f32 %v4011, 0.0
      %v4019 = vmax.f32 %v4012, 0.0
      %v4020 = vmax.f32 %v4013, 0.0
      %v4021 = vmax.f32 %v4014, 0.0
      %4023 = vset.pattern.permute.xlu0 0
      %4024 = vperm.xlu0 %4023, %v3926
      %v4025 = vpop.permute.xlu0 %4024
      %4028 = vset.pattern.permute.xlu0 0
      %4029 = vperm.xlu0 %4028, %v3927
      %v4030 = vpop.permute.xlu0 %4029
      %4033 = vset.pattern.permute.xlu0 0
      %4034 = vperm.xlu0 %4033, %v3928
      %v4035 = vpop.permute.xlu0 %4034
      %4038 = vset.pattern.permute.xlu0 0
      %4039 = vperm.xlu0 %4038, %v3929
      %v4040 = vpop.permute.xlu0 %4039
      %v4043 = vsel %vm2908, %v3922, 0
      %v4046 = vsel %vm2908, %v3923, 0
      %v4049 = vsel %vm2908, %v3924, 0
      %v4052 = vsel %vm2908, %v3925, 0
      %4054 = vmatpush.msra.mxu0 0.0
      %4055 = vmatpush.msra.mxu0 0.0
      %4056 = vmatpush.msra.mxu0 0.0
      %4057 = vmatpush.msra.mxu0 0.0
      %4058 = vmatpush.msra.mxu0 0.0
      %4059 = vmatpush.msra.mxu0 0.0
      %4060 = vmatpush.msra.mxu0 0.0
      %4061 = vmatpush.msra.mxu0 0.0
      %4062 = vmatpush.msra.mxu0 0.0
      %4063 = vmatpush.msra.mxu0 %v4021
      %4064 = vmatpush.msra.mxu0 %v4020
      %4065 = vmatpush.msra.mxu0 %v4019
      %4066 = vmatpush.msra.mxu0 %v4018
      %4067 = vmatpush.msra.mxu0 %v4017
      %4068 = vmatpush.msra.mxu0 %v4016
      %4069 = vmatpush.msra.mxu0 %v4015
      %4070 = vmatmul.f32.gmra.mxu0 %v4043
      %v4071 = vpop.f32.mrf.mxu0
      %v4072 = vadd.f32 %v4025, %v4071
      %4073 = vmatmul.f32.gmra.mxu0 %v4046
      %v4074 = vpop.f32.mrf.mxu0
      %v4075 = vadd.f32 %v4030, %v4074
      %4076 = vmatmul.f32.gmra.mxu0 %v4049
      %v4077 = vpop.f32.mrf.mxu0
      %v4078 = vadd.f32 %v4035, %v4077
      %4079 = vmatmul.f32.gmra.mxu0 %v4052
      %v4080 = vpop.f32.mrf.mxu0
      %v4081 = vadd.f32 %v4040, %v4080
      %4082 = vdwg.mxu0
      %v4083 = vmax.f32 %v4072, 0.0
      %v4084 = vmax.f32 %v4075, 0.0
      %v4085 = vmax.f32 %v4078, 0.0
      %v4086 = vmax.f32 %v4081, 0.0
      %4087 = vrot.lane.b32.xlu0 %v4083, 64
      %v4088 = vpop.permute.xlu0 %4087
      %v4089 = vsel %vm1995, %v4088, %v4083
      %4090 = vrot.lane.b32.xlu0 %v4084, 64
      %v4091 = vpop.permute.xlu0 %4090
      %v4092 = vsel %vm1995, %v4091, %v4084
      %4093 = vrot.lane.b32.xlu0 %v4085, 64
      %v4094 = vpop.permute.xlu0 %4093
      %v4095 = vsel %vm1995, %v4094, %v4085
      %4096 = vrot.lane.b32.xlu0 %v4086, 64
      %v4097 = vpop.permute.xlu0 %4096
      %v4098 = vsel %vm1995, %v4097, %v4086
      %4099 = vrot.lane.b32.xlu0 %v4089, 64
      %v4100 = vpop.permute.xlu0 %4099
      %4101 = vrot.lane.b32.xlu0 %v4092, 64
      %v4102 = vpop.permute.xlu0 %4101
      %4103 = vrot.lane.b32.xlu0 %v4095, 64
      %v4104 = vpop.permute.xlu0 %4103
      %4105 = vrot.lane.b32.xlu0 %v4098, 64
      %v4106 = vpop.permute.xlu0 %4105
      %v4107 = vsel %vm1995, %v4100, %v4083
      %v4108 = vsel %vm1995, %v4102, %v4084
      %v4109 = vsel %vm1995, %v4104, %v4085
      %v4110 = vsel %vm1995, %v4106, %v4086
      %4115 = vrot.lane.b32.xlu0 %v4107, 65
      %v4116 = vpop.permute.xlu0 %4115
      %4117 = vrot.lane.b32.xlu0 %v4108, 65
      %v4118 = vpop.permute.xlu0 %4117
      %4119 = vrot.lane.b32.xlu0 %v4109, 65
      %v4120 = vpop.permute.xlu0 %4119
      %4121 = vrot.lane.b32.xlu0 %v4110, 65
      %v4122 = vpop.permute.xlu0 %4121
      %v4127 = vsel %vm1911, 0.0, %v4116
      %v4128 = vsel %vm1911, 0.0, %v4118
      %v4129 = vsel %vm1911, 0.0, %v4120
      %v4130 = vsel %vm1911, 0.0, %v4122
      %4131 = vrot.lane.b32.xlu0 %v4107, 127
      %v4132 = vpop.permute.xlu0 %4131
      %4133 = vrot.lane.b32.xlu0 %v4108, 127
      %v4134 = vpop.permute.xlu0 %4133
      %4135 = vrot.lane.b32.xlu0 %v4109, 127
      %v4136 = vpop.permute.xlu0 %4135
      %4137 = vrot.lane.b32.xlu0 %v4110, 127
      %v4138 = vpop.permute.xlu0 %4137
      %v4143 = vsel %vm2018, 0.0, %v4132
      %v4144 = vsel %vm2018, 0.0, %v4134
      %v4145 = vsel %vm2018, 0.0, %v4136
      %v4146 = vsel %vm2018, 0.0, %v4138
      %v4148 = vsel %vm2342, %v3930, 0
      %4150 = vmatpush.msra.mxu0 0.0
      %4151 = vmatpush.msra.mxu0 0.0
      %4152 = vmatpush.msra.mxu0 0.0
      %4153 = vmatpush.msra.mxu0 0.0
      %4154 = vmatpush.msra.mxu0 %v4146
      %4155 = vmatpush.msra.mxu0 %v4145
      %4156 = vmatpush.msra.mxu0 %v4144
      %4157 = vmatpush.msra.mxu0 %v4143
      %4158 = vmatpush.msra.mxu0 %v4086
      %4159 = vmatpush.msra.mxu0 %v4085
      %4160 = vmatpush.msra.mxu0 %v4084
      %4161 = vmatpush.msra.mxu0 %v4083
      %4162 = vmatpush.msra.mxu0 %v4130
      %4163 = vmatpush.msra.mxu0 %v4129
      %4164 = vmatpush.msra.mxu0 %v4128
      %4165 = vmatpush.msra.mxu0 %v4127
      %4166 = vmatmul.f32.gmra.mxu0 %v4148
      %v4167 = vpop.f32.mrf.mxu0
      %v4168 = vadd.f32 0.0, %v4167
      %4169 = vdwg.mxu0
      %v4170 = vld [vmem:[%s107] sm:$0xff]
      %v4171 = vld [vmem:[%s107 + $0x8] sm:$0xff]
      %v4172 = vld [vmem:[%s107 + $0x10] sm:$0xff]
      %v4173 = vld [vmem:[%s107 + $0x18] sm:$0xff]
      %v4174 = vld [vmem:[%s107 + $0x20] sm:$0xff]
      %v4175 = vld [vmem:[%s107 + $0x28] sm:$0xff]
      %v4176 = vld [vmem:[%s107 + $0x30] sm:$0xff]
      %v4177 = vld [vmem:[%s107 + $0x38] sm:$0xff]
      %v4178 = vld [vmem:[%s109] sm:$0xff]
      %v4179 = vld [vmem:[%s109 + $0x8] sm:$0xff]
      %v4180 = vld [vmem:[%s109 + $0x10] sm:$0xff]
      %v4181 = vld [vmem:[%s109 + $0x18] sm:$0xff]
      %v4182 = vld [vmem:[%s109 + $0x20] sm:$0xff]
      %v4183 = vld [vmem:[%s109 + $0x28] sm:$0xff]
      %v4184 = vld [vmem:[%s109 + $0x30] sm:$0xff]
      %v4185 = vld [vmem:[%s109 + $0x38] sm:$0xff]
      %v4186 = vld [vmem:[%s111] sm:$0xff]
      %v4187 = vld [vmem:[%s111 + $0x8] sm:$0xff]
      %v4188 = vld [vmem:[%s111 + $0x10] sm:$0xff]
      %v4189 = vld [vmem:[%s113] sm:$0xff]
      %v4190 = vld [vmem:[%s113 + $0x8] sm:$0xff]
      %v4191 = vld [vmem:[%s113 + $0x10] sm:$0xff]
      %v4192 = vld [vmem:[%s113 + $0x18] sm:$0xff]
      %v4193 = vld [vmem:[%s113 + $0x20] sm:$0xff]
      %v4194 = vld [vmem:[%s113 + $0x28] sm:$0xff]
      %v4195 = vld [vmem:[%s113 + $0x30] sm:$0xff]
      %v4196 = vld [vmem:[%s113 + $0x38] sm:$0xff]
      %4198 = vset.pattern.permute.xlu0 0
      %4199 = vperm.xlu0 %4198, %v4170
      %v4200 = vpop.permute.xlu0 %4199
      %4203 = vset.pattern.permute.xlu0 0
      %4204 = vperm.xlu0 %4203, %v4171
      %v4205 = vpop.permute.xlu0 %4204
      %4208 = vset.pattern.permute.xlu0 0
      %4209 = vperm.xlu0 %4208, %v4172
      %v4210 = vpop.permute.xlu0 %4209
      %4213 = vset.pattern.permute.xlu0 0
      %4214 = vperm.xlu0 %4213, %v4173
      %v4215 = vpop.permute.xlu0 %4214
      %4218 = vset.pattern.permute.xlu0 0
      %4219 = vperm.xlu0 %4218, %v4174
      %v4220 = vpop.permute.xlu0 %4219
      %4223 = vset.pattern.permute.xlu0 0
      %4224 = vperm.xlu0 %4223, %v4175
      %v4225 = vpop.permute.xlu0 %4224
      %4228 = vset.pattern.permute.xlu0 0
      %4229 = vperm.xlu0 %4228, %v4176
      %v4230 = vpop.permute.xlu0 %4229
      %4233 = vset.pattern.permute.xlu0 0
      %4234 = vperm.xlu0 %4233, %v4177
      %v4235 = vpop.permute.xlu0 %4234
      %v4237 = vmul.f32 %v3201, %v4200
      %v4238 = vmul.f32 %v3204, %v4205
      %v4239 = vmul.f32 %v3207, %v4210
      %v4240 = vmul.f32 %v3210, %v4215
      %v4241 = vmul.f32 %v3427, %v4220
      %v4242 = vmul.f32 %v3659, %v4225
      %v4243 = vmul.f32 %v3906, %v4230
      %v4244 = vmul.f32 %v4168, %v4235
      %4246 = vset.pattern.permute.xlu0 0
      %4247 = vperm.xlu0 %4246, %v4178
      %v4248 = vpop.permute.xlu0 %4247
      %4251 = vset.pattern.permute.xlu0 0
      %4252 = vperm.xlu0 %4251, %v4179
      %v4253 = vpop.permute.xlu0 %4252
      %4256 = vset.pattern.permute.xlu0 0
      %4257 = vperm.xlu0 %4256, %v4180
      %v4258 = vpop.permute.xlu0 %4257
      %4261 = vset.pattern.permute.xlu0 0
      %4262 = vperm.xlu0 %4261, %v4181
      %v4263 = vpop.permute.xlu0 %4262
      %4266 = vset.pattern.permute.xlu0 0
      %4267 = vperm.xlu0 %4266, %v4182
      %v4268 = vpop.permute.xlu0 %4267
      %4271 = vset.pattern.permute.xlu0 0
      %4272 = vperm.xlu0 %4271, %v4183
      %v4273 = vpop.permute.xlu0 %4272
      %4276 = vset.pattern.permute.xlu0 0
      %4277 = vperm.xlu0 %4276, %v4184
      %v4278 = vpop.permute.xlu0 %4277
      %4281 = vset.pattern.permute.xlu0 0
      %4282 = vperm.xlu0 %4281, %v4185
      %v4283 = vpop.permute.xlu0 %4282
      %v4285 = vadd.f32 %v4237, %v4248
      %v4286 = vadd.f32 %v4238, %v4253
      %v4287 = vadd.f32 %v4239, %v4258
      %v4288 = vadd.f32 %v4240, %v4263
      %v4289 = vadd.f32 %v4241, %v4268
      %v4290 = vadd.f32 %v4242, %v4273
      %v4291 = vadd.f32 %v4243, %v4278
      %v4292 = vadd.f32 %v4244, %v4283
      %v4293 = vmax.f32 %v4285, 0.0
      %v4294 = vmax.f32 %v4286, 0.0
      %v4295 = vmax.f32 %v4287, 0.0
      %v4296 = vmax.f32 %v4288, 0.0
      %v4297 = vmax.f32 %v4289, 0.0
      %v4298 = vmax.f32 %v4290, 0.0
      %v4299 = vmax.f32 %v4291, 0.0
      %v4300 = vmax.f32 %v4292, 0.0
      %v4302 = vsel %vm3141, %v4186, 0
      %v4305 = vsel %vm3141, %v4187, 0
      %v4308 = vsel %vm3141, %v4188, 0
      %4310 = vmatpush.msra.mxu0 0.0
      %4311 = vmatpush.msra.mxu0 0.0
      %4312 = vmatpush.msra.mxu0 0.0
      %4313 = vmatpush.msra.mxu0 0.0
      %4314 = vmatpush.msra.mxu0 0.0
      %4315 = vmatpush.msra.mxu0 0.0
      %4316 = vmatpush.msra.mxu0 0.0
      %4317 = vmatpush.msra.mxu0 0.0
      %4318 = vmatpush.msra.mxu0 %v4300
      %4319 = vmatpush.msra.mxu0 %v4299
      %4320 = vmatpush.msra.mxu0 %v4298
      %4321 = vmatpush.msra.mxu0 %v4297
      %4322 = vmatpush.msra.mxu0 %v4296
      %4323 = vmatpush.msra.mxu0 %v4295
      %4324 = vmatpush.msra.mxu0 %v4294
      %4325 = vmatpush.msra.mxu0 %v4293
      %4326 = vmatmul.f32.gmra.mxu0 %v4302
      %v4327 = vpop.f32.mrf.mxu0
      %v4328 = vadd.f32 0.0, %v4327
      %4329 = vmatmul.f32.gmra.mxu0 %v4305
      %v4330 = vpop.f32.mrf.mxu0
      %v4331 = vadd.f32 0.0, %v4330
      %4332 = vmatmul.f32.gmra.mxu0 %v4308
      %v4333 = vpop.f32.mrf.mxu0
      %v4334 = vadd.f32 0.0, %v4333
      %4335 = vdwg.mxu0
      %v4337 = vsel %vm3141, %v4328, 0
      %v4340 = vsel %vm3141, %v4331, 0
      %v4343 = vsel %vm3141, %v4334, 0
      %4345 = vmatpush.msra.mxu0 0.0
      %4346 = vmatpush.msra.mxu0 0.0
      %4347 = vmatpush.msra.mxu0 0.0
      %4348 = vmatpush.msra.mxu0 0.0
      %4349 = vmatpush.msra.mxu0 0.0
      %4350 = vmatpush.msra.mxu0 0.0
      %4351 = vmatpush.msra.mxu0 0.0
      %4352 = vmatpush.msra.mxu0 0.0
      %4353 = vmatpush.msra.mxu0 %v4196
      %4354 = vmatpush.msra.mxu0 %v4195
      %4355 = vmatpush.msra.mxu0 %v4194
      %4356 = vmatpush.msra.mxu0 %v4193
      %4357 = vmatpush.msra.mxu0 %v4192
      %4358 = vmatpush.msra.mxu0 %v4191
      %4359 = vmatpush.msra.mxu0 %v4190
      %4360 = vmatpush.msra.mxu0 %v4189
      %4361 = vmatmul.f32.gmra.mxu0 %v4337
      %v4362 = vpop.f32.mrf.mxu0
      %v4363 = vadd.f32 %v2180, %v4362
      %4364 = vmatmul.f32.gmra.mxu0 %v4340
      %v4365 = vpop.f32.mrf.mxu0
      %v4366 = vadd.f32 %v2181, %v4365
      %4367 = vmatmul.f32.gmra.mxu0 %v4343
      %v4368 = vpop.f32.mrf.mxu0
      %v4369 = vadd.f32 %v2182, %v4368
      %4370 = vdwg.mxu0
      %v4371 = vld [vmem:[%s115] sm:$0xff]
      %v4372 = vld [vmem:[%s115 + $0x8] sm:$0xff]
      %v4373 = vld [vmem:[%s115 + $0x10] sm:$0xff]
      %v4374 = vld [vmem:[%s117] sm:$0xff]
      %v4375 = vld [vmem:[%s117 + $0x8] sm:$0xff]
      %v4376 = vld [vmem:[%s117 + $0x10] sm:$0xff]
      %4378 = vset.pattern.permute.xlu0 0
      %4379 = vperm.xlu0 %4378, %v4371
      %v4380 = vpop.permute.xlu0 %4379
      %4383 = vset.pattern.permute.xlu0 0
      %4384 = vperm.xlu0 %4383, %v4372
      %v4385 = vpop.permute.xlu0 %4384
      %4388 = vset.pattern.permute.xlu0 0
      %4389 = vperm.xlu0 %4388, %v4373
      %v4390 = vpop.permute.xlu0 %4389
      %v4392 = vmul.f32 %v4363, %v4380
      %v4393 = vmul.f32 %v4366, %v4385
      %v4394 = vmul.f32 %v4369, %v4390
      %4396 = vset.pattern.permute.xlu0 0
      %4397 = vperm.xlu0 %4396, %v4374
      %v4398 = vpop.permute.xlu0 %4397
      %4401 = vset.pattern.permute.xlu0 0
      %4402 = vperm.xlu0 %4401, %v4375
      %v4403 = vpop.permute.xlu0 %4402
      %4406 = vset.pattern.permute.xlu0 0
      %4407 = vperm.xlu0 %4406, %v4376
      %v4408 = vpop.permute.xlu0 %4407
      %v4410 = vadd.f32 %v4392, %v4398
      %v4411 = vadd.f32 %v4393, %v4403
      %v4412 = vadd.f32 %v4394, %v4408
      %v4413 = vmax.f32 %v4410, 0.0
      %v4414 = vmax.f32 %v4411, 0.0
      %v4415 = vmax.f32 %v4412, 0.0
      %v4416 = vld [vmem:[%s119] sm:$0xff]
      %v4417 = vld [vmem:[%s119 + $0x8] sm:$0xff]
      %v4418 = vld [vmem:[%s121] sm:$0xff]
      %v4419 = vld [vmem:[%s121 + $0x8] sm:$0xff]
      %4421 = vset.pattern.permute.xlu0 0
      %4422 = vperm.xlu0 %4421, %v4418
      %v4423 = vpop.permute.xlu0 %4422
      %4426 = vset.pattern.permute.xlu0 0
      %4427 = vperm.xlu0 %4426, %v4419
      %v4428 = vpop.permute.xlu0 %4427
      %vm4430 = vcmask 195584
      %v4432 = vsel %vm4430, %v4416, 0
      %v4435 = vsel %vm4430, %v4417, 0
      %4437 = vmatpush.msra.mxu0 0.0
      %4438 = vmatpush.msra.mxu0 0.0
      %4439 = vmatpush.msra.mxu0 0.0
      %4440 = vmatpush.msra.mxu0 0.0
      %4441 = vmatpush.msra.mxu0 0.0
      %4442 = vmatpush.msra.mxu0 0.0
      %4443 = vmatpush.msra.mxu0 0.0
      %4444 = vmatpush.msra.mxu0 0.0
      %4445 = vmatpush.msra.mxu0 0.0
      %4446 = vmatpush.msra.mxu0 0.0
      %4447 = vmatpush.msra.mxu0 0.0
      %4448 = vmatpush.msra.mxu0 0.0
      %4449 = vmatpush.msra.mxu0 0.0
      %4450 = vmatpush.msra.mxu0 %v4415
      %4451 = vmatpush.msra.mxu0 %v4414
      %4452 = vmatpush.msra.mxu0 %v4413
      %4453 = vmatmul.f32.gmra.mxu0 %v4432
      %v4454 = vpop.f32.mrf.mxu0
      %v4455 = vadd.f32 %v4423, %v4454
      %4456 = vmatmul.f32.gmra.mxu0 %v4435
      %v4457 = vpop.f32.mrf.mxu0
      %v4458 = vadd.f32 %v4428, %v4457
      %4459 = vdwg.mxu0
      %v4460 = vmax.f32 %v4455, 0.0
      %v4461 = vmax.f32 %v4458, 0.0
      %v4462 = vld [vmem:[%s123] sm:$0xff]
      %v4463 = vld [vmem:[%s123 + $0x8] sm:$0xff]
      %v4464 = vld [vmem:[%s123 + $0x10] sm:$0xff]
      %v4465 = vld [vmem:[%s123 + $0x18] sm:$0xff]
      %v4466 = vld [vmem:[%s123 + $0x20] sm:$0xff]
      %v4467 = vld [vmem:[%s123 + $0x28] sm:$0xff]
      %v4468 = vld [vmem:[%s123 + $0x30] sm:$0xff]
      %v4469 = vld [vmem:[%s123 + $0x38] sm:$0xff]
      %v4470 = vld [vmem:[%s125] sm:$0xff]
      %v4471 = vld [vmem:[%s125 + $0x8] sm:$0xff]
      %v4472 = vld [vmem:[%s125 + $0x10] sm:$0xff]
      %v4473 = vld [vmem:[%s125 + $0x18] sm:$0xff]
      %v4474 = vld [vmem:[%s125 + $0x20] sm:$0xff]
      %v4475 = vld [vmem:[%s125 + $0x28] sm:$0xff]
      %v4476 = vld [vmem:[%s125 + $0x30] sm:$0xff]
      %v4477 = vld [vmem:[%s125 + $0x38] sm:$0xff]
      %4478 = vrot.lane.b32.xlu0 %v4460, 32
      %v4479 = vpop.permute.xlu0 %4478
      %v4480 = vsel %vm2098, %v4479, %v4460
      %4481 = vrot.lane.b32.xlu0 %v4461, 32
      %v4482 = vpop.permute.xlu0 %4481
      %v4483 = vsel %vm2098, %v4482, %v4461
      %4484 = vrot.lane.b32.xlu0 %v4480, 32
      %v4485 = vpop.permute.xlu0 %4484
      %4486 = vrot.lane.b32.xlu0 %v4483, 32
      %v4487 = vpop.permute.xlu0 %4486
      %v4488 = vsel %vm2098, %v4485, %v4460
      %v4489 = vsel %vm2098, %v4487, %v4461
      %4492 = vrot.lane.b32.xlu0 %v4488, 97
      %v4493 = vpop.permute.xlu0 %4492
      %4494 = vrot.lane.b32.xlu0 %v4489, 97
      %v4495 = vpop.permute.xlu0 %4494
      %v4498 = vsel %vm1911, 0.0, %v4493
      %v4499 = vsel %vm1911, 0.0, %v4495
      %4500 = vrot.lane.b32.xlu0 %v4488, 127
      %v4501 = vpop.permute.xlu0 %4500
      %4502 = vrot.lane.b32.xlu0 %v4489, 127
      %v4503 = vpop.permute.xlu0 %4502
      %v4506 = vsel %vm2121, 0.0, %v4501
      %v4507 = vsel %vm2121, 0.0, %v4503
      %4509 = vset.pattern.permute.xlu0 0
      %4510 = vperm.xlu0 %4509, %v4470
      %v4511 = vpop.permute.xlu0 %4510
      %4514 = vset.pattern.permute.xlu0 0
      %4515 = vperm.xlu0 %4514, %v4471
      %v4516 = vpop.permute.xlu0 %4515
      %4519 = vset.pattern.permute.xlu0 0
      %4520 = vperm.xlu0 %4519, %v4472
      %v4521 = vpop.permute.xlu0 %4520
      %4524 = vset.pattern.permute.xlu0 0
      %4525 = vperm.xlu0 %4524, %v4473
      %v4526 = vpop.permute.xlu0 %4525
      %4529 = vset.pattern.permute.xlu0 0
      %4530 = vperm.xlu0 %4529, %v4474
      %v4531 = vpop.permute.xlu0 %4530
      %4534 = vset.pattern.permute.xlu0 0
      %4535 = vperm.xlu0 %4534, %v4475
      %v4536 = vpop.permute.xlu0 %4535
      %4539 = vset.pattern.permute.xlu0 0
      %4540 = vperm.xlu0 %4539, %v4476
      %v4541 = vpop.permute.xlu0 %4540
      %4544 = vset.pattern.permute.xlu0 0
      %4545 = vperm.xlu0 %4544, %v4477
      %v4546 = vpop.permute.xlu0 %4545
      %v4549 = vsel %vm1945, %v4462, 0
      %v4552 = vsel %vm1945, %v4463, 0
      %v4555 = vsel %vm1945, %v4464, 0
      %v4558 = vsel %vm1945, %v4465, 0
      %v4561 = vsel %vm1945, %v4466, 0
      %v4564 = vsel %vm1945, %v4467, 0
      %v4567 = vsel %vm1945, %v4468, 0
      %v4570 = vsel %vm1945, %v4469, 0
      %4572 = vmatpush.msra.mxu0 0.0
      %4573 = vmatpush.msra.mxu0 0.0
      %4574 = vmatpush.msra.mxu0 0.0
      %4575 = vmatpush.msra.mxu0 0.0
      %4576 = vmatpush.msra.mxu0 0.0
      %4577 = vmatpush.msra.mxu0 0.0
      %4578 = vmatpush.msra.mxu0 0.0
      %4579 = vmatpush.msra.mxu0 0.0
      %4580 = vmatpush.msra.mxu0 0.0
      %4581 = vmatpush.msra.mxu0 0.0
      %4582 = vmatpush.msra.mxu0 %v4507
      %4583 = vmatpush.msra.mxu0 %v4506
      %4584 = vmatpush.msra.mxu0 %v4499
      %4585 = vmatpush.msra.mxu0 %v4498
      %4586 = vmatpush.msra.mxu0 %v4461
      %4587 = vmatpush.msra.mxu0 %v4460
      %4588 = vmatmul.f32.gmra.mxu0 %v4549
      %v4589 = vpop.f32.mrf.mxu0
      %v4590 = vadd.f32 %v4511, %v4589
      %4591 = vmatmul.f32.gmra.mxu0 %v4552
      %v4592 = vpop.f32.mrf.mxu0
      %v4593 = vadd.f32 %v4516, %v4592
      %4594 = vmatmul.f32.gmra.mxu0 %v4555
      %v4595 = vpop.f32.mrf.mxu0
      %v4596 = vadd.f32 %v4521, %v4595
      %4597 = vmatmul.f32.gmra.mxu0 %v4558
      %v4598 = vpop.f32.mrf.mxu0
      %v4599 = vadd.f32 %v4526, %v4598
      %4600 = vmatmul.f32.gmra.mxu0 %v4561
      %v4601 = vpop.f32.mrf.mxu0
      %v4602 = vadd.f32 %v4531, %v4601
      %4603 = vmatmul.f32.gmra.mxu0 %v4564
      %v4604 = vpop.f32.mrf.mxu0
      %v4605 = vadd.f32 %v4536, %v4604
      %4606 = vmatmul.f32.gmra.mxu0 %v4567
      %v4607 = vpop.f32.mrf.mxu0
      %v4608 = vadd.f32 %v4541, %v4607
      %4609 = vmatmul.f32.gmra.mxu0 %v4570
      %v4610 = vpop.f32.mrf.mxu0
      %v4611 = vadd.f32 %v4546, %v4610
      %4612 = vdwg.mxu0
      %4613 = vst.msk [vmem:[%s1894] sm:$0xff] %vm2272, %v4590
      %4614 = vst.msk [vmem:[%s1894 + $0x8] sm:$0xff] %vm2272, %v4593
      %4615 = vst.msk [vmem:[%s1894 + $0x10] sm:$0xff] %vm2272, %v4596
      %4616 = vst.msk [vmem:[%s1894 + $0x18] sm:$0xff] %vm2272, %v4599
      %4617 = vst.msk [vmem:[%s1894 + $0x20] sm:$0xff] %vm2272, %v4602
      %4618 = vst.msk [vmem:[%s1894 + $0x28] sm:$0xff] %vm2272, %v4605
      %4619 = vst.msk [vmem:[%s1894 + $0x30] sm:$0xff] %vm2272, %v4608
      %4620 = vst.msk [vmem:[%s1894 + $0x38] sm:$0xff] %vm2272, %v4611
      %p4621 = scmp.lt.s32.totalorder %s138, 1
      %s4622 = scalar_select %p4621, %s138, 1
      %s4623 = smul.addr %s4622, 8
      %s4624 = smul.addr %s4623, 8
      %s4625 = scalar_lea.vmem %s127, %s4624
      // Predicated region
      $region273: #{densewave_forward.1} parent=271 // pred_check
        %p4626 = pneg %p1494
      $region274: #{densewave_forward.1} parent=271 // pred_check_branch
        %4628 = sbr.rel (%p4626) target = $region276
      $region275: #{densewave_forward.1} parent=271 // pred_region
        _
      $region276: #{densewave_forward.1} parent=271 // pred_fallthru
        _
    $region272: #{densewave_forward.1} parent=5 // pred_fallthru
      _
    %p4629 = scmp.le.s32.totalorder 2, %s133
    // Predicated region
    $region277: #{densewave_forward.1} parent=5 // pred_check
      %p4630 = pneg %p4629
    $region278: #{densewave_forward.1} parent=5 // pred_check_branch
      %4632 = sbr.rel (%p4630) target = $region280
    $region279: #{densewave_forward.1} parent=5 // pred_region
      %s4633 = ssub.s32 %s133, 2
      // Predicated region
      $region281: #{densewave_forward.1} parent=279 // pred_check
        %p4634 = pneg %p1500
      $region282: #{densewave_forward.1} parent=279 // pred_check_branch
        %4636 = sbr.rel (%p4634) target = $region284
      $region283: #{densewave_forward.1} parent=279 // pred_region
        %p4637 = scmp.lt.s32.totalorder %s139, 1
        %s4638 = scalar_select %p4637, %s139, 1
        %s4639 = smul.addr %s4638, 8
        %s4640 = smul.addr %s4639, 8
        %s4641 = scalar_lea.vmem %s127, %s4640
      $region284: #{densewave_forward.1} parent=279 // pred_fallthru
        _
    $region280: #{densewave_forward.1} parent=5 // pred_fallthru
      _
  $region6: #{densewave_forward.1} parent=0 // loop_footer
    %s137 = sadd.s32 1, %s133
  $region7: #{densewave_forward.1} parent=0 // loop_footer_branch
    %132 = sbr.rel target = $region3
  $region8: #{densewave_forward.1} parent=0 // loop_exit
    _

</llo_original>
